<compile_context>
chip_gen: v7x
topology: tpu7x:2x2x1
jax: 0.10.0
libtpu: 0.0.40
codegen_flags: <defaults>
</compile_context>

<pallas_src>
import functools

import jax
import jax.numpy as jnp
from jax.experimental import pallas as pl
from jax.experimental.pallas import tpu as pltpu

LANE = 128   # TPU lane width: output-channel axes are padded to this
_K = 3       # conv kernel size (stride 1, padding 1 -> 'same')


# ---------------------------------------------------------------------------
# Fused Pallas kernel: one image per grid step
# ---------------------------------------------------------------------------
def _fused_convnet_kernel(p1_ref, w1_ref, b1_ref, w2_ref, b2_ref,
                          o1_ref, o2_ref, r1_ref, *, H, W, cmid, mc, pad):
    """conv1 (+bias) -> ReLU -> conv2 (+bias) for one image.

    p1_ref : (H*W, 9*Cin)        bf16 conv1 im2col patches (lane-dense input)
    w1_ref : (9*Cin, 128)        bf16 conv1 weights, taps concatenated along K
    b1_ref : (1, 128)            f32
    w2_ref : (9, cmid, 128)      bf16 conv2 weights, tap-major, K = real cmid
    b2_ref : (1, 128)            f32
    o1_ref : (H*W, 128)          f32 conv1 output (captured by hook)
    o2_ref : (H*W, 128)          f32 conv2 output (captured by hook)
    r1_ref : (2*pad + H*W, cmid) f32 scratch: flat ReLU map with zero halos
    """
    HW = H * W
    nchunks = HW // mc
    cpad = o1_ref.shape[-1]

    # (2) zero ONLY the halo rows (~1.5 KiB), every step (megacore-safe).
    halo = jnp.zeros((pad, cmid), jnp.float32)
    r1_ref[0:pad, :] = halo
    r1_ref[pad + HW:pad + HW + pad, :] = halo

    w1 = w1_ref[...]            # (9*Cin, 128) bf16 - a few vregs, keep resident
    b1 = b1_ref[...]
    b2 = b2_ref[...]

    # ---- phase A: conv1 + bias, one K=9*Cin dot per M-chunk; fused ReLU -----
    for c in range(nchunks):
        m0 = c * mc
        h = jnp.dot(p1_ref[m0:m0 + mc, :], w1,
                    preferred_element_type=jnp.float32) + b1     # (mc,128) f32
        o1_ref[m0:m0 + mc, :] = h                                # lane-dense vst
        # only the real cmid channels feed conv2
        r1_ref[pad + m0:pad + m0 + mc, :] = jnp.maximum(h[:, :cmid], 0.0)

    # column-wrap masks for the dx = +-1 taps (hoisted out of the chunk loop;
    # valid because mc % W == 0, so every chunk sees the same column pattern).
    col = jax.lax.broadcasted_iota(jnp.int32, (mc, 1), 0) % W
    mask_l = col >= 1            # dx = -1 invalid at column 0
    mask_r = col <= W - 2        # dx = +1 invalid at column W-1

    # ---- phase B: conv2 = 9 shifted K=cmid matmuls on the resident ReLU map -
    # A tap (dy,dx) of a 'same' 3x3 conv is a flat row shift of dy*W+dx; the
    # vertical out-of-image reads land in the zeroed halos, the horizontal
    # wrap cases are masked.  No reshapes, no 2-D spatial slicing.
    taps = [(dy, dx) for dy in (-1, 0, 1) for dx in (-1, 0, 1)]
    for c in range(nchunks):
        m0 = c * mc
        acc = jnp.zeros((mc, cpad), jnp.float32)                 # 16 vregs
        for t, (dy, dx) in enumerate(taps):
            s = dy * W + dx
            a = r1_ref[pad + m0 + s:pad + m0 + s + mc, :]        # (mc, cmid) f32
            if dx == -1:
                a = jnp.where(mask_l, a, 0.0)
            elif dx == 1:
                a = jnp.where(mask_r, a, 0.0)
            acc = acc + jnp.dot(a.astype(jnp.bfloat16), w2_ref[t],
                                preferred_element_type=jnp.float32)
        o2_ref[m0:m0 + mc, :] = acc + b2                         # lane-dense vst


# ---------------------------------------------------------------------------
# Jitted wrapper: NCHW in -> (conv1_out, relu_out, conv2_out) in NCHW
# ---------------------------------------------------------------------------
@functools.partial(jax.jit, static_argnames=("cmid", "cout"))
def _fused_forward(x_nchw, w1p, b1p, w2p, b2p, *, cmid, cout):
    N, Cin, H, W = x_nchw.shape
    HW = H * W
    K1 = w1p.shape[0]            # 9 * Cin
    CP = w1p.shape[1]            # 128 (lane-padded output channels)
    assert K1 == _K * _K * Cin and w2p.shape == (_K * _K, cmid, CP)

    MC = 128 if HW % 128 == 0 else HW          # M-chunk: small accumulators
    PAD = -(-(W + 1) // 8) * 8                 # flat halo rows, sublane aligned
    assert HW % MC == 0 and MC % W == 0 and HW % 8 == 0

    # NCHW -> NHWC, 'same' zero-pad, im2col.  This is layout plumbing in the
    # wrapper: it replaces the 4/128-lane sparse padded-image DMA with one
    # contiguous lane-dense (HW, 9*Cin) bf16 block and lets conv1 run as a
    # single K=9*Cin MXU dot per chunk (9x input duplication is ~36 KiB/image,
    # negligible next to the two f32 output streams).
    xp = jnp.pad(jnp.transpose(x_nchw, (0, 2, 3, 1)),
                 ((0, 0), (1, 1), (1, 1), (0, 0)))
    patches = jnp.concatenate(
        [xp[:, ky:ky + H, kx:kx + W, :] for ky in range(_K) for kx in range(_K)],
        axis=-1).reshape(N, HW, K1).astype(jnp.bfloat16)

    kernel = functools.partial(_fused_convnet_kernel,
                               H=H, W=W, cmid=cmid, mc=MC, pad=PAD)
    out_sds = jax.ShapeDtypeStruct((N, HW, CP), jnp.float32)

    # NOTE(v7x, large H*W): for N==1 and big images, add a row-block grid axis
    # (parallel) so both TensorCores get work and per-step VMEM stays bounded.
    o1, o2 = pl.pallas_call(
        kernel,
        out_shape=(out_sds, out_sds),
        grid_spec=pltpu.PrefetchScalarGridSpec(
            num_scalar_prefetch=0,
            grid=(N,),
            in_specs=[
                pl.BlockSpec((None, HW, K1), lambda n: (n, 0, 0)),
                pl.BlockSpec((K1, CP), lambda n: (0, 0)),
                pl.BlockSpec((1, CP), lambda n: (0, 0)),
                pl.BlockSpec((_K * _K, cmid, CP), lambda n: (0, 0, 0)),
                pl.BlockSpec((1, CP), lambda n: (0, 0)),
            ],
            out_specs=(
                pl.BlockSpec((None, HW, CP), lambda n: (n, 0, 0)),
                pl.BlockSpec((None, HW, CP), lambda n: (n, 0, 0)),
            ),
            scratch_shapes=[pltpu.VMEM((2 * PAD + HW, cmid), jnp.float32)],
        ),
        compiler_params=pltpu.CompilerParams(
            dimension_semantics=("parallel",),
            vmem_limit_bytes=32 * 1024 * 1024,
        ),
    )(patches, w1p, b1p, w2p, b2p)

    def to_nchw(flat, c):
        return jnp.transpose(flat[:, :, :c].reshape(N, H, W, c), (0, 3, 1, 2))

    conv1_out = to_nchw(o1, cmid)
    relu_out = jnp.maximum(conv1_out, 0.0)   # (1) recomputed here, not a kernel output
    conv2_out = to_nchw(o2, cout)
    return conv1_out, relu_out, conv2_out


def _pack_conv1(w_oihw, bias, lane=LANE):
    """(Cout,Cin,3,3),(Cout,) -> K-concatenated (9*Cin, lane) bf16 + (1,lane) f32."""
    cout, cin, kh, kw = w_oihw.shape
    wp = jnp.transpose(w_oihw, (2, 3, 1, 0)).reshape(kh * kw * cin, cout)
    wp = jnp.pad(wp, ((0, 0), (0, lane - cout))).astype(jnp.bfloat16)
    bp = jnp.pad(bias, (0, lane - cout)).reshape(1, lane).astype(jnp.float32)
    return wp, bp


def _pack_conv2(w_oihw, bias, lane=LANE):
    """(Cout,Cin,3,3),(Cout,) -> tap-major (9, Cin, lane) bf16 (K = real Cin only)."""
    cout, cin, kh, kw = w_oihw.shape
    wp = jnp.transpose(w_oihw, (2, 3, 1, 0)).reshape(kh * kw, cin, cout)
    wp = jnp.pad(wp, ((0, 0), (0, 0), (0, lane - cout))).astype(jnp.bfloat16)
    bp = jnp.pad(bias, (0, lane - cout)).reshape(1, lane).astype(jnp.float32)
    return wp, bp


# ---------------------------------------------------------------------------
# A small "model" with named layers + forward-hook support (Pallas-backed)
# ---------------------------------------------------------------------------
class TinyConvNet:
    """conv1 -> relu -> conv2 ; named modules: 'conv1', 'relu', 'conv2'."""

    def __init__(self, key, cin=4, cmid=8, cout=8, k=3):
        assert k == _K, "fused kernel is specialized to 3x3 / stride 1 / pad 1"
        assert cmid <= LANE and cout <= LANE
        k1, k2, k3, k4 = jax.random.split(key, 4)
        self.params = {
            "conv1": {
                "w": 0.1 * jax.random.normal(k1, (cmid, cin, k, k), jnp.float32),
                "b": 0.1 * jax.random.normal(k2, (cmid,), jnp.float32),
            },
            "conv2": {
                "w": 0.1 * jax.random.normal(k3, (cout, cmid, k, k), jnp.float32),
                "b": 0.1 * jax.random.normal(k4, (cout,), jnp.float32),
            },
        }
        self.cmid, self.cout = cmid, cout
        # Pack once: bf16 weights, conv1 taps concatenated along K (single dot),
        # conv2 tap-major with K = real cmid only (no structural zeros).
        w1p, b1p = _pack_conv1(self.params["conv1"]["w"], self.params["conv1"]["b"])
        w2p, b2p = _pack_conv2(self.params["conv2"]["w"], self.params["conv2"]["b"])
        self._packed = (w1p, b1p, w2p, b2p)
        self._hooks = {}

    def register_forward_hook(self, layer_id, fn):
        self._hooks.setdefault(layer_id, []).append(fn)

    def __call__(self, x):
        w1p, b1p, w2p, b2p = self._packed
        conv1_out, relu_out, conv2_out = _fused_forward(
            x, w1p, b1p, w2p, b2p, cmid=self.cmid, cout=self.cout)
        # Fire PyTorch-style forward hooks: hook(module, (input,), output).
        for name, inp, out in (("conv1", x, conv1_out),
                               ("relu", conv1_out, relu_out),
                               ("conv2", relu_out, conv2_out)):
            for hook in self._hooks.get(name, []):
                hook(None, (inp,), out)
        return conv2_out


class FeatureExtractor:
    """Mirrors the PyTorch FeatureExtractor: captures per-layer input[0]/output."""

    def __init__(self, model, layers):
        self.model = model
        self.layers = layers
        self.outputs = {layer: jnp.empty((0,), jnp.float32) for layer in layers}
        self.inputs = {layer: jnp.empty((0,), jnp.float32) for layer in layers}
        for layer_id in layers:
            self.model.register_forward_hook(layer_id, self.save_outputs_hook(layer_id))

    def save_outputs_hook(self, layer_id):
        def fn(_, input, output):
            self.outputs[layer_id] = output
            self.inputs[layer_id] = input[0]
        return fn

    def forward(self, x):
        _ = self.model(x)
        return (self.inputs, self.outputs)


# ---------------------------------------------------------------------------
if __name__ == "__main__":
    x = jax.random.normal(jax.random.PRNGKey(0), (2, 4, 16, 16), jnp.float32)
    model = TinyConvNet(jax.random.PRNGKey(42))
    extractor = FeatureExtractor(model, layers=["conv1", "conv2"])

    inputs, outputs = extractor.forward(x)
    jax.block_until_ready((inputs, outputs))

    # sanity check against XLA reference conv (NCHW, OIHW, stride 1, pad 1)
    def ref_conv(t, w, b):
        y = jax.lax.conv_general_dilated(
            t, w, window_strides=(1, 1), padding=((1, 1), (1, 1)),
            dimension_numbers=("NCHW", "OIHW", "NCHW"))
        return y + b.reshape(1, -1, 1, 1)

    p = model.params
    r1 = ref_conv(x, p["conv1"]["w"], p["conv1"]["b"])
    r1_relu = jnp.maximum(r1, 0.0)
    r2 = ref_conv(r1_relu, p["conv2"]["w"], p["conv2"]["b"])

    # bf16 matmul operands (f32 accumulation) -> slightly looser tolerance.
    TOL = dict(atol=3e-2, rtol=3e-2)
    assert jnp.allclose(outputs["conv1"], r1, **TOL)
    assert jnp.allclose(inputs["conv1"], x)
    assert jnp.allclose(inputs["conv2"], r1_relu, **TOL)
    assert jnp.allclose(outputs["conv2"], r2, **TOL)

    print("KERNEL_OK")
</pallas_src>

<mosaic_0001>
module attributes {stable_mosaic.version = 11 : i64} {
  func.func @_fused_convnet_kernel(%arg0: i32, %arg1: memref<1x256x36xbf16, #tpu.memory_space<vmem>>, %arg2: memref<36x128xbf16, #tpu.memory_space<vmem>>, %arg3: memref<1x128xf32, #tpu.memory_space<vmem>>, %arg4: memref<9x8x128xbf16, #tpu.memory_space<vmem>>, %arg5: memref<1x128xf32, #tpu.memory_space<vmem>>, %arg6: memref<1x256x128xf32, #tpu.memory_space<vmem>>, %arg7: memref<1x256x128xf32, #tpu.memory_space<vmem>>, %arg8: memref<304x8xf32, #tpu.memory_space<vmem>>) attributes {dimension_semantics = [#tpu.dimension_semantics<parallel>], iteration_bounds = array<i64: 2>, scalar_prefetch = 0 : i64, scratch_operands = 1 : i64, tpu.core_type = #tpu.core_type<tc>, window_params = [{transform_indices = @transform_0, window_bounds = array<i64: 1, 256, 36>}, {pipeline_mode = #tpu.pipeline_mode<synchronous>, transform_indices = @transform_1, window_bounds = array<i64: 36, 128>}, {pipeline_mode = #tpu.pipeline_mode<synchronous>, transform_indices = @transform_2, window_bounds = array<i64: 1, 128>}, {pipeline_mode = #tpu.pipeline_mode<synchronous>, transform_indices = @transform_3, window_bounds = array<i64: 9, 8, 128>}, {pipeline_mode = #tpu.pipeline_mode<synchronous>, transform_indices = @transform_4, window_bounds = array<i64: 1, 128>}, {transform_indices = @transform_5, window_bounds = array<i64: 1, 256, 128>}, {transform_indices = @transform_6, window_bounds = array<i64: 1, 256, 128>}]} {
    %cst = arith.constant 0.000000e+00 : f32
    %0 = vector.broadcast %cst : f32 to vector<24x8xf32>
    %c0 = arith.constant 0 : index
    %c0_0 = arith.constant 0 : index
    %1 = vector.load %arg8[%c0, %c0_0] : memref<304x8xf32, #tpu.memory_space<vmem>>, vector<24x8xf32>
    tpu.vector_store %arg8[%c0, %c0_0], %0 {strides = array<i32>} : memref<304x8xf32, #tpu.memory_space<vmem>>, vector<24x8xf32>,
    %c280 = arith.constant 280 : index
    %c0_1 = arith.constant 0 : index
    %2 = vector.load %arg8[%c280, %c0_1] : memref<304x8xf32, #tpu.memory_space<vmem>>, vector<24x8xf32>
    tpu.vector_store %arg8[%c280, %c0_1], %0 {strides = array<i32>} : memref<304x8xf32, #tpu.memory_space<vmem>>, vector<24x8xf32>,
    %c0_2 = arith.constant 0 : index
    %c0_3 = arith.constant 0 : index
    %3 = vector.load %arg2[%c0_2, %c0_3] : memref<36x128xbf16, #tpu.memory_space<vmem>>, vector<36x128xbf16>
    %c0_4 = arith.constant 0 : index
    %c0_5 = arith.constant 0 : index
    %4 = vector.load %arg3[%c0_4, %c0_5] : memref<1x128xf32, #tpu.memory_space<vmem>>, vector<1x128xf32>
    %c0_6 = arith.constant 0 : index
    %c0_7 = arith.constant 0 : index
    %5 = vector.load %arg5[%c0_6, %c0_7] : memref<1x128xf32, #tpu.memory_space<vmem>>, vector<1x128xf32>
    %c0_8 = arith.constant 0 : index
    %c0_9 = arith.constant 0 : index
    %c0_10 = arith.constant 0 : index
    %6 = vector.load %arg1[%c0_8, %c0_9, %c0_10] : memref<1x256x36xbf16, #tpu.memory_space<vmem>>, vector<1x128x36xbf16>
    %7 = vector.shape_cast %6 : vector<1x128x36xbf16> to vector<128x36xbf16>
    %cst_11 = arith.constant dense<0.000000e+00> : vector<128x128xf32>
    %8 = tpu.matmul %7, %3, %cst_11 {dimension_numbers = #tpu.dot_dimension_numbers<[1], [0], [0], [1], [0, 0, 1, 1], [], []>} : vector<128x36xbf16>, vector<36x128xbf16>, vector<128x128xf32> -> vector<128x128xf32>
    %9 = vector.broadcast %4 : vector<1x128xf32> to vector<128x128xf32>
    %10 = arith.addf %8, %9 : vector<128x128xf32>
    %c0_12 = arith.constant 0 : index
    %c0_13 = arith.constant 0 : index
    %c0_14 = arith.constant 0 : index
    %11 = vector.load %arg6[%c0_12, %c0_13, %c0_14] : memref<1x256x128xf32, #tpu.memory_space<vmem>>, vector<1x128x128xf32>
    %12 = vector.shape_cast %11 : vector<1x128x128xf32> to vector<128x128xf32>
    %13 = vector.shape_cast %10 : vector<128x128xf32> to vector<1x128x128xf32>
    tpu.vector_store %arg6[%c0_12, %c0_13, %c0_14], %13 {strides = array<i32>} : memref<1x256x128xf32, #tpu.memory_space<vmem>>, vector<1x128x128xf32>,
    %14 = vector.extract_strided_slice %10 {offsets = [0, 0], sizes = [128, 8], strides = [1, 1]} : vector<128x128xf32> to vector<128x8xf32>
    %cst_15 = arith.constant 0.000000e+00 : f32
    %15 = vector.broadcast %cst_15 : f32 to vector<128x8xf32>
    %16 = arith.maximumf %14, %15 : vector<128x8xf32>
    %c24 = arith.constant 24 : index
    %c0_16 = arith.constant 0 : index
    %17 = vector.load %arg8[%c24, %c0_16] : memref<304x8xf32, #tpu.memory_space<vmem>>, vector<128x8xf32>
    tpu.vector_store %arg8[%c24, %c0_16], %16 {strides = array<i32>} : memref<304x8xf32, #tpu.memory_space<vmem>>, vector<128x8xf32>,
    %c0_17 = arith.constant 0 : index
    %c128 = arith.constant 128 : index
    %c0_18 = arith.constant 0 : index
    %18 = vector.load %arg1[%c0_17, %c128, %c0_18] : memref<1x256x36xbf16, #tpu.memory_space<vmem>>, vector<1x128x36xbf16>
    %19 = vector.shape_cast %18 : vector<1x128x36xbf16> to vector<128x36xbf16>
    %cst_19 = arith.constant dense<0.000000e+00> : vector<128x128xf32>
    %20 = tpu.matmul %19, %3, %cst_19 {dimension_numbers = #tpu.dot_dimension_numbers<[1], [0], [0], [1], [0, 0, 1, 1], [], []>} : vector<128x36xbf16>, vector<36x128xbf16>, vector<128x128xf32> -> vector<128x128xf32>
    %21 = vector.broadcast %4 : vector<1x128xf32> to vector<128x128xf32>
    %22 = arith.addf %20, %21 : vector<128x128xf32>
    %c0_20 = arith.constant 0 : index
    %c128_21 = arith.constant 128 : index
    %c0_22 = arith.constant 0 : index
    %23 = vector.load %arg6[%c0_20, %c128_21, %c0_22] : memref<1x256x128xf32, #tpu.memory_space<vmem>>, vector<1x128x128xf32>
    %24 = vector.shape_cast %23 : vector<1x128x128xf32> to vector<128x128xf32>
    %25 = vector.shape_cast %22 : vector<128x128xf32> to vector<1x128x128xf32>
    tpu.vector_store %arg6[%c0_20, %c128_21, %c0_22], %25 {strides = array<i32>} : memref<1x256x128xf32, #tpu.memory_space<vmem>>, vector<1x128x128xf32>,
    %26 = vector.extract_strided_slice %22 {offsets = [0, 0], sizes = [128, 8], strides = [1, 1]} : vector<128x128xf32> to vector<128x8xf32>
    %cst_23 = arith.constant 0.000000e+00 : f32
    %27 = vector.broadcast %cst_23 : f32 to vector<128x8xf32>
    %28 = arith.maximumf %26, %27 : vector<128x8xf32>
    %c152 = arith.constant 152 : index
    %c0_24 = arith.constant 0 : index
    %29 = vector.load %arg8[%c152, %c0_24] : memref<304x8xf32, #tpu.memory_space<vmem>>, vector<128x8xf32>
    tpu.vector_store %arg8[%c152, %c0_24], %28 {strides = array<i32>} : memref<304x8xf32, #tpu.memory_space<vmem>>, vector<128x8xf32>,
    %30 = tpu.iota {dimensions = array<i32: 0>} : vector<128x1xi32>
    %c16_i32 = arith.constant 16 : i32
    %c0_i32 = arith.constant 0 : i32
    %31 = arith.cmpi eq, %c16_i32, %c0_i32 : i32
    %c1_i32 = arith.constant 1 : i32
    %32 = arith.select %31, %c1_i32, %c16_i32 : i32
    %33 = vector.broadcast %32 : i32 to vector<128x1xi32>
    %34 = arith.remsi %30, %33 : vector<128x1xi32>
    %c0_i32_25 = arith.constant 0 : i32
    %35 = vector.broadcast %c0_i32_25 : i32 to vector<128x1xi32>
    %36 = arith.cmpi ne, %34, %35 : vector<128x1xi32>
    %c0_i32_26 = arith.constant 0 : i32
    %37 = vector.broadcast %c0_i32_26 : i32 to vector<128x1xi32>
    %38 = arith.cmpi slt, %34, %37 : vector<128x1xi32>
    %c0_i32_27 = arith.constant 0 : i32
    %39 = arith.cmpi slt, %32, %c0_i32_27 : i32
    %40 = vector.broadcast %39 : i1 to vector<128x1xi1>
    %41 = vector.broadcast %40 : vector<128x1xi1> to vector<128x1xi1>
    %42 = arith.xori %38, %41 : vector<128x1xi1>
    %43 = arith.andi %42, %36 : vector<128x1xi1>
    %44 = vector.broadcast %32 : i32 to vector<128x1xi32>
    %45 = arith.addi %34, %44 : vector<128x1xi32>
    %46 = arith.select %43, %45, %34 : vector<128x1xi1>, vector<128x1xi32>
    %c1_i32_28 = arith.constant 1 : i32
    %47 = vector.broadcast %c1_i32_28 : i32 to vector<128x1xi32>
    %48 = arith.cmpi sge, %46, %47 : vector<128x1xi32>
    %c14_i32 = arith.constant 14 : i32
    %49 = vector.broadcast %c14_i32 : i32 to vector<128x1xi32>
    %50 = arith.cmpi sle, %46, %49 : vector<128x1xi32>
    %cst_29 = arith.constant 0.000000e+00 : f32
    %51 = vector.broadcast %cst_29 : f32 to vector<128x128xf32>
    %c7 = arith.constant 7 : index
    %c0_30 = arith.constant 0 : index
    %52 = vector.load %arg8[%c7, %c0_30] : memref<304x8xf32, #tpu.memory_space<vmem>>, vector<128x8xf32>
    %cst_31 = arith.constant 0.000000e+00 : f32
    %53 = vector.shape_cast %48 : vector<128x1xi1> to vector<128x1xi1>
    %54 = vector.broadcast %53 : vector<128x1xi1> to vector<128x8xi1>
    %55 = vector.broadcast %cst_31 : f32 to vector<128x8xf32>
    %56 = arith.select %54, %52, %55 : vector<128x8xi1>, vector<128x8xf32>
    %57 = arith.truncf %56 : vector<128x8xf32> to vector<128x8xbf16>
    %c0_32 = arith.constant 0 : index
    %c0_33 = arith.constant 0 : index
    %c0_34 = arith.constant 0 : index
    %58 = vector.load %arg4[%c0_32, %c0_33, %c0_34] : memref<9x8x128xbf16, #tpu.memory_space<vmem>>, vector<1x8x128xbf16>
    %59 = vector.shape_cast %58 : vector<1x8x128xbf16> to vector<8x128xbf16>
    %cst_35 = arith.constant dense<0.000000e+00> : vector<128x128xf32>
    %60 = tpu.matmul %57, %59, %cst_35 {dimension_numbers = #tpu.dot_dimension_numbers<[1], [0], [0], [1], [0, 0, 1, 1], [], []>} : vector<128x8xbf16>, vector<8x128xbf16>, vector<128x128xf32> -> vector<128x128xf32>
    %61 = arith.addf %51, %60 : vector<128x128xf32>
    %c8 = arith.constant 8 : index
    %c0_36 = arith.constant 0 : index
    %62 = vector.load %arg8[%c8, %c0_36] : memref<304x8xf32, #tpu.memory_space<vmem>>, vector<128x8xf32>
    %63 = arith.truncf %62 : vector<128x8xf32> to vector<128x8xbf16>
    %c1 = arith.constant 1 : index
    %c0_37 = arith.constant 0 : index
    %c0_38 = arith.constant 0 : index
    %64 = vector.load %arg4[%c1, %c0_37, %c0_38] : memref<9x8x128xbf16, #tpu.memory_space<vmem>>, vector<1x8x128xbf16>
    %65 = vector.shape_cast %64 : vector<1x8x128xbf16> to vector<8x128xbf16>
    %cst_39 = arith.constant dense<0.000000e+00> : vector<128x128xf32>
    %66 = tpu.matmul %63, %65, %cst_39 {dimension_numbers = #tpu.dot_dimension_numbers<[1], [0], [0], [1], [0, 0, 1, 1], [], []>} : vector<128x8xbf16>, vector<8x128xbf16>, vector<128x128xf32> -> vector<128x128xf32>
    %67 = arith.addf %61, %66 : vector<128x128xf32>
    %c9 = arith.constant 9 : index
    %c0_40 = arith.constant 0 : index
    %68 = vector.load %arg8[%c9, %c0_40] : memref<304x8xf32, #tpu.memory_space<vmem>>, vector<128x8xf32>
    %cst_41 = arith.constant 0.000000e+00 : f32
    %69 = vector.shape_cast %50 : vector<128x1xi1> to vector<128x1xi1>
    %70 = vector.broadcast %69 : vector<128x1xi1> to vector<128x8xi1>
    %71 = vector.broadcast %cst_41 : f32 to vector<128x8xf32>
    %72 = arith.select %70, %68, %71 : vector<128x8xi1>, vector<128x8xf32>
    %73 = arith.truncf %72 : vector<128x8xf32> to vector<128x8xbf16>
    %c2 = arith.constant 2 : index
    %c0_42 = arith.constant 0 : index
    %c0_43 = arith.constant 0 : index
    %74 = vector.load %arg4[%c2, %c0_42, %c0_43] : memref<9x8x128xbf16, #tpu.memory_space<vmem>>, vector<1x8x128xbf16>
    %75 = vector.shape_cast %74 : vector<1x8x128xbf16> to vector<8x128xbf16>
    %cst_44 = arith.constant dense<0.000000e+00> : vector<128x128xf32>
    %76 = tpu.matmul %73, %75, %cst_44 {dimension_numbers = #tpu.dot_dimension_numbers<[1], [0], [0], [1], [0, 0, 1, 1], [], []>} : vector<128x8xbf16>, vector<8x128xbf16>, vector<128x128xf32> -> vector<128x128xf32>
    %77 = arith.addf %67, %76 : vector<128x128xf32>
    %c23 = arith.constant 23 : index
    %c0_45 = arith.constant 0 : index
    %78 = vector.load %arg8[%c23, %c0_45] : memref<304x8xf32, #tpu.memory_space<vmem>>, vector<128x8xf32>
    %cst_46 = arith.constant 0.000000e+00 : f32
    %79 = vector.shape_cast %48 : vector<128x1xi1> to vector<128x1xi1>
    %80 = vector.broadcast %79 : vector<128x1xi1> to vector<128x8xi1>
    %81 = vector.broadcast %cst_46 : f32 to vector<128x8xf32>
    %82 = arith.select %80, %78, %81 : vector<128x8xi1>, vector<128x8xf32>
    %83 = arith.truncf %82 : vector<128x8xf32> to vector<128x8xbf16>
    %c3 = arith.constant 3 : index
    %c0_47 = arith.constant 0 : index
    %c0_48 = arith.constant 0 : index
    %84 = vector.load %arg4[%c3, %c0_47, %c0_48] : memref<9x8x128xbf16, #tpu.memory_space<vmem>>, vector<1x8x128xbf16>
    %85 = vector.shape_cast %84 : vector<1x8x128xbf16> to vector<8x128xbf16>
    %cst_49 = arith.constant dense<0.000000e+00> : vector<128x128xf32>
    %86 = tpu.matmul %83, %85, %cst_49 {dimension_numbers = #tpu.dot_dimension_numbers<[1], [0], [0], [1], [0, 0, 1, 1], [], []>} : vector<128x8xbf16>, vector<8x128xbf16>, vector<128x128xf32> -> vector<128x128xf32>
    %87 = arith.addf %77, %86 : vector<128x128xf32>
    %c24_50 = arith.constant 24 : index
    %c0_51 = arith.constant 0 : index
    %88 = vector.load %arg8[%c24_50, %c0_51] : memref<304x8xf32, #tpu.memory_space<vmem>>, vector<128x8xf32>
    %89 = arith.truncf %88 : vector<128x8xf32> to vector<128x8xbf16>
    %c4 = arith.constant 4 : index
    %c0_52 = arith.constant 0 : index
    %c0_53 = arith.constant 0 : index
    %90 = vector.load %arg4[%c4, %c0_52, %c0_53] : memref<9x8x128xbf16, #tpu.memory_space<vmem>>, vector<1x8x128xbf16>
    %91 = vector.shape_cast %90 : vector<1x8x128xbf16> to vector<8x128xbf16>
    %cst_54 = arith.constant dense<0.000000e+00> : vector<128x128xf32>
    %92 = tpu.matmul %89, %91, %cst_54 {dimension_numbers = #tpu.dot_dimension_numbers<[1], [0], [0], [1], [0, 0, 1, 1], [], []>} : vector<128x8xbf16>, vector<8x128xbf16>, vector<128x128xf32> -> vector<128x128xf32>
    %93 = arith.addf %87, %92 : vector<128x128xf32>
    %c25 = arith.constant 25 : index
    %c0_55 = arith.constant 0 : index
    %94 = vector.load %arg8[%c25, %c0_55] : memref<304x8xf32, #tpu.memory_space<vmem>>, vector<128x8xf32>
    %cst_56 = arith.constant 0.000000e+00 : f32
    %95 = vector.shape_cast %50 : vector<128x1xi1> to vector<128x1xi1>
    %96 = vector.broadcast %95 : vector<128x1xi1> to vector<128x8xi1>
    %97 = vector.broadcast %cst_56 : f32 to vector<128x8xf32>
    %98 = arith.select %96, %94, %97 : vector<128x8xi1>, vector<128x8xf32>
    %99 = arith.truncf %98 : vector<128x8xf32> to vector<128x8xbf16>
    %c5 = arith.constant 5 : index
    %c0_57 = arith.constant 0 : index
    %c0_58 = arith.constant 0 : index
    %100 = vector.load %arg4[%c5, %c0_57, %c0_58] : memref<9x8x128xbf16, #tpu.memory_space<vmem>>, vector<1x8x128xbf16>
    %101 = vector.shape_cast %100 : vector<1x8x128xbf16> to vector<8x128xbf16>
    %cst_59 = arith.constant dense<0.000000e+00> : vector<128x128xf32>
    %102 = tpu.matmul %99, %101, %cst_59 {dimension_numbers = #tpu.dot_dimension_numbers<[1], [0], [0], [1], [0, 0, 1, 1], [], []>} : vector<128x8xbf16>, vector<8x128xbf16>, vector<128x128xf32> -> vector<128x128xf32>
    %103 = arith.addf %93, %102 : vector<128x128xf32>
    %c39 = arith.constant 39 : index
    %c0_60 = arith.constant 0 : index
    %104 = vector.load %arg8[%c39, %c0_60] : memref<304x8xf32, #tpu.memory_space<vmem>>, vector<128x8xf32>
    %cst_61 = arith.constant 0.000000e+00 : f32
    %105 = vector.shape_cast %48 : vector<128x1xi1> to vector<128x1xi1>
    %106 = vector.broadcast %105 : vector<128x1xi1> to vector<128x8xi1>
    %107 = vector.broadcast %cst_61 : f32 to vector<128x8xf32>
    %108 = arith.select %106, %104, %107 : vector<128x8xi1>, vector<128x8xf32>
    %109 = arith.truncf %108 : vector<128x8xf32> to vector<128x8xbf16>
    %c6 = arith.constant 6 : index
    %c0_62 = arith.constant 0 : index
    %c0_63 = arith.constant 0 : index
    %110 = vector.load %arg4[%c6, %c0_62, %c0_63] : memref<9x8x128xbf16, #tpu.memory_space<vmem>>, vector<1x8x128xbf16>
    %111 = vector.shape_cast %110 : vector<1x8x128xbf16> to vector<8x128xbf16>
    %cst_64 = arith.constant dense<0.000000e+00> : vector<128x128xf32>
    %112 = tpu.matmul %109, %111, %cst_64 {dimension_numbers = #tpu.dot_dimension_numbers<[1], [0], [0], [1], [0, 0, 1, 1], [], []>} : vector<128x8xbf16>, vector<8x128xbf16>, vector<128x128xf32> -> vector<128x128xf32>
    %113 = arith.addf %103, %112 : vector<128x128xf32>
    %c40 = arith.constant 40 : index
    %c0_65 = arith.constant 0 : index
    %114 = vector.load %arg8[%c40, %c0_65] : memref<304x8xf32, #tpu.memory_space<vmem>>, vector<128x8xf32>
    %115 = arith.truncf %114 : vector<128x8xf32> to vector<128x8xbf16>
    %c7_66 = arith.constant 7 : index
    %c0_67 = arith.constant 0 : index
    %c0_68 = arith.constant 0 : index
    %116 = vector.load %arg4[%c7_66, %c0_67, %c0_68] : memref<9x8x128xbf16, #tpu.memory_space<vmem>>, vector<1x8x128xbf16>
    %117 = vector.shape_cast %116 : vector<1x8x128xbf16> to vector<8x128xbf16>
    %cst_69 = arith.constant dense<0.000000e+00> : vector<128x128xf32>
    %118 = tpu.matmul %115, %117, %cst_69 {dimension_numbers = #tpu.dot_dimension_numbers<[1], [0], [0], [1], [0, 0, 1, 1], [], []>} : vector<128x8xbf16>, vector<8x128xbf16>, vector<128x128xf32> -> vector<128x128xf32>
    %119 = arith.addf %113, %118 : vector<128x128xf32>
    %c41 = arith.constant 41 : index
    %c0_70 = arith.constant 0 : index
    %120 = vector.load %arg8[%c41, %c0_70] : memref<304x8xf32, #tpu.memory_space<vmem>>, vector<128x8xf32>
    %cst_71 = arith.constant 0.000000e+00 : f32
    %121 = vector.shape_cast %50 : vector<128x1xi1> to vector<128x1xi1>
    %122 = vector.broadcast %121 : vector<128x1xi1> to vector<128x8xi1>
    %123 = vector.broadcast %cst_71 : f32 to vector<128x8xf32>
    %124 = arith.select %122, %120, %123 : vector<128x8xi1>, vector<128x8xf32>
    %125 = arith.truncf %124 : vector<128x8xf32> to vector<128x8xbf16>
    %c8_72 = arith.constant 8 : index
    %c0_73 = arith.constant 0 : index
    %c0_74 = arith.constant 0 : index
    %126 = vector.load %arg4[%c8_72, %c0_73, %c0_74] : memref<9x8x128xbf16, #tpu.memory_space<vmem>>, vector<1x8x128xbf16>
    %127 = vector.shape_cast %126 : vector<1x8x128xbf16> to vector<8x128xbf16>
    %cst_75 = arith.constant dense<0.000000e+00> : vector<128x128xf32>
    %128 = tpu.matmul %125, %127, %cst_75 {dimension_numbers = #tpu.dot_dimension_numbers<[1], [0], [0], [1], [0, 0, 1, 1], [], []>} : vector<128x8xbf16>, vector<8x128xbf16>, vector<128x128xf32> -> vector<128x128xf32>
    %129 = arith.addf %119, %128 : vector<128x128xf32>
    %130 = vector.broadcast %5 : vector<1x128xf32> to vector<128x128xf32>
    %131 = arith.addf %129, %130 : vector<128x128xf32>
    %c0_76 = arith.constant 0 : index
    %c0_77 = arith.constant 0 : index
    %c0_78 = arith.constant 0 : index
    %132 = vector.load %arg7[%c0_76, %c0_77, %c0_78] : memref<1x256x128xf32, #tpu.memory_space<vmem>>, vector<1x128x128xf32>
    %133 = vector.shape_cast %132 : vector<1x128x128xf32> to vector<128x128xf32>
    %134 = vector.shape_cast %131 : vector<128x128xf32> to vector<1x128x128xf32>
    tpu.vector_store %arg7[%c0_76, %c0_77, %c0_78], %134 {strides = array<i32>} : memref<1x256x128xf32, #tpu.memory_space<vmem>>, vector<1x128x128xf32>,
    %cst_79 = arith.constant 0.000000e+00 : f32
    %135 = vector.broadcast %cst_79 : f32 to vector<128x128xf32>
    %c135 = arith.constant 135 : index
    %c0_80 = arith.constant 0 : index
    %136 = vector.load %arg8[%c135, %c0_80] : memref<304x8xf32, #tpu.memory_space<vmem>>, vector<128x8xf32>
    %cst_81 = arith.constant 0.000000e+00 : f32
    %137 = vector.shape_cast %48 : vector<128x1xi1> to vector<128x1xi1>
    %138 = vector.broadcast %137 : vector<128x1xi1> to vector<128x8xi1>
    %139 = vector.broadcast %cst_81 : f32 to vector<128x8xf32>
    %140 = arith.select %138, %136, %139 : vector<128x8xi1>, vector<128x8xf32>
    %141 = arith.truncf %140 : vector<128x8xf32> to vector<128x8xbf16>
    %c0_82 = arith.constant 0 : index
    %c0_83 = arith.constant 0 : index
    %c0_84 = arith.constant 0 : index
    %142 = vector.load %arg4[%c0_82, %c0_83, %c0_84] : memref<9x8x128xbf16, #tpu.memory_space<vmem>>, vector<1x8x128xbf16>
    %143 = vector.shape_cast %142 : vector<1x8x128xbf16> to vector<8x128xbf16>
    %cst_85 = arith.constant dense<0.000000e+00> : vector<128x128xf32>
    %144 = tpu.matmul %141, %143, %cst_85 {dimension_numbers = #tpu.dot_dimension_numbers<[1], [0], [0], [1], [0, 0, 1, 1], [], []>} : vector<128x8xbf16>, vector<8x128xbf16>, vector<128x128xf32> -> vector<128x128xf32>
    %145 = arith.addf %135, %144 : vector<128x128xf32>
    %c136 = arith.constant 136 : index
    %c0_86 = arith.constant 0 : index
    %146 = vector.load %arg8[%c136, %c0_86] : memref<304x8xf32, #tpu.memory_space<vmem>>, vector<128x8xf32>
    %147 = arith.truncf %146 : vector<128x8xf32> to vector<128x8xbf16>
    %c1_87 = arith.constant 1 : index
    %c0_88 = arith.constant 0 : index
    %c0_89 = arith.constant 0 : index
    %148 = vector.load %arg4[%c1_87, %c0_88, %c0_89] : memref<9x8x128xbf16, #tpu.memory_space<vmem>>, vector<1x8x128xbf16>
    %149 = vector.shape_cast %148 : vector<1x8x128xbf16> to vector<8x128xbf16>
    %cst_90 = arith.constant dense<0.000000e+00> : vector<128x128xf32>
    %150 = tpu.matmul %147, %149, %cst_90 {dimension_numbers = #tpu.dot_dimension_numbers<[1], [0], [0], [1], [0, 0, 1, 1], [], []>} : vector<128x8xbf16>, vector<8x128xbf16>, vector<128x128xf32> -> vector<128x128xf32>
    %151 = arith.addf %145, %150 : vector<128x128xf32>
    %c137 = arith.constant 137 : index
    %c0_91 = arith.constant 0 : index
    %152 = vector.load %arg8[%c137, %c0_91] : memref<304x8xf32, #tpu.memory_space<vmem>>, vector<128x8xf32>
    %cst_92 = arith.constant 0.000000e+00 : f32
    %153 = vector.shape_cast %50 : vector<128x1xi1> to vector<128x1xi1>
    %154 = vector.broadcast %153 : vector<128x1xi1> to vector<128x8xi1>
    %155 = vector.broadcast %cst_92 : f32 to vector<128x8xf32>
    %156 = arith.select %154, %152, %155 : vector<128x8xi1>, vector<128x8xf32>
    %157 = arith.truncf %156 : vector<128x8xf32> to vector<128x8xbf16>
    %c2_93 = arith.constant 2 : index
    %c0_94 = arith.constant 0 : index
    %c0_95 = arith.constant 0 : index
    %158 = vector.load %arg4[%c2_93, %c0_94, %c0_95] : memref<9x8x128xbf16, #tpu.memory_space<vmem>>, vector<1x8x128xbf16>
    %159 = vector.shape_cast %158 : vector<1x8x128xbf16> to vector<8x128xbf16>
    %cst_96 = arith.constant dense<0.000000e+00> : vector<128x128xf32>
    %160 = tpu.matmul %157, %159, %cst_96 {dimension_numbers = #tpu.dot_dimension_numbers<[1], [0], [0], [1], [0, 0, 1, 1], [], []>} : vector<128x8xbf16>, vector<8x128xbf16>, vector<128x128xf32> -> vector<128x128xf32>
    %161 = arith.addf %151, %160 : vector<128x128xf32>
    %c151 = arith.constant 151 : index
    %c0_97 = arith.constant 0 : index
    %162 = vector.load %arg8[%c151, %c0_97] : memref<304x8xf32, #tpu.memory_space<vmem>>, vector<128x8xf32>
    %cst_98 = arith.constant 0.000000e+00 : f32
    %163 = vector.shape_cast %48 : vector<128x1xi1> to vector<128x1xi1>
    %164 = vector.broadcast %163 : vector<128x1xi1> to vector<128x8xi1>
    %165 = vector.broadcast %cst_98 : f32 to vector<128x8xf32>
    %166 = arith.select %164, %162, %165 : vector<128x8xi1>, vector<128x8xf32>
    %167 = arith.truncf %166 : vector<128x8xf32> to vector<128x8xbf16>
    %c3_99 = arith.constant 3 : index
    %c0_100 = arith.constant 0 : index
    %c0_101 = arith.constant 0 : index
    %168 = vector.load %arg4[%c3_99, %c0_100, %c0_101] : memref<9x8x128xbf16, #tpu.memory_space<vmem>>, vector<1x8x128xbf16>
    %169 = vector.shape_cast %168 : vector<1x8x128xbf16> to vector<8x128xbf16>
    %cst_102 = arith.constant dense<0.000000e+00> : vector<128x128xf32>
    %170 = tpu.matmul %167, %169, %cst_102 {dimension_numbers = #tpu.dot_dimension_numbers<[1], [0], [0], [1], [0, 0, 1, 1], [], []>} : vector<128x8xbf16>, vector<8x128xbf16>, vector<128x128xf32> -> vector<128x128xf32>
    %171 = arith.addf %161, %170 : vector<128x128xf32>
    %c152_103 = arith.constant 152 : index
    %c0_104 = arith.constant 0 : index
    %172 = vector.load %arg8[%c152_103, %c0_104] : memref<304x8xf32, #tpu.memory_space<vmem>>, vector<128x8xf32>
    %173 = arith.truncf %172 : vector<128x8xf32> to vector<128x8xbf16>
    %c4_105 = arith.constant 4 : index
    %c0_106 = arith.constant 0 : index
    %c0_107 = arith.constant 0 : index
    %174 = vector.load %arg4[%c4_105, %c0_106, %c0_107] : memref<9x8x128xbf16, #tpu.memory_space<vmem>>, vector<1x8x128xbf16>
    %175 = vector.shape_cast %174 : vector<1x8x128xbf16> to vector<8x128xbf16>
    %cst_108 = arith.constant dense<0.000000e+00> : vector<128x128xf32>
    %176 = tpu.matmul %173, %175, %cst_108 {dimension_numbers = #tpu.dot_dimension_numbers<[1], [0], [0], [1], [0, 0, 1, 1], [], []>} : vector<128x8xbf16>, vector<8x128xbf16>, vector<128x128xf32> -> vector<128x128xf32>
    %177 = arith.addf %171, %176 : vector<128x128xf32>
    %c153 = arith.constant 153 : index
    %c0_109 = arith.constant 0 : index
    %178 = vector.load %arg8[%c153, %c0_109] : memref<304x8xf32, #tpu.memory_space<vmem>>, vector<128x8xf32>
    %cst_110 = arith.constant 0.000000e+00 : f32
    %179 = vector.shape_cast %50 : vector<128x1xi1> to vector<128x1xi1>
    %180 = vector.broadcast %179 : vector<128x1xi1> to vector<128x8xi1>
    %181 = vector.broadcast %cst_110 : f32 to vector<128x8xf32>
    %182 = arith.select %180, %178, %181 : vector<128x8xi1>, vector<128x8xf32>
    %183 = arith.truncf %182 : vector<128x8xf32> to vector<128x8xbf16>
    %c5_111 = arith.constant 5 : index
    %c0_112 = arith.constant 0 : index
    %c0_113 = arith.constant 0 : index
    %184 = vector.load %arg4[%c5_111, %c0_112, %c0_113] : memref<9x8x128xbf16, #tpu.memory_space<vmem>>, vector<1x8x128xbf16>
    %185 = vector.shape_cast %184 : vector<1x8x128xbf16> to vector<8x128xbf16>
    %cst_114 = arith.constant dense<0.000000e+00> : vector<128x128xf32>
    %186 = tpu.matmul %183, %185, %cst_114 {dimension_numbers = #tpu.dot_dimension_numbers<[1], [0], [0], [1], [0, 0, 1, 1], [], []>} : vector<128x8xbf16>, vector<8x128xbf16>, vector<128x128xf32> -> vector<128x128xf32>
    %187 = arith.addf %177, %186 : vector<128x128xf32>
    %c167 = arith.constant 167 : index
    %c0_115 = arith.constant 0 : index
    %188 = vector.load %arg8[%c167, %c0_115] : memref<304x8xf32, #tpu.memory_space<vmem>>, vector<128x8xf32>
    %cst_116 = arith.constant 0.000000e+00 : f32
    %189 = vector.shape_cast %48 : vector<128x1xi1> to vector<128x1xi1>
    %190 = vector.broadcast %189 : vector<128x1xi1> to vector<128x8xi1>
    %191 = vector.broadcast %cst_116 : f32 to vector<128x8xf32>
    %192 = arith.select %190, %188, %191 : vector<128x8xi1>, vector<128x8xf32>
    %193 = arith.truncf %192 : vector<128x8xf32> to vector<128x8xbf16>
    %c6_117 = arith.constant 6 : index
    %c0_118 = arith.constant 0 : index
    %c0_119 = arith.constant 0 : index
    %194 = vector.load %arg4[%c6_117, %c0_118, %c0_119] : memref<9x8x128xbf16, #tpu.memory_space<vmem>>, vector<1x8x128xbf16>
    %195 = vector.shape_cast %194 : vector<1x8x128xbf16> to vector<8x128xbf16>
    %cst_120 = arith.constant dense<0.000000e+00> : vector<128x128xf32>
    %196 = tpu.matmul %193, %195, %cst_120 {dimension_numbers = #tpu.dot_dimension_numbers<[1], [0], [0], [1], [0, 0, 1, 1], [], []>} : vector<128x8xbf16>, vector<8x128xbf16>, vector<128x128xf32> -> vector<128x128xf32>
    %197 = arith.addf %187, %196 : vector<128x128xf32>
    %c168 = arith.constant 168 : index
    %c0_121 = arith.constant 0 : index
    %198 = vector.load %arg8[%c168, %c0_121] : memref<304x8xf32, #tpu.memory_space<vmem>>, vector<128x8xf32>
    %199 = arith.truncf %198 : vector<128x8xf32> to vector<128x8xbf16>
    %c7_122 = arith.constant 7 : index
    %c0_123 = arith.constant 0 : index
    %c0_124 = arith.constant 0 : index
    %200 = vector.load %arg4[%c7_122, %c0_123, %c0_124] : memref<9x8x128xbf16, #tpu.memory_space<vmem>>, vector<1x8x128xbf16>
    %201 = vector.shape_cast %200 : vector<1x8x128xbf16> to vector<8x128xbf16>
    %cst_125 = arith.constant dense<0.000000e+00> : vector<128x128xf32>
    %202 = tpu.matmul %199, %201, %cst_125 {dimension_numbers = #tpu.dot_dimension_numbers<[1], [0], [0], [1], [0, 0, 1, 1], [], []>} : vector<128x8xbf16>, vector<8x128xbf16>, vector<128x128xf32> -> vector<128x128xf32>
    %203 = arith.addf %197, %202 : vector<128x128xf32>
    %c169 = arith.constant 169 : index
    %c0_126 = arith.constant 0 : index
    %204 = vector.load %arg8[%c169, %c0_126] : memref<304x8xf32, #tpu.memory_space<vmem>>, vector<128x8xf32>
    %cst_127 = arith.constant 0.000000e+00 : f32
    %205 = vector.shape_cast %50 : vector<128x1xi1> to vector<128x1xi1>
    %206 = vector.broadcast %205 : vector<128x1xi1> to vector<128x8xi1>
    %207 = vector.broadcast %cst_127 : f32 to vector<128x8xf32>
    %208 = arith.select %206, %204, %207 : vector<128x8xi1>, vector<128x8xf32>
    %209 = arith.truncf %208 : vector<128x8xf32> to vector<128x8xbf16>
    %c8_128 = arith.constant 8 : index
    %c0_129 = arith.constant 0 : index
    %c0_130 = arith.constant 0 : index
    %210 = vector.load %arg4[%c8_128, %c0_129, %c0_130] : memref<9x8x128xbf16, #tpu.memory_space<vmem>>, vector<1x8x128xbf16>
    %211 = vector.shape_cast %210 : vector<1x8x128xbf16> to vector<8x128xbf16>
    %cst_131 = arith.constant dense<0.000000e+00> : vector<128x128xf32>
    %212 = tpu.matmul %209, %211, %cst_131 {dimension_numbers = #tpu.dot_dimension_numbers<[1], [0], [0], [1], [0, 0, 1, 1], [], []>} : vector<128x8xbf16>, vector<8x128xbf16>, vector<128x128xf32> -> vector<128x128xf32>
    %213 = arith.addf %203, %212 : vector<128x128xf32>
    %214 = vector.broadcast %5 : vector<1x128xf32> to vector<128x128xf32>
    %215 = arith.addf %213, %214 : vector<128x128xf32>
    %c0_132 = arith.constant 0 : index
    %c128_133 = arith.constant 128 : index
    %c0_134 = arith.constant 0 : index
    %216 = vector.load %arg7[%c0_132, %c128_133, %c0_134] : memref<1x256x128xf32, #tpu.memory_space<vmem>>, vector<1x128x128xf32>
    %217 = vector.shape_cast %216 : vector<1x128x128xf32> to vector<128x128xf32>
    %218 = vector.shape_cast %215 : vector<128x128xf32> to vector<1x128x128xf32>
    tpu.vector_store %arg7[%c0_132, %c128_133, %c0_134], %218 {strides = array<i32>} : memref<1x256x128xf32, #tpu.memory_space<vmem>>, vector<1x128x128xf32>,
    return
  }
  func.func @transform_0(%arg0: i32) -> (i32, i32, i32) {
    %c0_i32 = arith.constant 0 : i32
    %c0_i32_0 = arith.constant 0 : i32
    %c0_i32_1 = arith.constant 0 : i32
    return %arg0, %c0_i32, %c0_i32_0 : i32, i32, i32
  }
  func.func @transform_1(%arg0: i32) -> (i32, i32) {
    %c0_i32 = arith.constant 0 : i32
    %c0_i32_0 = arith.constant 0 : i32
    %c0_i32_1 = arith.constant 0 : i32
    return %c0_i32, %c0_i32_0 : i32, i32
  }
  func.func @transform_2(%arg0: i32) -> (i32, i32) {
    %c0_i32 = arith.constant 0 : i32
    %c0_i32_0 = arith.constant 0 : i32
    %c0_i32_1 = arith.constant 0 : i32
    return %c0_i32, %c0_i32_0 : i32, i32
  }
  func.func @transform_3(%arg0: i32) -> (i32, i32, i32) {
    %c0_i32 = arith.constant 0 : i32
    %c0_i32_0 = arith.constant 0 : i32
    %c0_i32_1 = arith.constant 0 : i32
    %c0_i32_2 = arith.constant 0 : i32
    return %c0_i32, %c0_i32_0, %c0_i32_1 : i32, i32, i32
  }
  func.func @transform_4(%arg0: i32) -> (i32, i32) {
    %c0_i32 = arith.constant 0 : i32
    %c0_i32_0 = arith.constant 0 : i32
    %c0_i32_1 = arith.constant 0 : i32
    return %c0_i32, %c0_i32_0 : i32, i32
  }
  func.func @transform_5(%arg0: i32) -> (i32, i32, i32) {
    %c0_i32 = arith.constant 0 : i32
    %c0_i32_0 = arith.constant 0 : i32
    %c0_i32_1 = arith.constant 0 : i32
    return %arg0, %c0_i32, %c0_i32_0 : i32, i32, i32
  }
  func.func @transform_6(%arg0: i32) -> (i32, i32, i32) {
    %c0_i32 = arith.constant 0 : i32
    %c0_i32_0 = arith.constant 0 : i32
    %c0_i32_1 = arith.constant 0 : i32
    return %arg0, %c0_i32, %c0_i32_0 : i32, i32, i32
  }
}

</mosaic_0001>

<llo_original>
// kernel: _fused_forward.1
$region0: #{_fused_forward.1}
  #allocation0 [shape = 'u32[]', space=smem, size = 0x4, offset = 0x4, fixed_abs, tag = 'smem constant byte address 0x4 - core index']
  #allocation1 [shape = 'u32[144,128]{1,0:T(1,128)}', space=vmem, size = 0x12000, scoped, tag = 'internal scratch']
  #allocation2 [shape = 'f32[304,8]{1,0:T(8,128)}', space=vmem, size = 0x26000, scoped, tag = 'scratch operand']
  %s0 = inlined_call_operand.vmem [shape: bf16[2,256,36], index: 0, kind: input, shape index: {}]
  %s1 = inlined_call_operand.vmem [shape: bf16[36,128], index: 1, kind: input, shape index: {}]
  %s2 = inlined_call_operand.vmem [shape: f32[1,128], index: 2, kind: input, shape index: {}]
  %s3 = inlined_call_operand.vmem [shape: bf16[9,8,128], index: 3, kind: input, shape index: {}]
  %s4 = inlined_call_operand.vmem [shape: f32[1,128], index: 4, kind: input, shape index: {}]
  %s5 = inlined_call_operand.vmem [shape: f32[2,256,128], index: 5, kind: output, shape index: {0}]
  %s6 = inlined_call_operand.vmem [shape: f32[2,256,128], index: 6, kind: output, shape index: {1}]
  %7 = xla_tuple %s5, %s6
  %s8 = sld [smem:[#allocation0]]
  $region61: #{_fused_forward.1} parent=0
    _
  %s10 = ssub.s32 1, %s8
  %s11 = scalar_select 0, %s10, %s8
  loop: start=0, step=1, limit=4
  $region2: #{_fused_forward.1} parent=0 // loop_pre_header
    _
  $region3: #{_fused_forward.1} parent=0 // loop_header
    %s13 = sphi 0, %s17
    %p14 = scmp.ge.s32.totalorder %s13, 4
    %s23 = sphi 0, %s25
    %s26 = sphi 0, %s23
    %s27 = sphi 0, %s26
    %s43 = sphi 0, %s27
    %s47 = sphi 0, %s47
    %s49 = sphi 0, %s47
    %s50 = sphi 0, %s49
    %s64 = sphi 0, %s50
    %s68 = sphi 0, %s68
    %s70 = sphi 0, %s68
    %s71 = sphi 0, %s70
    %s85 = sphi 0, %s71
    %s89 = sphi 0, %s89
    %s91 = sphi 0, %s89
    %s92 = sphi 0, %s91
    %s106 = sphi 0, %s92
    %s110 = sphi 0, %s110
    %s112 = sphi 0, %s110
    %s113 = sphi 0, %s112
    %s127 = sphi 0, %s113
    %s133 = sphi 0, %s135
    %s136 = sphi 0, %s133
    %s137 = sphi 0, %s136
    %s153 = sphi 0, %s137
    %s159 = sphi 0, %s161
    %s162 = sphi 0, %s159
    %s163 = sphi 0, %s162
    %s179 = sphi 0, %s163
  $region4: #{_fused_forward.1} parent=0 // loop_header_branch
    %16 = sbr.rel (%p14) target = $region8
  $region5: #{_fused_forward.1} parent=0 // loop_body
    %s18 = ssub.s32 %s13, 1
    %s19 = ssub.s32 %s13, 2
    %s20 = sadd.s32 %s13, 1
    %s21 = ssub.s32 %s13, %s20
    %p22 = scmp.eq.s32.totalorder %s21, 0
    %s24 = sadd.s32 %s23, 1
    %s25 = scalar_select %p22, %s23, %s24
    %p28 = pneg %p22
    %p29 = scmp.eq.s32.totalorder %s13, 1
    %p30 = por %p28, %p29
    %p31 = scmp.ne.s32.totalorder %s23, %s26
    %p32 = scmp.eq.s32.totalorder %s13, 0
    %p33 = por %p31, %p32
    %p34 = scmp.ne.s32.totalorder %s23, %s26
    %p35 = scmp.eq.s32.totalorder %s18, 1
    %p36 = por %p34, %p35
    %p37 = scmp.ne.s32.totalorder %s26, %s27
    %p38 = scmp.eq.s32.totalorder %s18, 0
    %p39 = por %p37, %p38
    %p40 = scmp.ne.s32.totalorder %s26, %s27
    %p41 = scmp.eq.s32.totalorder %s19, 1
    %p42 = por %p40, %p41
    %p44 = scmp.ne.s32.totalorder %s27, %s43
    %p45 = scmp.eq.s32.totalorder %s19, 0
    %p46 = por %p44, %p45
    %s48 = sadd.s32 %s47, 1
    %p51 = scmp.eq.s32.totalorder %s13, 1
    %p52 = scmp.ne.s32.totalorder %s47, %s49
    %p53 = scmp.eq.s32.totalorder %s13, 0
    %p54 = por %p52, %p53
    %p55 = scmp.ne.s32.totalorder %s47, %s49
    %p56 = scmp.eq.s32.totalorder %s18, 1
    %p57 = por %p55, %p56
    %p58 = scmp.ne.s32.totalorder %s49, %s50
    %p59 = scmp.eq.s32.totalorder %s18, 0
    %p60 = por %p58, %p59
    %p61 = scmp.ne.s32.totalorder %s49, %s50
    %p62 = scmp.eq.s32.totalorder %s19, 1
    %p63 = por %p61, %p62
    %p65 = scmp.ne.s32.totalorder %s50, %s64
    %p66 = scmp.eq.s32.totalorder %s19, 0
    %p67 = por %p65, %p66
    %s69 = sadd.s32 %s68, 1
    %p72 = scmp.eq.s32.totalorder %s13, 1
    %p73 = scmp.ne.s32.totalorder %s68, %s70
    %p74 = scmp.eq.s32.totalorder %s13, 0
    %p75 = por %p73, %p74
    %p76 = scmp.ne.s32.totalorder %s68, %s70
    %p77 = scmp.eq.s32.totalorder %s18, 1
    %p78 = por %p76, %p77
    %p79 = scmp.ne.s32.totalorder %s70, %s71
    %p80 = scmp.eq.s32.totalorder %s18, 0
    %p81 = por %p79, %p80
    %p82 = scmp.ne.s32.totalorder %s70, %s71
    %p83 = scmp.eq.s32.totalorder %s19, 1
    %p84 = por %p82, %p83
    %p86 = scmp.ne.s32.totalorder %s71, %s85
    %p87 = scmp.eq.s32.totalorder %s19, 0
    %p88 = por %p86, %p87
    %s90 = sadd.s32 %s89, 1
    %p93 = scmp.eq.s32.totalorder %s13, 1
    %p94 = scmp.ne.s32.totalorder %s89, %s91
    %p95 = scmp.eq.s32.totalorder %s13, 0
    %p96 = por %p94, %p95
    %p97 = scmp.ne.s32.totalorder %s89, %s91
    %p98 = scmp.eq.s32.totalorder %s18, 1
    %p99 = por %p97, %p98
    %p100 = scmp.ne.s32.totalorder %s91, %s92
    %p101 = scmp.eq.s32.totalorder %s18, 0
    %p102 = por %p100, %p101
    %p103 = scmp.ne.s32.totalorder %s91, %s92
    %p104 = scmp.eq.s32.totalorder %s19, 1
    %p105 = por %p103, %p104
    %p107 = scmp.ne.s32.totalorder %s92, %s106
    %p108 = scmp.eq.s32.totalorder %s19, 0
    %p109 = por %p107, %p108
    %s111 = sadd.s32 %s110, 1
    %p114 = scmp.eq.s32.totalorder %s13, 1
    %p115 = scmp.ne.s32.totalorder %s110, %s112
    %p116 = scmp.eq.s32.totalorder %s13, 0
    %p117 = por %p115, %p116
    %p118 = scmp.ne.s32.totalorder %s110, %s112
    %p119 = scmp.eq.s32.totalorder %s18, 1
    %p120 = por %p118, %p119
    %p121 = scmp.ne.s32.totalorder %s112, %s113
    %p122 = scmp.eq.s32.totalorder %s18, 0
    %p123 = por %p121, %p122
    %p124 = scmp.ne.s32.totalorder %s112, %s113
    %p125 = scmp.eq.s32.totalorder %s19, 1
    %p126 = por %p124, %p125
    %p128 = scmp.ne.s32.totalorder %s113, %s127
    %p129 = scmp.eq.s32.totalorder %s19, 0
    %p130 = por %p128, %p129
    %s131 = ssub.s32 %s13, %s20
    %p132 = scmp.eq.s32.totalorder %s131, 0
    %s134 = sadd.s32 %s133, 1
    %s135 = scalar_select %p132, %s133, %s134
    %p138 = pneg %p132
    %p139 = scmp.eq.s32.totalorder %s13, 1
    %p140 = por %p138, %p139
    %p141 = scmp.ne.s32.totalorder %s133, %s136
    %p142 = scmp.eq.s32.totalorder %s13, 0
    %p143 = por %p141, %p142
    %p144 = scmp.ne.s32.totalorder %s133, %s136
    %p145 = scmp.eq.s32.totalorder %s18, 1
    %p146 = por %p144, %p145
    %p147 = scmp.ne.s32.totalorder %s136, %s137
    %p148 = scmp.eq.s32.totalorder %s18, 0
    %p149 = por %p147, %p148
    %p150 = scmp.ne.s32.totalorder %s136, %s137
    %p151 = scmp.eq.s32.totalorder %s19, 1
    %p152 = por %p150, %p151
    %p154 = scmp.ne.s32.totalorder %s137, %s153
    %p155 = scmp.eq.s32.totalorder %s19, 0
    %p156 = por %p154, %p155
    %s157 = ssub.s32 %s13, %s20
    %p158 = scmp.eq.s32.totalorder %s157, 0
    %s160 = sadd.s32 %s159, 1
    %s161 = scalar_select %p158, %s159, %s160
    %p164 = pneg %p158
    %p165 = scmp.eq.s32.totalorder %s13, 1
    %p166 = por %p164, %p165
    %p167 = scmp.ne.s32.totalorder %s159, %s162
    %p168 = scmp.eq.s32.totalorder %s13, 0
    %p169 = por %p167, %p168
    %p170 = scmp.ne.s32.totalorder %s159, %s162
    %p171 = scmp.eq.s32.totalorder %s18, 1
    %p172 = por %p170, %p171
    %p173 = scmp.ne.s32.totalorder %s162, %s163
    %p174 = scmp.eq.s32.totalorder %s18, 0
    %p175 = por %p173, %p174
    %p176 = scmp.ne.s32.totalorder %s162, %s163
    %p177 = scmp.eq.s32.totalorder %s19, 1
    %p178 = por %p176, %p177
    %p180 = scmp.ne.s32.totalorder %s163, %s179
    %p181 = scmp.eq.s32.totalorder %s19, 0
    %p182 = por %p180, %p181
    %p183 = scmp.le.s32.totalorder 1, %s13
    %p184 = scmp.lt.s32.totalorder %s13, 3
    %p185 = pnand %p183, %p184
    %p186 = pneg %p185
    // Predicated region
    $region9: #{_fused_forward.1} parent=5 // pred_check
      _
    $region10: #{_fused_forward.1} parent=5 // pred_check_branch
      %188 = sbr.rel (%p185) target = $region12
    $region11: #{_fused_forward.1} parent=5 // pred_region
      %s189 = ssub.s32 %s13, 1
      // Predicated region
      $region13: #{_fused_forward.1} parent=11 // pred_check
        %p190 = pneg %p60
      $region14: #{_fused_forward.1} parent=11 // pred_check_branch
        %192 = sbr.rel (%p190) target = $region16
      $region15: #{_fused_forward.1} parent=11 // pred_region
        _
      $region16: #{_fused_forward.1} parent=11 // pred_fallthru
        _
      // Predicated region
      $region17: #{_fused_forward.1} parent=11 // pred_check
        %p193 = pneg %p81
      $region18: #{_fused_forward.1} parent=11 // pred_check_branch
        %195 = sbr.rel (%p193) target = $region20
      $region19: #{_fused_forward.1} parent=11 // pred_region
        _
      $region20: #{_fused_forward.1} parent=11 // pred_fallthru
        _
      // Predicated region
      $region21: #{_fused_forward.1} parent=11 // pred_check
        %p196 = pneg %p102
      $region22: #{_fused_forward.1} parent=11 // pred_check_branch
        %198 = sbr.rel (%p196) target = $region24
      $region23: #{_fused_forward.1} parent=11 // pred_region
        _
      $region24: #{_fused_forward.1} parent=11 // pred_fallthru
        _
      // Predicated region
      $region25: #{_fused_forward.1} parent=11 // pred_check
        %p199 = pneg %p123
      $region26: #{_fused_forward.1} parent=11 // pred_check_branch
        %201 = sbr.rel (%p199) target = $region28
      $region27: #{_fused_forward.1} parent=11 // pred_region
        _
      $region28: #{_fused_forward.1} parent=11 // pred_fallthru
        _
    $region12: #{_fused_forward.1} parent=5 // pred_fallthru
      _
    %p202 = scmp.lt.s32.totalorder %s13, 2
    // Predicated region
    $region29: #{_fused_forward.1} parent=5 // pred_check
      %p203 = pneg %p202
    $region30: #{_fused_forward.1} parent=5 // pred_check_branch
      %205 = sbr.rel (%p203) target = $region32
    $region31: #{_fused_forward.1} parent=5 // pred_region
      // Predicated region
      $region33: #{_fused_forward.1} parent=31 // pred_check
        %p206 = pneg %p33
      $region34: #{_fused_forward.1} parent=31 // pred_check_branch
        %208 = sbr.rel (%p206) target = $region36
      $region35: #{_fused_forward.1} parent=31 // pred_region
        %p209 = scmp.lt.s32.totalorder %s13, 1
        %s210 = scalar_select %p209, %s13, 1
        %s211 = smul.addr %s210, 32
        %s212 = smul.addr %s211, 4
        %s213 = scalar_lea.vmem %s0, %s212
      $region36: #{_fused_forward.1} parent=31 // pred_fallthru
        _
    $region32: #{_fused_forward.1} parent=5 // pred_fallthru
      _
    %p214 = scmp.le.s32.totalorder 1, %s13
    %p215 = scmp.lt.s32.totalorder %s13, 3
    %p216 = pnand %p214, %p215
    %p217 = pneg %p216
    // Predicated region
    $region37: #{_fused_forward.1} parent=5 // pred_check
      _
    $region38: #{_fused_forward.1} parent=5 // pred_check_branch
      %219 = sbr.rel (%p216) target = $region40
    $region39: #{_fused_forward.1} parent=5 // pred_region
      %s220 = ssub.s32 %s13, 1
      %p221 = scmp.lt.s32.totalorder %s18, 1
      %s222 = scalar_select %p221, %s18, 1
      %s223 = smul.addr %s222, 32
      %s224 = smul.addr %s223, 4
      %s225 = scalar_lea.vmem %s0, %s224
      %p226 = pneg %p39
      %p227 = pneg %p36
      %p228 = pneg %p60
      %p229 = pneg %p57
      %p230 = pneg %p81
      %p231 = pneg %p78
      %p232 = pneg %p102
      %p233 = pneg %p99
      %p234 = pneg %p123
      %p235 = pneg %p120
      %p236 = pneg %p149
      %p237 = pneg %p146
      %p238 = scmp.lt.s32.totalorder %s18, 1
      %s239 = scalar_select %p238, %s18, 1
      %s240 = smul.addr %s239, 32
      %s241 = smul.addr %s240, 8
      %s242 = scalar_lea.vmem %s5, %s241
      %p243 = pneg %p175
      %p244 = pneg %p172
      %p245 = scmp.lt.s32.totalorder %s18, 1
      %s246 = scalar_select %p245, %s18, 1
      %s247 = smul.addr %s246, 32
      %s248 = smul.addr %s247, 8
      %s249 = scalar_lea.vmem %s6, %s248
      %p250 = scmp.lt.s32.totalorder %s18, 1
      %s251 = scalar_select %p250, %s18, 1
      %s252 = smul.addr %s251, 32
      %s253 = smul.addr %s252, 4
      %s254 = scalar_lea.vmem %s0, %s253
      %p255 = scmp.lt.s32.totalorder %s18, 1
      %s256 = scalar_select %p255, %s18, 1
      %s257 = smul.addr %s256, 32
      %s258 = smul.addr %s257, 8
      %s259 = scalar_lea.vmem %s5, %s258
      %p260 = scmp.lt.s32.totalorder %s18, 1
      %s261 = scalar_select %p260, %s18, 1
      %s262 = smul.addr %s261, 32
      %s263 = smul.addr %s262, 8
      %s264 = scalar_lea.vmem %s6, %s263
      %vm266 = vcmask 64512
      %267 = vst.msk [vmem:[#allocation2] sm:$0xff] %vm266, 0.0
      %268 = vst.msk [vmem:[#allocation2 + $0x8] sm:$0xff] %vm266, 0.0
      %269 = vst.msk [vmem:[#allocation2 + $0x10] sm:$0xff] %vm266, 0.0
      %270 = vst.msk [vmem:[#allocation2 + $0x118] sm:$0xff] %vm266, 0.0
      %271 = vst.msk [vmem:[#allocation2 + $0x120] sm:$0xff] %vm266, 0.0
      %272 = vst.msk [vmem:[#allocation2 + $0x128] sm:$0xff] %vm266, 0.0
      %v273 = vld [vmem:[%s1] sm:$0xf]
      %v274 = vld [vmem:[%s1 + $0x4] sm:$0xf]
      %v275 = vld [vmem:[%s1 + $0x8] sm:$0xf]
      %v276 = vld [vmem:[%s1 + $0xc] sm:$0xf]
      %v277 = vld [vmem:[%s1 + $0x10] sm:$0x3]
      %v278 = vld [vmem:[%s2] sm:$0x1]
      %v279 = vld [vmem:[%s4] sm:$0x1]
      %v280 = vld [vmem:[%s254] sm:$0xf]
      %v281 = vld [vmem:[%s254 + $0x4] sm:$0xf]
      %v282 = vld [vmem:[%s254 + $0x8] sm:$0xf]
      %v283 = vld [vmem:[%s254 + $0xc] sm:$0xf]
      %v284 = vld [vmem:[%s254 + $0x10] sm:$0xf]
      %v285 = vld [vmem:[%s254 + $0x14] sm:$0xf]
      %v286 = vld [vmem:[%s254 + $0x18] sm:$0xf]
      %v287 = vld [vmem:[%s254 + $0x1c] sm:$0xf]
      %v288 = vld [vmem:[%s254 + $0x20] sm:$0xf]
      %v289 = vld [vmem:[%s254 + $0x24] sm:$0xf]
      %v290 = vld [vmem:[%s254 + $0x28] sm:$0xf]
      %v291 = vld [vmem:[%s254 + $0x2c] sm:$0xf]
      %v292 = vld [vmem:[%s254 + $0x30] sm:$0xf]
      %v293 = vld [vmem:[%s254 + $0x34] sm:$0xf]
      %v294 = vld [vmem:[%s254 + $0x38] sm:$0xf]
      %v295 = vld [vmem:[%s254 + $0x3c] sm:$0xf]
      %v297 = vlaneseq
      %v298 = vshrl.u32 %v297, 7
      %v299 = vsub.s32 0, %v298
      %v300 = vrot.slane %v278, %v299
      %v318 = vunpack.c.l.b16 %v280
      %v319 = vunpack.c.l.b16 %v281
      %v320 = vunpack.c.l.b16 %v282
      %v321 = vunpack.c.l.b16 %v283
      %v322 = vunpack.c.l.b16 %v284
      %v323 = vunpack.c.l.b16 %v285
      %v324 = vunpack.c.l.b16 %v286
      %v325 = vunpack.c.l.b16 %v287
      %v326 = vunpack.c.l.b16 %v288
      %v327 = vunpack.c.l.b16 %v289
      %v328 = vunpack.c.l.b16 %v290
      %v329 = vunpack.c.l.b16 %v291
      %v330 = vunpack.c.l.b16 %v292
      %v331 = vunpack.c.l.b16 %v293
      %v332 = vunpack.c.l.b16 %v294
      %v333 = vunpack.c.l.b16 %v295
      %v334 = vpack.c.b16 %v319, %v318
      %v335 = vpack.c.b16 %v321, %v320
      %v336 = vpack.c.b16 %v323, %v322
      %v337 = vpack.c.b16 %v325, %v324
      %v338 = vpack.c.b16 %v327, %v326
      %v339 = vpack.c.b16 %v329, %v328
      %v340 = vpack.c.b16 %v331, %v330
      %v341 = vpack.c.b16 %v333, %v332
      %v347 = vunpack.c.l.b16 %v273
      %v348 = vunpack.c.l.b16 %v274
      %v349 = vunpack.c.l.b16 %v275
      %v350 = vunpack.c.l.b16 %v276
      %v351 = vunpack.c.l.b16 %v277
      %v352 = vpack.c.b16 %v348, %v347
      %v353 = vpack.c.b16 %v350, %v349
      %v354 = vpack.c.b16 %v351, %v351
      %vm357 = vcmask 293888
      %v359 = vsel %vm357, %v334, 0
      %v362 = vsel %vm357, %v335, 0
      %v365 = vsel %vm357, %v336, 0
      %v368 = vsel %vm357, %v337, 0
      %v371 = vsel %vm357, %v338, 0
      %v374 = vsel %vm357, %v339, 0
      %v377 = vsel %vm357, %v340, 0
      %v380 = vsel %vm357, %v341, 0
      %vm382 = vcmask 1041408
      %v384 = vsel %vm382, %v354, 0
      %386 = vmatprep.subr.bf16.mxu0 0
      %387 = vmatpush1.bf16.msra.mxu0 %v352
      %388 = vmatprep.subr.bf16.mxu0 0
      %389 = vmatpush1.bf16.msra.mxu0 %v353
      %390 = vmatprep.subr.bf16.mxu0 0
      %391 = vmatpush1.bf16.msra.mxu0 %v384
      %392 = vmatprep.subr.bf16.mxu0 0
      %393 = vmatpush1.bf16.msra.mxu0 0
      %394 = vmatprep.subr.bf16.mxu0 0
      %395 = vmatpush1.bf16.msra.mxu0 0
      %396 = vmatprep.subr.bf16.mxu0 0
      %397 = vmatpush1.bf16.msra.mxu0 0
      %398 = vmatprep.subr.bf16.mxu0 0
      %399 = vmatpush1.bf16.msra.mxu0 0
      %400 = vmatprep.subr.bf16.mxu0 0
      %401 = vmatpush1.bf16.msra.mxu0 0
      %402 = vmatprep.subr.bf16.mxu0 0
      %403 = vmatpush1.bf16.msra.mxu0 0
      %404 = vmatprep.subr.bf16.mxu0 0
      %405 = vmatpush1.bf16.msra.mxu0 0
      %406 = vmatprep.subr.bf16.mxu0 0
      %407 = vmatpush1.bf16.msra.mxu0 0
      %408 = vmatprep.subr.bf16.mxu0 0
      %409 = vmatpush1.bf16.msra.mxu0 0
      %410 = vmatprep.subr.bf16.mxu0 0
      %411 = vmatpush1.bf16.msra.mxu0 0
      %412 = vmatprep.subr.bf16.mxu0 0
      %413 = vmatpush1.bf16.msra.mxu0 0
      %414 = vmatprep.subr.bf16.mxu0 0
      %415 = vmatpush1.bf16.msra.mxu0 0
      %416 = vmatprep.subr.bf16.mxu0 0
      %417 = vmatpush1.bf16.msra.mxu0 0
      %418 = vmatprep.mubr.bf16.mxu0 0
      %419 = vmatmul.mubr.bf16.gmra.mrb[0].mxu0 %v359
      %v420 = vpop.f32.mrb[0].mxu0
      %v421 = vadd.f32 %v300, %v420
      %v422 = vpop.f32.mrb[0].mxu0
      %v423 = vpop.f32.mrb[0].mxu0
      %v424 = vadd.f32 %v300, %v423
      %v425 = vpop.f32.mrb[0].mxu0
      %426 = vmatprep.mubr.bf16.mxu0 0
      %427 = vmatmul.mubr.bf16.gmra.mrb[0].mxu0 %v362
      %v428 = vpop.f32.mrb[0].mxu0
      %v429 = vadd.f32 %v300, %v428
      %v430 = vpop.f32.mrb[0].mxu0
      %v431 = vpop.f32.mrb[0].mxu0
      %v432 = vadd.f32 %v300, %v431
      %v433 = vpop.f32.mrb[0].mxu0
      %434 = vmatprep.mubr.bf16.mxu0 0
      %435 = vmatmul.mubr.bf16.gmra.mrb[0].mxu0 %v365
      %v436 = vpop.f32.mrb[0].mxu0
      %v437 = vadd.f32 %v300, %v436
      %v438 = vpop.f32.mrb[0].mxu0
      %v439 = vpop.f32.mrb[0].mxu0
      %v440 = vadd.f32 %v300, %v439
      %v441 = vpop.f32.mrb[0].mxu0
      %442 = vmatprep.mubr.bf16.mxu0 0
      %443 = vmatmul.mubr.bf16.gmra.mrb[0].mxu0 %v368
      %v444 = vpop.f32.mrb[0].mxu0
      %v445 = vadd.f32 %v300, %v444
      %v446 = vpop.f32.mrb[0].mxu0
      %v447 = vpop.f32.mrb[0].mxu0
      %v448 = vadd.f32 %v300, %v447
      %v449 = vpop.f32.mrb[0].mxu0
      %450 = vmatprep.mubr.bf16.mxu0 0
      %451 = vmatmul.mubr.bf16.gmra.mrb[0].mxu0 %v371
      %v452 = vpop.f32.mrb[0].mxu0
      %v453 = vadd.f32 %v300, %v452
      %v454 = vpop.f32.mrb[0].mxu0
      %v455 = vpop.f32.mrb[0].mxu0
      %v456 = vadd.f32 %v300, %v455
      %v457 = vpop.f32.mrb[0].mxu0
      %458 = vmatprep.mubr.bf16.mxu0 0
      %459 = vmatmul.mubr.bf16.gmra.mrb[0].mxu0 %v374
      %v460 = vpop.f32.mrb[0].mxu0
      %v461 = vadd.f32 %v300, %v460
      %v462 = vpop.f32.mrb[0].mxu0
      %v463 = vpop.f32.mrb[0].mxu0
      %v464 = vadd.f32 %v300, %v463
      %v465 = vpop.f32.mrb[0].mxu0
      %466 = vmatprep.mubr.bf16.mxu0 0
      %467 = vmatmul.mubr.bf16.gmra.mrb[0].mxu0 %v377
      %v468 = vpop.f32.mrb[0].mxu0
      %v469 = vadd.f32 %v300, %v468
      %v470 = vpop.f32.mrb[0].mxu0
      %v471 = vpop.f32.mrb[0].mxu0
      %v472 = vadd.f32 %v300, %v471
      %v473 = vpop.f32.mrb[0].mxu0
      %474 = vmatprep.mubr.bf16.mxu0 0
      %475 = vmatmul.mubr.bf16.gmra.mrb[0].mxu0 %v380
      %v476 = vpop.f32.mrb[0].mxu0
      %v477 = vadd.f32 %v300, %v476
      %v478 = vpop.f32.mrb[0].mxu0
      %v479 = vpop.f32.mrb[0].mxu0
      %v480 = vadd.f32 %v300, %v479
      %v481 = vpop.f32.mrb[0].mxu0
      %482 = vdwg.mxu0
      %483 = vst [vmem:[%s259] sm:$0xff] %v421
      %484 = vst [vmem:[%s259 + $0x8] sm:$0xff] %v424
      %485 = vst [vmem:[%s259 + $0x10] sm:$0xff] %v429
      %486 = vst [vmem:[%s259 + $0x18] sm:$0xff] %v432
      %487 = vst [vmem:[%s259 + $0x20] sm:$0xff] %v437
      %488 = vst [vmem:[%s259 + $0x28] sm:$0xff] %v440
      %489 = vst [vmem:[%s259 + $0x30] sm:$0xff] %v445
      %490 = vst [vmem:[%s259 + $0x38] sm:$0xff] %v448
      %491 = vst [vmem:[%s259 + $0x40] sm:$0xff] %v453
      %492 = vst [vmem:[%s259 + $0x48] sm:$0xff] %v456
      %493 = vst [vmem:[%s259 + $0x50] sm:$0xff] %v461
      %494 = vst [vmem:[%s259 + $0x58] sm:$0xff] %v464
      %495 = vst [vmem:[%s259 + $0x60] sm:$0xff] %v469
      %496 = vst [vmem:[%s259 + $0x68] sm:$0xff] %v472
      %497 = vst [vmem:[%s259 + $0x70] sm:$0xff] %v477
      %498 = vst [vmem:[%s259 + $0x78] sm:$0xff] %v480
      %v499 = vmax.f32 %v421, 0.0
      %v500 = vmax.f32 %v424, 0.0
      %v501 = vmax.f32 %v429, 0.0
      %v502 = vmax.f32 %v432, 0.0
      %v503 = vmax.f32 %v437, 0.0
      %v504 = vmax.f32 %v440, 0.0
      %v505 = vmax.f32 %v445, 0.0
      %v506 = vmax.f32 %v448, 0.0
      %v507 = vmax.f32 %v453, 0.0
      %v508 = vmax.f32 %v456, 0.0
      %v509 = vmax.f32 %v461, 0.0
      %v510 = vmax.f32 %v464, 0.0
      %v511 = vmax.f32 %v469, 0.0
      %v512 = vmax.f32 %v472, 0.0
      %v513 = vmax.f32 %v477, 0.0
      %v514 = vmax.f32 %v480, 0.0
      %515 = vst.msk [vmem:[#allocation2 + $0x18] sm:$0xff] %vm266, %v499
      %516 = vst.msk [vmem:[#allocation2 + $0x20] sm:$0xff] %vm266, %v500
      %517 = vst.msk [vmem:[#allocation2 + $0x28] sm:$0xff] %vm266, %v501
      %518 = vst.msk [vmem:[#allocation2 + $0x30] sm:$0xff] %vm266, %v502
      %519 = vst.msk [vmem:[#allocation2 + $0x38] sm:$0xff] %vm266, %v503
      %520 = vst.msk [vmem:[#allocation2 + $0x40] sm:$0xff] %vm266, %v504
      %521 = vst.msk [vmem:[#allocation2 + $0x48] sm:$0xff] %vm266, %v505
      %522 = vst.msk [vmem:[#allocation2 + $0x50] sm:$0xff] %vm266, %v506
      %523 = vst.msk [vmem:[#allocation2 + $0x58] sm:$0xff] %vm266, %v507
      %524 = vst.msk [vmem:[#allocation2 + $0x60] sm:$0xff] %vm266, %v508
      %525 = vst.msk [vmem:[#allocation2 + $0x68] sm:$0xff] %vm266, %v509
      %526 = vst.msk [vmem:[#allocation2 + $0x70] sm:$0xff] %vm266, %v510
      %527 = vst.msk [vmem:[#allocation2 + $0x78] sm:$0xff] %vm266, %v511
      %528 = vst.msk [vmem:[#allocation2 + $0x80] sm:$0xff] %vm266, %v512
      %529 = vst.msk [vmem:[#allocation2 + $0x88] sm:$0xff] %vm266, %v513
      %530 = vst.msk [vmem:[#allocation2 + $0x90] sm:$0xff] %vm266, %v514
      %v531 = vld [vmem:[%s254 + $0x40] sm:$0xf]
      %v532 = vld [vmem:[%s254 + $0x44] sm:$0xf]
      %v533 = vld [vmem:[%s254 + $0x48] sm:$0xf]
      %v534 = vld [vmem:[%s254 + $0x4c] sm:$0xf]
      %v535 = vld [vmem:[%s254 + $0x50] sm:$0xf]
      %v536 = vld [vmem:[%s254 + $0x54] sm:$0xf]
      %v537 = vld [vmem:[%s254 + $0x58] sm:$0xf]
      %v538 = vld [vmem:[%s254 + $0x5c] sm:$0xf]
      %v539 = vld [vmem:[%s254 + $0x60] sm:$0xf]
      %v540 = vld [vmem:[%s254 + $0x64] sm:$0xf]
      %v541 = vld [vmem:[%s254 + $0x68] sm:$0xf]
      %v542 = vld [vmem:[%s254 + $0x6c] sm:$0xf]
      %v543 = vld [vmem:[%s254 + $0x70] sm:$0xf]
      %v544 = vld [vmem:[%s254 + $0x74] sm:$0xf]
      %v545 = vld [vmem:[%s254 + $0x78] sm:$0xf]
      %v546 = vld [vmem:[%s254 + $0x7c] sm:$0xf]
      %v563 = vunpack.c.l.b16 %v531
      %v564 = vunpack.c.l.b16 %v532
      %v565 = vunpack.c.l.b16 %v533
      %v566 = vunpack.c.l.b16 %v534
      %v567 = vunpack.c.l.b16 %v535
      %v568 = vunpack.c.l.b16 %v536
      %v569 = vunpack.c.l.b16 %v537
      %v570 = vunpack.c.l.b16 %v538
      %v571 = vunpack.c.l.b16 %v539
      %v572 = vunpack.c.l.b16 %v540
      %v573 = vunpack.c.l.b16 %v541
      %v574 = vunpack.c.l.b16 %v542
      %v575 = vunpack.c.l.b16 %v543
      %v576 = vunpack.c.l.b16 %v544
      %v577 = vunpack.c.l.b16 %v545
      %v578 = vunpack.c.l.b16 %v546
      %v579 = vpack.c.b16 %v564, %v563
      %v580 = vpack.c.b16 %v566, %v565
      %v581 = vpack.c.b16 %v568, %v567
      %v582 = vpack.c.b16 %v570, %v569
      %v583 = vpack.c.b16 %v572, %v571
      %v584 = vpack.c.b16 %v574, %v573
      %v585 = vpack.c.b16 %v576, %v575
      %v586 = vpack.c.b16 %v578, %v577
      %v588 = vsel %vm357, %v579, 0
      %v591 = vsel %vm357, %v580, 0
      %v594 = vsel %vm357, %v581, 0
      %v597 = vsel %vm357, %v582, 0
      %v600 = vsel %vm357, %v583, 0
      %v603 = vsel %vm357, %v584, 0
      %v606 = vsel %vm357, %v585, 0
      %v609 = vsel %vm357, %v586, 0
      %611 = vmatprep.subr.bf16.mxu0 0
      %612 = vmatpush1.bf16.msra.mxu0 %v352
      %613 = vmatprep.subr.bf16.mxu0 0
      %614 = vmatpush1.bf16.msra.mxu0 %v353
      %615 = vmatprep.subr.bf16.mxu0 0
      %616 = vmatpush1.bf16.msra.mxu0 %v384
      %617 = vmatprep.subr.bf16.mxu0 0
      %618 = vmatpush1.bf16.msra.mxu0 0
      %619 = vmatprep.subr.bf16.mxu0 0
      %620 = vmatpush1.bf16.msra.mxu0 0
      %621 = vmatprep.subr.bf16.mxu0 0
      %622 = vmatpush1.bf16.msra.mxu0 0
      %623 = vmatprep.subr.bf16.mxu0 0
      %624 = vmatpush1.bf16.msra.mxu0 0
      %625 = vmatprep.subr.bf16.mxu0 0
      %626 = vmatpush1.bf16.msra.mxu0 0
      %627 = vmatprep.subr.bf16.mxu0 0
      %628 = vmatpush1.bf16.msra.mxu0 0
      %629 = vmatprep.subr.bf16.mxu0 0
      %630 = vmatpush1.bf16.msra.mxu0 0
      %631 = vmatprep.subr.bf16.mxu0 0
      %632 = vmatpush1.bf16.msra.mxu0 0
      %633 = vmatprep.subr.bf16.mxu0 0
      %634 = vmatpush1.bf16.msra.mxu0 0
      %635 = vmatprep.subr.bf16.mxu0 0
      %636 = vmatpush1.bf16.msra.mxu0 0
      %637 = vmatprep.subr.bf16.mxu0 0
      %638 = vmatpush1.bf16.msra.mxu0 0
      %639 = vmatprep.subr.bf16.mxu0 0
      %640 = vmatpush1.bf16.msra.mxu0 0
      %641 = vmatprep.subr.bf16.mxu0 0
      %642 = vmatpush1.bf16.msra.mxu0 0
      %643 = vmatprep.mubr.bf16.mxu0 0
      %644 = vmatmul.mubr.bf16.gmra.mrb[0].mxu0 %v588
      %v645 = vpop.f32.mrb[0].mxu0
      %v646 = vadd.f32 %v300, %v645
      %v647 = vpop.f32.mrb[0].mxu0
      %v648 = vpop.f32.mrb[0].mxu0
      %v649 = vadd.f32 %v300, %v648
      %v650 = vpop.f32.mrb[0].mxu0
      %651 = vmatprep.mubr.bf16.mxu0 0
      %652 = vmatmul.mubr.bf16.gmra.mrb[0].mxu0 %v591
      %v653 = vpop.f32.mrb[0].mxu0
      %v654 = vadd.f32 %v300, %v653
      %v655 = vpop.f32.mrb[0].mxu0
      %v656 = vpop.f32.mrb[0].mxu0
      %v657 = vadd.f32 %v300, %v656
      %v658 = vpop.f32.mrb[0].mxu0
      %659 = vmatprep.mubr.bf16.mxu0 0
      %660 = vmatmul.mubr.bf16.gmra.mrb[0].mxu0 %v594
      %v661 = vpop.f32.mrb[0].mxu0
      %v662 = vadd.f32 %v300, %v661
      %v663 = vpop.f32.mrb[0].mxu0
      %v664 = vpop.f32.mrb[0].mxu0
      %v665 = vadd.f32 %v300, %v664
      %v666 = vpop.f32.mrb[0].mxu0
      %667 = vmatprep.mubr.bf16.mxu0 0
      %668 = vmatmul.mubr.bf16.gmra.mrb[0].mxu0 %v597
      %v669 = vpop.f32.mrb[0].mxu0
      %v670 = vadd.f32 %v300, %v669
      %v671 = vpop.f32.mrb[0].mxu0
      %v672 = vpop.f32.mrb[0].mxu0
      %v673 = vadd.f32 %v300, %v672
      %v674 = vpop.f32.mrb[0].mxu0
      %675 = vmatprep.mubr.bf16.mxu0 0
      %676 = vmatmul.mubr.bf16.gmra.mrb[0].mxu0 %v600
      %v677 = vpop.f32.mrb[0].mxu0
      %v678 = vadd.f32 %v300, %v677
      %v679 = vpop.f32.mrb[0].mxu0
      %v680 = vpop.f32.mrb[0].mxu0
      %v681 = vadd.f32 %v300, %v680
      %v682 = vpop.f32.mrb[0].mxu0
      %683 = vmatprep.mubr.bf16.mxu0 0
      %684 = vmatmul.mubr.bf16.gmra.mrb[0].mxu0 %v603
      %v685 = vpop.f32.mrb[0].mxu0
      %v686 = vadd.f32 %v300, %v685
      %v687 = vpop.f32.mrb[0].mxu0
      %v688 = vpop.f32.mrb[0].mxu0
      %v689 = vadd.f32 %v300, %v688
      %v690 = vpop.f32.mrb[0].mxu0
      %691 = vmatprep.mubr.bf16.mxu0 0
      %692 = vmatmul.mubr.bf16.gmra.mrb[0].mxu0 %v606
      %v693 = vpop.f32.mrb[0].mxu0
      %v694 = vadd.f32 %v300, %v693
      %v695 = vpop.f32.mrb[0].mxu0
      %v696 = vpop.f32.mrb[0].mxu0
      %v697 = vadd.f32 %v300, %v696
      %v698 = vpop.f32.mrb[0].mxu0
      %699 = vmatprep.mubr.bf16.mxu0 0
      %700 = vmatmul.mubr.bf16.gmra.mrb[0].mxu0 %v609
      %v701 = vpop.f32.mrb[0].mxu0
      %v702 = vadd.f32 %v300, %v701
      %v703 = vpop.f32.mrb[0].mxu0
      %v704 = vpop.f32.mrb[0].mxu0
      %v705 = vadd.f32 %v300, %v704
      %v706 = vpop.f32.mrb[0].mxu0
      %707 = vdwg.mxu0
      %708 = vst [vmem:[%s259 + $0x80] sm:$0xff] %v646
      %709 = vst [vmem:[%s259 + $0x88] sm:$0xff] %v649
      %710 = vst [vmem:[%s259 + $0x90] sm:$0xff] %v654
      %711 = vst [vmem:[%s259 + $0x98] sm:$0xff] %v657
      %712 = vst [vmem:[%s259 + $0xa0] sm:$0xff] %v662
      %713 = vst [vmem:[%s259 + $0xa8] sm:$0xff] %v665
      %714 = vst [vmem:[%s259 + $0xb0] sm:$0xff] %v670
      %715 = vst [vmem:[%s259 + $0xb8] sm:$0xff] %v673
      %716 = vst [vmem:[%s259 + $0xc0] sm:$0xff] %v678
      %717 = vst [vmem:[%s259 + $0xc8] sm:$0xff] %v681
      %718 = vst [vmem:[%s259 + $0xd0] sm:$0xff] %v686
      %719 = vst [vmem:[%s259 + $0xd8] sm:$0xff] %v689
      %720 = vst [vmem:[%s259 + $0xe0] sm:$0xff] %v694
      %721 = vst [vmem:[%s259 + $0xe8] sm:$0xff] %v697
      %722 = vst [vmem:[%s259 + $0xf0] sm:$0xff] %v702
      %723 = vst [vmem:[%s259 + $0xf8] sm:$0xff] %v705
      %v724 = vmax.f32 %v646, 0.0
      %v725 = vmax.f32 %v649, 0.0
      %v726 = vmax.f32 %v654, 0.0
      %v727 = vmax.f32 %v657, 0.0
      %v728 = vmax.f32 %v662, 0.0
      %v729 = vmax.f32 %v665, 0.0
      %v730 = vmax.f32 %v670, 0.0
      %v731 = vmax.f32 %v673, 0.0
      %v732 = vmax.f32 %v678, 0.0
      %v733 = vmax.f32 %v681, 0.0
      %v734 = vmax.f32 %v686, 0.0
      %v735 = vmax.f32 %v689, 0.0
      %v736 = vmax.f32 %v694, 0.0
      %v737 = vmax.f32 %v697, 0.0
      %v738 = vmax.f32 %v702, 0.0
      %v739 = vmax.f32 %v705, 0.0
      %740 = vst.msk [vmem:[#allocation2 + $0x98] sm:$0xff] %vm266, %v724
      %741 = vst.msk [vmem:[#allocation2 + $0xa0] sm:$0xff] %vm266, %v725
      %742 = vst.msk [vmem:[#allocation2 + $0xa8] sm:$0xff] %vm266, %v726
      %743 = vst.msk [vmem:[#allocation2 + $0xb0] sm:$0xff] %vm266, %v727
      %744 = vst.msk [vmem:[#allocation2 + $0xb8] sm:$0xff] %vm266, %v728
      %745 = vst.msk [vmem:[#allocation2 + $0xc0] sm:$0xff] %vm266, %v729
      %746 = vst.msk [vmem:[#allocation2 + $0xc8] sm:$0xff] %vm266, %v730
      %747 = vst.msk [vmem:[#allocation2 + $0xd0] sm:$0xff] %vm266, %v731
      %748 = vst.msk [vmem:[#allocation2 + $0xd8] sm:$0xff] %vm266, %v732
      %749 = vst.msk [vmem:[#allocation2 + $0xe0] sm:$0xff] %vm266, %v733
      %750 = vst.msk [vmem:[#allocation2 + $0xe8] sm:$0xff] %vm266, %v734
      %751 = vst.msk [vmem:[#allocation2 + $0xf0] sm:$0xff] %vm266, %v735
      %752 = vst.msk [vmem:[#allocation2 + $0xf8] sm:$0xff] %vm266, %v736
      %753 = vst.msk [vmem:[#allocation2 + $0x100] sm:$0xff] %vm266, %v737
      %754 = vst.msk [vmem:[#allocation2 + $0x108] sm:$0xff] %vm266, %v738
      %755 = vst.msk [vmem:[#allocation2 + $0x110] sm:$0xff] %vm266, %v739
      %v756 = vlaneseq
      %v757 = vshrl.u32 %v756, 7
      %v758 = vadd.s32 %v757, 8
      %v759 = vadd.s32 %v757, 16
      %v760 = vadd.s32 %v757, 24
      %v761 = vadd.s32 %v757, 32
      %v762 = vadd.s32 %v757, 40
      %v763 = vadd.s32 %v757, 48
      %v764 = vadd.s32 %v757, 56
      %v765 = vadd.s32 %v757, 64
      %v766 = vadd.s32 %v757, 72
      %v767 = vadd.s32 %v757, 80
      %v768 = vadd.s32 %v757, 88
      %v769 = vadd.s32 %v757, 96
      %v770 = vadd.s32 %v757, 104
      %v771 = vadd.s32 %v757, 112
      %v772 = vadd.s32 %v757, 120
      %vm773 = vcmp.lt.s32.totalorder %v757, 0
      %v774 = vsub.s32 0, %v757
      %v775 = vsel %vm773, %v774, %v757
      %v776 = vshrl.u32 %v775, 4
      %v777 = vand.u32 %v775, 15
      %v778 = vsub.s32 0, %v777
      %v779 = vsel %vm773, %v778, %v777
      %vm780 = vcmp.lt.s32.totalorder %v758, 0
      %v781 = vsub.s32 0, %v758
      %v782 = vsel %vm780, %v781, %v758
      %v783 = vshrl.u32 %v782, 4
      %v784 = vand.u32 %v782, 15
      %v785 = vsub.s32 0, %v784
      %v786 = vsel %vm780, %v785, %v784
      %vm787 = vcmp.lt.s32.totalorder %v759, 0
      %v788 = vsub.s32 0, %v759
      %v789 = vsel %vm787, %v788, %v759
      %v790 = vshrl.u32 %v789, 4
      %v791 = vand.u32 %v789, 15
      %v792 = vsub.s32 0, %v791
      %v793 = vsel %vm787, %v792, %v791
      %vm794 = vcmp.lt.s32.totalorder %v760, 0
      %v795 = vsub.s32 0, %v760
      %v796 = vsel %vm794, %v795, %v760
      %v797 = vshrl.u32 %v796, 4
      %v798 = vand.u32 %v796, 15
      %v799 = vsub.s32 0, %v798
      %v800 = vsel %vm794, %v799, %v798
      %vm801 = vcmp.lt.s32.totalorder %v761, 0
      %v802 = vsub.s32 0, %v761
      %v803 = vsel %vm801, %v802, %v761
      %v804 = vshrl.u32 %v803, 4
      %v805 = vand.u32 %v803, 15
      %v806 = vsub.s32 0, %v805
      %v807 = vsel %vm801, %v806, %v805
      %vm808 = vcmp.lt.s32.totalorder %v762, 0
      %v809 = vsub.s32 0, %v762
      %v810 = vsel %vm808, %v809, %v762
      %v811 = vshrl.u32 %v810, 4
      %v812 = vand.u32 %v810, 15
      %v813 = vsub.s32 0, %v812
      %v814 = vsel %vm808, %v813, %v812
      %vm815 = vcmp.lt.s32.totalorder %v763, 0
      %v816 = vsub.s32 0, %v763
      %v817 = vsel %vm815, %v816, %v763
      %v818 = vshrl.u32 %v817, 4
      %v819 = vand.u32 %v817, 15
      %v820 = vsub.s32 0, %v819
      %v821 = vsel %vm815, %v820, %v819
      %vm822 = vcmp.lt.s32.totalorder %v764, 0
      %v823 = vsub.s32 0, %v764
      %v824 = vsel %vm822, %v823, %v764
      %v825 = vshrl.u32 %v824, 4
      %v826 = vand.u32 %v824, 15
      %v827 = vsub.s32 0, %v826
      %v828 = vsel %vm822, %v827, %v826
      %vm829 = vcmp.lt.s32.totalorder %v765, 0
      %v830 = vsub.s32 0, %v765
      %v831 = vsel %vm829, %v830, %v765
      %v832 = vshrl.u32 %v831, 4
      %v833 = vand.u32 %v831, 15
      %v834 = vsub.s32 0, %v833
      %v835 = vsel %vm829, %v834, %v833
      %vm836 = vcmp.lt.s32.totalorder %v766, 0
      %v837 = vsub.s32 0, %v766
      %v838 = vsel %vm836, %v837, %v766
      %v839 = vshrl.u32 %v838, 4
      %v840 = vand.u32 %v838, 15
      %v841 = vsub.s32 0, %v840
      %v842 = vsel %vm836, %v841, %v840
      %vm843 = vcmp.lt.s32.totalorder %v767, 0
      %v844 = vsub.s32 0, %v767
      %v845 = vsel %vm843, %v844, %v767
      %v846 = vshrl.u32 %v845, 4
      %v847 = vand.u32 %v845, 15
      %v848 = vsub.s32 0, %v847
      %v849 = vsel %vm843, %v848, %v847
      %vm850 = vcmp.lt.s32.totalorder %v768, 0
      %v851 = vsub.s32 0, %v768
      %v852 = vsel %vm850, %v851, %v768
      %v853 = vshrl.u32 %v852, 4
      %v854 = vand.u32 %v852, 15
      %v855 = vsub.s32 0, %v854
      %v856 = vsel %vm850, %v855, %v854
      %vm857 = vcmp.lt.s32.totalorder %v769, 0
      %v858 = vsub.s32 0, %v769
      %v859 = vsel %vm857, %v858, %v769
      %v860 = vshrl.u32 %v859, 4
      %v861 = vand.u32 %v859, 15
      %v862 = vsub.s32 0, %v861
      %v863 = vsel %vm857, %v862, %v861
      %vm864 = vcmp.lt.s32.totalorder %v770, 0
      %v865 = vsub.s32 0, %v770
      %v866 = vsel %vm864, %v865, %v770
      %v867 = vshrl.u32 %v866, 4
      %v868 = vand.u32 %v866, 15
      %v869 = vsub.s32 0, %v868
      %v870 = vsel %vm864, %v869, %v868
      %vm871 = vcmp.lt.s32.totalorder %v771, 0
      %v872 = vsub.s32 0, %v771
      %v873 = vsel %vm871, %v872, %v771
      %v874 = vshrl.u32 %v873, 4
      %v875 = vand.u32 %v873, 15
      %v876 = vsub.s32 0, %v875
      %v877 = vsel %vm871, %v876, %v875
      %vm878 = vcmp.lt.s32.totalorder %v772, 0
      %v879 = vsub.s32 0, %v772
      %v880 = vsel %vm878, %v879, %v772
      %v881 = vshrl.u32 %v880, 4
      %v882 = vand.u32 %v880, 15
      %v883 = vsub.s32 0, %v882
      %v884 = vsel %vm878, %v883, %v882
      %vm885 = vcmp.ne.s32.totalorder %v779, 0
      %vm886 = vcmp.ne.s32.totalorder %v786, 0
      %vm887 = vcmp.ne.s32.totalorder %v793, 0
      %vm888 = vcmp.ne.s32.totalorder %v800, 0
      %vm889 = vcmp.ne.s32.totalorder %v807, 0
      %vm890 = vcmp.ne.s32.totalorder %v814, 0
      %vm891 = vcmp.ne.s32.totalorder %v821, 0
      %vm892 = vcmp.ne.s32.totalorder %v828, 0
      %vm893 = vcmp.ne.s32.totalorder %v835, 0
      %vm894 = vcmp.ne.s32.totalorder %v842, 0
      %vm895 = vcmp.ne.s32.totalorder %v849, 0
      %vm896 = vcmp.ne.s32.totalorder %v856, 0
      %vm897 = vcmp.ne.s32.totalorder %v863, 0
      %vm898 = vcmp.ne.s32.totalorder %v870, 0
      %vm899 = vcmp.ne.s32.totalorder %v877, 0
      %vm900 = vcmp.ne.s32.totalorder %v884, 0
      %vm901 = vcmp.lt.s32.totalorder %v779, 0
      %vm902 = vcmp.lt.s32.totalorder %v786, 0
      %vm903 = vcmp.lt.s32.totalorder %v793, 0
      %vm904 = vcmp.lt.s32.totalorder %v800, 0
      %vm905 = vcmp.lt.s32.totalorder %v807, 0
      %vm906 = vcmp.lt.s32.totalorder %v814, 0
      %vm907 = vcmp.lt.s32.totalorder %v821, 0
      %vm908 = vcmp.lt.s32.totalorder %v828, 0
      %vm909 = vcmp.lt.s32.totalorder %v835, 0
      %vm910 = vcmp.lt.s32.totalorder %v842, 0
      %vm911 = vcmp.lt.s32.totalorder %v849, 0
      %vm912 = vcmp.lt.s32.totalorder %v856, 0
      %vm913 = vcmp.lt.s32.totalorder %v863, 0
      %vm914 = vcmp.lt.s32.totalorder %v870, 0
      %vm915 = vcmp.lt.s32.totalorder %v877, 0
      %vm916 = vcmp.lt.s32.totalorder %v884, 0
      %vm917 = vmand %vm901, %vm885
      %vm918 = vmand %vm902, %vm886
      %vm919 = vmand %vm903, %vm887
      %vm920 = vmand %vm904, %vm888
      %vm921 = vmand %vm905, %vm889
      %vm922 = vmand %vm906, %vm890
      %vm923 = vmand %vm907, %vm891
      %vm924 = vmand %vm908, %vm892
      %vm925 = vmand %vm909, %vm893
      %vm926 = vmand %vm910, %vm894
      %vm927 = vmand %vm911, %vm895
      %vm928 = vmand %vm912, %vm896
      %vm929 = vmand %vm913, %vm897
      %vm930 = vmand %vm914, %vm898
      %vm931 = vmand %vm915, %vm899
      %vm932 = vmand %vm916, %vm900
      %v933 = vadd.s32 %v779, 16
      %v934 = vadd.s32 %v786, 16
      %v935 = vadd.s32 %v793, 16
      %v936 = vadd.s32 %v800, 16
      %v937 = vadd.s32 %v807, 16
      %v938 = vadd.s32 %v814, 16
      %v939 = vadd.s32 %v821, 16
      %v940 = vadd.s32 %v828, 16
      %v941 = vadd.s32 %v835, 16
      %v942 = vadd.s32 %v842, 16
      %v943 = vadd.s32 %v849, 16
      %v944 = vadd.s32 %v856, 16
      %v945 = vadd.s32 %v863, 16
      %v946 = vadd.s32 %v870, 16
      %v947 = vadd.s32 %v877, 16
      %v948 = vadd.s32 %v884, 16
      %v949 = vsel %vm917, %v933, %v779
      %v950 = vsel %vm918, %v934, %v786
      %v951 = vsel %vm919, %v935, %v793
      %v952 = vsel %vm920, %v936, %v800
      %v953 = vsel %vm921, %v937, %v807
      %v954 = vsel %vm922, %v938, %v814
      %v955 = vsel %vm923, %v939, %v821
      %v956 = vsel %vm924, %v940, %v828
      %v957 = vsel %vm925, %v941, %v835
      %v958 = vsel %vm926, %v942, %v842
      %v959 = vsel %vm927, %v943, %v849
      %v960 = vsel %vm928, %v944, %v856
      %v961 = vsel %vm929, %v945, %v863
      %v962 = vsel %vm930, %v946, %v870
      %v963 = vsel %vm931, %v947, %v877
      %v964 = vsel %vm932, %v948, %v884
      %vm965 = vcmp.ge.s32.totalorder %v949, 1
      %vm966 = vcmp.ge.s32.totalorder %v950, 1
      %vm967 = vcmp.ge.s32.totalorder %v951, 1
      %vm968 = vcmp.ge.s32.totalorder %v952, 1
      %vm969 = vcmp.ge.s32.totalorder %v953, 1
      %vm970 = vcmp.ge.s32.totalorder %v954, 1
      %vm971 = vcmp.ge.s32.totalorder %v955, 1
      %vm972 = vcmp.ge.s32.totalorder %v956, 1
      %vm973 = vcmp.ge.s32.totalorder %v957, 1
      %vm974 = vcmp.ge.s32.totalorder %v958, 1
      %vm975 = vcmp.ge.s32.totalorder %v959, 1
      %vm976 = vcmp.ge.s32.totalorder %v960, 1
      %vm977 = vcmp.ge.s32.totalorder %v961, 1
      %vm978 = vcmp.ge.s32.totalorder %v962, 1
      %vm979 = vcmp.ge.s32.totalorder %v963, 1
      %vm980 = vcmp.ge.s32.totalorder %v964, 1
      %vm981 = vcmp.le.s32.totalorder %v949, 14
      %vm982 = vcmp.le.s32.totalorder %v950, 14
      %vm983 = vcmp.le.s32.totalorder %v951, 14
      %vm984 = vcmp.le.s32.totalorder %v952, 14
      %vm985 = vcmp.le.s32.totalorder %v953, 14
      %vm986 = vcmp.le.s32.totalorder %v954, 14
      %vm987 = vcmp.le.s32.totalorder %v955, 14
      %vm988 = vcmp.le.s32.totalorder %v956, 14
      %vm989 = vcmp.le.s32.totalorder %v957, 14
      %vm990 = vcmp.le.s32.totalorder %v958, 14
      %vm991 = vcmp.le.s32.totalorder %v959, 14
      %vm992 = vcmp.le.s32.totalorder %v960, 14
      %vm993 = vcmp.le.s32.totalorder %v961, 14
      %vm994 = vcmp.le.s32.totalorder %v962, 14
      %vm995 = vcmp.le.s32.totalorder %v963, 14
      %vm996 = vcmp.le.s32.totalorder %v964, 14
      %v997 = vld [vmem:[#allocation2 + $0x7] sm:$0xff]
      %v998 = vld [vmem:[#allocation2 + $0xf] sm:$0xff]
      %v999 = vld [vmem:[#allocation2 + $0x17] sm:$0xff]
      %v1000 = vld [vmem:[#allocation2 + $0x1f] sm:$0xff]
      %v1001 = vld [vmem:[#allocation2 + $0x27] sm:$0xff]
      %v1002 = vld [vmem:[#allocation2 + $0x2f] sm:$0xff]
      %v1003 = vld [vmem:[#allocation2 + $0x37] sm:$0xff]
      %v1004 = vld [vmem:[#allocation2 + $0x3f] sm:$0xff]
      %v1005 = vld [vmem:[#allocation2 + $0x47] sm:$0xff]
      %v1006 = vld [vmem:[#allocation2 + $0x4f] sm:$0xff]
      %v1007 = vld [vmem:[#allocation2 + $0x57] sm:$0xff]
      %v1008 = vld [vmem:[#allocation2 + $0x5f] sm:$0xff]
      %v1009 = vld [vmem:[#allocation2 + $0x67] sm:$0xff]
      %v1010 = vld [vmem:[#allocation2 + $0x6f] sm:$0xff]
      %v1011 = vld [vmem:[#allocation2 + $0x77] sm:$0xff]
      %v1012 = vld [vmem:[#allocation2 + $0x7f] sm:$0xff]
      %v1013 = vsel %vm965, 1, 0
      %v1014 = vsel %vm966, 1, 0
      %v1015 = vsel %vm967, 1, 0
      %v1016 = vsel %vm968, 1, 0
      %v1017 = vsel %vm969, 1, 0
      %v1018 = vsel %vm970, 1, 0
      %v1019 = vsel %vm971, 1, 0
      %v1020 = vsel %vm972, 1, 0
      %v1021 = vsel %vm973, 1, 0
      %v1022 = vsel %vm974, 1, 0
      %v1023 = vsel %vm975, 1, 0
      %v1024 = vsel %vm976, 1, 0
      %v1025 = vsel %vm977, 1, 0
      %v1026 = vsel %vm978, 1, 0
      %v1027 = vsel %vm979, 1, 0
      %v1028 = vsel %vm980, 1, 0
      %vm1029 = vcmp.eq.s32.totalorder %v1013, 1
      %vm1030 = vcmp.eq.s32.totalorder %v1014, 1
      %vm1031 = vcmp.eq.s32.totalorder %v1015, 1
      %vm1032 = vcmp.eq.s32.totalorder %v1016, 1
      %vm1033 = vcmp.eq.s32.totalorder %v1017, 1
      %vm1034 = vcmp.eq.s32.totalorder %v1018, 1
      %vm1035 = vcmp.eq.s32.totalorder %v1019, 1
      %vm1036 = vcmp.eq.s32.totalorder %v1020, 1
      %vm1037 = vcmp.eq.s32.totalorder %v1021, 1
      %vm1038 = vcmp.eq.s32.totalorder %v1022, 1
      %vm1039 = vcmp.eq.s32.totalorder %v1023, 1
      %vm1040 = vcmp.eq.s32.totalorder %v1024, 1
      %vm1041 = vcmp.eq.s32.totalorder %v1025, 1
      %vm1042 = vcmp.eq.s32.totalorder %v1026, 1
      %vm1043 = vcmp.eq.s32.totalorder %v1027, 1
      %vm1044 = vcmp.eq.s32.totalorder %v1028, 1
      %v1045 = vsel %vm1029, %v997, 0.0
      %v1046 = vsel %vm1030, %v998, 0.0
      %v1047 = vsel %vm1031, %v999, 0.0
      %v1048 = vsel %vm1032, %v1000, 0.0
      %v1049 = vsel %vm1033, %v1001, 0.0
      %v1050 = vsel %vm1034, %v1002, 0.0
      %v1051 = vsel %vm1035, %v1003, 0.0
      %v1052 = vsel %vm1036, %v1004, 0.0
      %v1053 = vsel %vm1037, %v1005, 0.0
      %v1054 = vsel %vm1038, %v1006, 0.0
      %v1055 = vsel %vm1039, %v1007, 0.0
      %v1056 = vsel %vm1040, %v1008, 0.0
      %v1057 = vsel %vm1041, %v1009, 0.0
      %v1058 = vsel %vm1042, %v1010, 0.0
      %v1059 = vsel %vm1043, %v1011, 0.0
      %v1060 = vsel %vm1044, %v1012, 0.0
      %v1061 = vpack.c.bf16 %v1046, %v1045
      %v1062 = vpack.c.bf16 %v1048, %v1047
      %v1063 = vpack.c.bf16 %v1050, %v1049
      %v1064 = vpack.c.bf16 %v1052, %v1051
      %v1065 = vpack.c.bf16 %v1054, %v1053
      %v1066 = vpack.c.bf16 %v1056, %v1055
      %v1067 = vpack.c.bf16 %v1058, %v1057
      %v1068 = vpack.c.bf16 %v1060, %v1059
      %v1069 = vld [vmem:[%s3] sm:$0xf]
      %v1070 = vld [vmem:[#allocation2 + $0x8] sm:$0xff]
      %v1071 = vld [vmem:[#allocation2 + $0x10] sm:$0xff]
      %v1072 = vld [vmem:[#allocation2 + $0x18] sm:$0xff]
      %v1073 = vld [vmem:[#allocation2 + $0x20] sm:$0xff]
      %v1074 = vld [vmem:[#allocation2 + $0x28] sm:$0xff]
      %v1075 = vld [vmem:[#allocation2 + $0x30] sm:$0xff]
      %v1076 = vld [vmem:[#allocation2 + $0x38] sm:$0xff]
      %v1077 = vld [vmem:[#allocation2 + $0x40] sm:$0xff]
      %v1078 = vld [vmem:[#allocation2 + $0x48] sm:$0xff]
      %v1079 = vld [vmem:[#allocation2 + $0x50] sm:$0xff]
      %v1080 = vld [vmem:[#allocation2 + $0x58] sm:$0xff]
      %v1081 = vld [vmem:[#allocation2 + $0x60] sm:$0xff]
      %v1082 = vld [vmem:[#allocation2 + $0x68] sm:$0xff]
      %v1083 = vld [vmem:[#allocation2 + $0x70] sm:$0xff]
      %v1084 = vld [vmem:[#allocation2 + $0x78] sm:$0xff]
      %v1085 = vld [vmem:[#allocation2 + $0x80] sm:$0xff]
      %v1086 = vpack.c.bf16 %v1071, %v1070
      %v1087 = vpack.c.bf16 %v1073, %v1072
      %v1088 = vpack.c.bf16 %v1075, %v1074
      %v1089 = vpack.c.bf16 %v1077, %v1076
      %v1090 = vpack.c.bf16 %v1079, %v1078
      %v1091 = vpack.c.bf16 %v1081, %v1080
      %v1092 = vpack.c.bf16 %v1083, %v1082
      %v1093 = vpack.c.bf16 %v1085, %v1084
      %s1094 = scalar_lea.vmem %s3, 4
      %v1095 = vld [vmem:[%s1094] sm:$0xf]
      %v1097 = vsel %vm266, %v1086, 0
      %v1100 = vsel %vm266, %v1087, 0
      %v1103 = vsel %vm266, %v1088, 0
      %v1106 = vsel %vm266, %v1089, 0
      %v1109 = vsel %vm266, %v1090, 0
      %v1112 = vsel %vm266, %v1091, 0
      %v1115 = vsel %vm266, %v1092, 0
      %v1118 = vsel %vm266, %v1093, 0
      %vm1120 = vcmask 1043456
      %v1122 = vsel %vm1120, %v1095, 0
      %1124 = vmatprep.subr.bf16.mxu0 0
      %1125 = vmatpush1.bf16.msra.mxu0 %v1122
      %1126 = vmatprep.subr.bf16.mxu0 0
      %1127 = vmatpush1.bf16.msra.mxu0 0
      %1128 = vmatprep.subr.bf16.mxu0 0
      %1129 = vmatpush1.bf16.msra.mxu0 0
      %1130 = vmatprep.subr.bf16.mxu0 0
      %1131 = vmatpush1.bf16.msra.mxu0 0
      %1132 = vmatprep.subr.bf16.mxu0 0
      %1133 = vmatpush1.bf16.msra.mxu0 0
      %1134 = vmatprep.subr.bf16.mxu0 0
      %1135 = vmatpush1.bf16.msra.mxu0 0
      %1136 = vmatprep.subr.bf16.mxu0 0
      %1137 = vmatpush1.bf16.msra.mxu0 0
      %1138 = vmatprep.subr.bf16.mxu0 0
      %1139 = vmatpush1.bf16.msra.mxu0 0
      %1140 = vmatprep.subr.bf16.mxu0 0
      %1141 = vmatpush1.bf16.msra.mxu0 0
      %1142 = vmatprep.subr.bf16.mxu0 0
      %1143 = vmatpush1.bf16.msra.mxu0 0
      %1144 = vmatprep.subr.bf16.mxu0 0
      %1145 = vmatpush1.bf16.msra.mxu0 0
      %1146 = vmatprep.subr.bf16.mxu0 0
      %1147 = vmatpush1.bf16.msra.mxu0 0
      %1148 = vmatprep.subr.bf16.mxu0 0
      %1149 = vmatpush1.bf16.msra.mxu0 0
      %1150 = vmatprep.subr.bf16.mxu0 0
      %1151 = vmatpush1.bf16.msra.mxu0 0
      %1152 = vmatprep.subr.bf16.mxu0 0
      %1153 = vmatpush1.bf16.msra.mxu0 0
      %1154 = vmatprep.subr.bf16.mxu0 0
      %1155 = vmatpush1.bf16.msra.mxu0 0
      %1156 = vmatprep.mubr.bf16.mxu0 0
      %1157 = vmatmul.mubr.bf16.gmra.mrb[0].mxu0 %v1097
      %v1158 = vpop.f32.mrb[0].mxu0
      %v1159 = vadd.f32 0.0, %v1158
      %v1160 = vpop.f32.mrb[0].mxu0
      %v1161 = vpop.f32.mrb[0].mxu0
      %v1162 = vadd.f32 0.0, %v1161
      %v1163 = vpop.f32.mrb[0].mxu0
      %1164 = vmatprep.mubr.bf16.mxu0 0
      %1165 = vmatmul.mubr.bf16.gmra.mrb[0].mxu0 %v1100
      %v1166 = vpop.f32.mrb[0].mxu0
      %v1167 = vadd.f32 0.0, %v1166
      %v1168 = vpop.f32.mrb[0].mxu0
      %v1169 = vpop.f32.mrb[0].mxu0
      %v1170 = vadd.f32 0.0, %v1169
      %v1171 = vpop.f32.mrb[0].mxu0
      %1172 = vmatprep.mubr.bf16.mxu0 0
      %1173 = vmatmul.mubr.bf16.gmra.mrb[0].mxu0 %v1103
      %v1174 = vpop.f32.mrb[0].mxu0
      %v1175 = vadd.f32 0.0, %v1174
      %v1176 = vpop.f32.mrb[0].mxu0
      %v1177 = vpop.f32.mrb[0].mxu0
      %v1178 = vadd.f32 0.0, %v1177
      %v1179 = vpop.f32.mrb[0].mxu0
      %1180 = vmatprep.mubr.bf16.mxu0 0
      %1181 = vmatmul.mubr.bf16.gmra.mrb[0].mxu0 %v1106
      %v1182 = vpop.f32.mrb[0].mxu0
      %v1183 = vadd.f32 0.0, %v1182
      %v1184 = vpop.f32.mrb[0].mxu0
      %v1185 = vpop.f32.mrb[0].mxu0
      %v1186 = vadd.f32 0.0, %v1185
      %v1187 = vpop.f32.mrb[0].mxu0
      %1188 = vmatprep.mubr.bf16.mxu0 0
      %1189 = vmatmul.mubr.bf16.gmra.mrb[0].mxu0 %v1109
      %v1190 = vpop.f32.mrb[0].mxu0
      %v1191 = vadd.f32 0.0, %v1190
      %v1192 = vpop.f32.mrb[0].mxu0
      %v1193 = vpop.f32.mrb[0].mxu0
      %v1194 = vadd.f32 0.0, %v1193
      %v1195 = vpop.f32.mrb[0].mxu0
      %1196 = vmatprep.mubr.bf16.mxu0 0
      %1197 = vmatmul.mubr.bf16.gmra.mrb[0].mxu0 %v1112
      %v1198 = vpop.f32.mrb[0].mxu0
      %v1199 = vadd.f32 0.0, %v1198
      %v1200 = vpop.f32.mrb[0].mxu0
      %v1201 = vpop.f32.mrb[0].mxu0
      %v1202 = vadd.f32 0.0, %v1201
      %v1203 = vpop.f32.mrb[0].mxu0
      %1204 = vmatprep.mubr.bf16.mxu0 0
      %1205 = vmatmul.mubr.bf16.gmra.mrb[0].mxu0 %v1115
      %v1206 = vpop.f32.mrb[0].mxu0
      %v1207 = vadd.f32 0.0, %v1206
      %v1208 = vpop.f32.mrb[0].mxu0
      %v1209 = vpop.f32.mrb[0].mxu0
      %v1210 = vadd.f32 0.0, %v1209
      %v1211 = vpop.f32.mrb[0].mxu0
      %1212 = vmatprep.mubr.bf16.mxu0 0
      %1213 = vmatmul.mubr.bf16.gmra.mrb[0].mxu0 %v1118
      %v1214 = vpop.f32.mrb[0].mxu0
      %v1215 = vadd.f32 0.0, %v1214
      %v1216 = vpop.f32.mrb[0].mxu0
      %v1217 = vpop.f32.mrb[0].mxu0
      %v1218 = vadd.f32 0.0, %v1217
      %v1219 = vpop.f32.mrb[0].mxu0
      %1220 = vdwg.mxu0
      %v1222 = vsel %vm266, %v1061, 0
      %v1225 = vsel %vm266, %v1062, 0
      %v1228 = vsel %vm266, %v1063, 0
      %v1231 = vsel %vm266, %v1064, 0
      %v1234 = vsel %vm266, %v1065, 0
      %v1237 = vsel %vm266, %v1066, 0
      %v1240 = vsel %vm266, %v1067, 0
      %v1243 = vsel %vm266, %v1068, 0
      %v1246 = vsel %vm1120, %v1069, 0
      %1248 = vmatprep.subr.bf16.mxu0 0
      %1249 = vmatpush1.bf16.msra.mxu0 %v1246
      %1250 = vmatprep.subr.bf16.mxu0 0
      %1251 = vmatpush1.bf16.msra.mxu0 0
      %1252 = vmatprep.subr.bf16.mxu0 0
      %1253 = vmatpush1.bf16.msra.mxu0 0
      %1254 = vmatprep.subr.bf16.mxu0 0
      %1255 = vmatpush1.bf16.msra.mxu0 0
      %1256 = vmatprep.subr.bf16.mxu0 0
      %1257 = vmatpush1.bf16.msra.mxu0 0
      %1258 = vmatprep.subr.bf16.mxu0 0
      %1259 = vmatpush1.bf16.msra.mxu0 0
      %1260 = vmatprep.subr.bf16.mxu0 0
      %1261 = vmatpush1.bf16.msra.mxu0 0
      %1262 = vmatprep.subr.bf16.mxu0 0
      %1263 = vmatpush1.bf16.msra.mxu0 0
      %1264 = vmatprep.subr.bf16.mxu0 0
      %1265 = vmatpush1.bf16.msra.mxu0 0
      %1266 = vmatprep.subr.bf16.mxu0 0
      %1267 = vmatpush1.bf16.msra.mxu0 0
      %1268 = vmatprep.subr.bf16.mxu0 0
      %1269 = vmatpush1.bf16.msra.mxu0 0
      %1270 = vmatprep.subr.bf16.mxu0 0
      %1271 = vmatpush1.bf16.msra.mxu0 0
      %1272 = vmatprep.subr.bf16.mxu0 0
      %1273 = vmatpush1.bf16.msra.mxu0 0
      %1274 = vmatprep.subr.bf16.mxu0 0
      %1275 = vmatpush1.bf16.msra.mxu0 0
      %1276 = vmatprep.subr.bf16.mxu0 0
      %1277 = vmatpush1.bf16.msra.mxu0 0
      %1278 = vmatprep.subr.bf16.mxu0 0
      %1279 = vmatpush1.bf16.msra.mxu0 0
      %1280 = vmatprep.mubr.bf16.mxu0 0
      %1281 = vmatmul.mubr.bf16.gmra.mrb[0].mxu0 %v1222
      %v1282 = vpop.f32.mrb[0].mxu0
      %v1283 = vadd.f32 %v1159, %v1282
      %v1284 = vpop.f32.mrb[0].mxu0
      %v1285 = vpop.f32.mrb[0].mxu0
      %v1286 = vadd.f32 %v1162, %v1285
      %v1287 = vpop.f32.mrb[0].mxu0
      %1288 = vmatprep.mubr.bf16.mxu0 0
      %1289 = vmatmul.mubr.bf16.gmra.mrb[0].mxu0 %v1225
      %v1290 = vpop.f32.mrb[0].mxu0
      %v1291 = vadd.f32 %v1167, %v1290
      %v1292 = vpop.f32.mrb[0].mxu0
      %v1293 = vpop.f32.mrb[0].mxu0
      %v1294 = vadd.f32 %v1170, %v1293
      %v1295 = vpop.f32.mrb[0].mxu0
      %1296 = vmatprep.mubr.bf16.mxu0 0
      %1297 = vmatmul.mubr.bf16.gmra.mrb[0].mxu0 %v1228
      %v1298 = vpop.f32.mrb[0].mxu0
      %v1299 = vadd.f32 %v1175, %v1298
      %v1300 = vpop.f32.mrb[0].mxu0
      %v1301 = vpop.f32.mrb[0].mxu0
      %v1302 = vadd.f32 %v1178, %v1301
      %v1303 = vpop.f32.mrb[0].mxu0
      %1304 = vmatprep.mubr.bf16.mxu0 0
      %1305 = vmatmul.mubr.bf16.gmra.mrb[0].mxu0 %v1231
      %v1306 = vpop.f32.mrb[0].mxu0
      %v1307 = vadd.f32 %v1183, %v1306
      %v1308 = vpop.f32.mrb[0].mxu0
      %v1309 = vpop.f32.mrb[0].mxu0
      %v1310 = vadd.f32 %v1186, %v1309
      %v1311 = vpop.f32.mrb[0].mxu0
      %1312 = vmatprep.mubr.bf16.mxu0 0
      %1313 = vmatmul.mubr.bf16.gmra.mrb[0].mxu0 %v1234
      %v1314 = vpop.f32.mrb[0].mxu0
      %v1315 = vadd.f32 %v1191, %v1314
      %v1316 = vpop.f32.mrb[0].mxu0
      %v1317 = vpop.f32.mrb[0].mxu0
      %v1318 = vadd.f32 %v1194, %v1317
      %v1319 = vpop.f32.mrb[0].mxu0
      %1320 = vmatprep.mubr.bf16.mxu0 0
      %1321 = vmatmul.mubr.bf16.gmra.mrb[0].mxu0 %v1237
      %v1322 = vpop.f32.mrb[0].mxu0
      %v1323 = vadd.f32 %v1199, %v1322
      %v1324 = vpop.f32.mrb[0].mxu0
      %v1325 = vpop.f32.mrb[0].mxu0
      %v1326 = vadd.f32 %v1202, %v1325
      %v1327 = vpop.f32.mrb[0].mxu0
      %1328 = vmatprep.mubr.bf16.mxu0 0
      %1329 = vmatmul.mubr.bf16.gmra.mrb[0].mxu0 %v1240
      %v1330 = vpop.f32.mrb[0].mxu0
      %v1331 = vadd.f32 %v1207, %v1330
      %v1332 = vpop.f32.mrb[0].mxu0
      %v1333 = vpop.f32.mrb[0].mxu0
      %v1334 = vadd.f32 %v1210, %v1333
      %v1335 = vpop.f32.mrb[0].mxu0
      %1336 = vmatprep.mubr.bf16.mxu0 0
      %1337 = vmatmul.mubr.bf16.gmra.mrb[0].mxu0 %v1243
      %v1338 = vpop.f32.mrb[0].mxu0
      %v1339 = vadd.f32 %v1215, %v1338
      %v1340 = vpop.f32.mrb[0].mxu0
      %v1341 = vpop.f32.mrb[0].mxu0
      %v1342 = vadd.f32 %v1218, %v1341
      %v1343 = vpop.f32.mrb[0].mxu0
      %1344 = vdwg.mxu0
      %v1345 = vld [vmem:[#allocation2 + $0x9] sm:$0xff]
      %v1346 = vld [vmem:[#allocation2 + $0x11] sm:$0xff]
      %v1347 = vld [vmem:[#allocation2 + $0x19] sm:$0xff]
      %v1348 = vld [vmem:[#allocation2 + $0x21] sm:$0xff]
      %v1349 = vld [vmem:[#allocation2 + $0x29] sm:$0xff]
      %v1350 = vld [vmem:[#allocation2 + $0x31] sm:$0xff]
      %v1351 = vld [vmem:[#allocation2 + $0x39] sm:$0xff]
      %v1352 = vld [vmem:[#allocation2 + $0x41] sm:$0xff]
      %v1353 = vld [vmem:[#allocation2 + $0x49] sm:$0xff]
      %v1354 = vld [vmem:[#allocation2 + $0x51] sm:$0xff]
      %v1355 = vld [vmem:[#allocation2 + $0x59] sm:$0xff]
      %v1356 = vld [vmem:[#allocation2 + $0x61] sm:$0xff]
      %v1357 = vld [vmem:[#allocation2 + $0x69] sm:$0xff]
      %v1358 = vld [vmem:[#allocation2 + $0x71] sm:$0xff]
      %v1359 = vld [vmem:[#allocation2 + $0x79] sm:$0xff]
      %v1360 = vld [vmem:[#allocation2 + $0x81] sm:$0xff]
      %v1361 = vsel %vm981, 1, 0
      %v1362 = vsel %vm982, 1, 0
      %v1363 = vsel %vm983, 1, 0
      %v1364 = vsel %vm984, 1, 0
      %v1365 = vsel %vm985, 1, 0
      %v1366 = vsel %vm986, 1, 0
      %v1367 = vsel %vm987, 1, 0
      %v1368 = vsel %vm988, 1, 0
      %v1369 = vsel %vm989, 1, 0
      %v1370 = vsel %vm990, 1, 0
      %v1371 = vsel %vm991, 1, 0
      %v1372 = vsel %vm992, 1, 0
      %v1373 = vsel %vm993, 1, 0
      %v1374 = vsel %vm994, 1, 0
      %v1375 = vsel %vm995, 1, 0
      %v1376 = vsel %vm996, 1, 0
      %vm1377 = vcmp.eq.s32.totalorder %v1361, 1
      %vm1378 = vcmp.eq.s32.totalorder %v1362, 1
      %vm1379 = vcmp.eq.s32.totalorder %v1363, 1
      %vm1380 = vcmp.eq.s32.totalorder %v1364, 1
      %vm1381 = vcmp.eq.s32.totalorder %v1365, 1
      %vm1382 = vcmp.eq.s32.totalorder %v1366, 1
      %vm1383 = vcmp.eq.s32.totalorder %v1367, 1
      %vm1384 = vcmp.eq.s32.totalorder %v1368, 1
      %vm1385 = vcmp.eq.s32.totalorder %v1369, 1
      %vm1386 = vcmp.eq.s32.totalorder %v1370, 1
      %vm1387 = vcmp.eq.s32.totalorder %v1371, 1
      %vm1388 = vcmp.eq.s32.totalorder %v1372, 1
      %vm1389 = vcmp.eq.s32.totalorder %v1373, 1
      %vm1390 = vcmp.eq.s32.totalorder %v1374, 1
      %vm1391 = vcmp.eq.s32.totalorder %v1375, 1
      %vm1392 = vcmp.eq.s32.totalorder %v1376, 1
      %v1393 = vsel %vm1377, %v1345, 0.0
      %v1394 = vsel %vm1378, %v1346, 0.0
      %v1395 = vsel %vm1379, %v1347, 0.0
      %v1396 = vsel %vm1380, %v1348, 0.0
      %v1397 = vsel %vm1381, %v1349, 0.0
      %v1398 = vsel %vm1382, %v1350, 0.0
      %v1399 = vsel %vm1383, %v1351, 0.0
      %v1400 = vsel %vm1384, %v1352, 0.0
      %v1401 = vsel %vm1385, %v1353, 0.0
      %v1402 = vsel %vm1386, %v1354, 0.0
      %v1403 = vsel %vm1387, %v1355, 0.0
      %v1404 = vsel %vm1388, %v1356, 0.0
      %v1405 = vsel %vm1389, %v1357, 0.0
      %v1406 = vsel %vm1390, %v1358, 0.0
      %v1407 = vsel %vm1391, %v1359, 0.0
      %v1408 = vsel %vm1392, %v1360, 0.0
      %v1409 = vpack.c.bf16 %v1394, %v1393
      %v1410 = vpack.c.bf16 %v1396, %v1395
      %v1411 = vpack.c.bf16 %v1398, %v1397
      %v1412 = vpack.c.bf16 %v1400, %v1399
      %v1413 = vpack.c.bf16 %v1402, %v1401
      %v1414 = vpack.c.bf16 %v1404, %v1403
      %v1415 = vpack.c.bf16 %v1406, %v1405
      %v1416 = vpack.c.bf16 %v1408, %v1407
      %s1417 = scalar_lea.vmem %s3, 8
      %v1418 = vld [vmem:[%s1417] sm:$0xf]
      %v1420 = vsel %vm266, %v1409, 0
      %v1423 = vsel %vm266, %v1410, 0
      %v1426 = vsel %vm266, %v1411, 0
      %v1429 = vsel %vm266, %v1412, 0
      %v1432 = vsel %vm266, %v1413, 0
      %v1435 = vsel %vm266, %v1414, 0
      %v1438 = vsel %vm266, %v1415, 0
      %v1441 = vsel %vm266, %v1416, 0
      %v1444 = vsel %vm1120, %v1418, 0
      %1446 = vmatprep.subr.bf16.mxu0 0
      %1447 = vmatpush1.bf16.msra.mxu0 %v1444
      %1448 = vmatprep.subr.bf16.mxu0 0
      %1449 = vmatpush1.bf16.msra.mxu0 0
      %1450 = vmatprep.subr.bf16.mxu0 0
      %1451 = vmatpush1.bf16.msra.mxu0 0
      %1452 = vmatprep.subr.bf16.mxu0 0
      %1453 = vmatpush1.bf16.msra.mxu0 0
      %1454 = vmatprep.subr.bf16.mxu0 0
      %1455 = vmatpush1.bf16.msra.mxu0 0
      %1456 = vmatprep.subr.bf16.mxu0 0
      %1457 = vmatpush1.bf16.msra.mxu0 0
      %1458 = vmatprep.subr.bf16.mxu0 0
      %1459 = vmatpush1.bf16.msra.mxu0 0
      %1460 = vmatprep.subr.bf16.mxu0 0
      %1461 = vmatpush1.bf16.msra.mxu0 0
      %1462 = vmatprep.subr.bf16.mxu0 0
      %1463 = vmatpush1.bf16.msra.mxu0 0
      %1464 = vmatprep.subr.bf16.mxu0 0
      %1465 = vmatpush1.bf16.msra.mxu0 0
      %1466 = vmatprep.subr.bf16.mxu0 0
      %1467 = vmatpush1.bf16.msra.mxu0 0
      %1468 = vmatprep.subr.bf16.mxu0 0
      %1469 = vmatpush1.bf16.msra.mxu0 0
      %1470 = vmatprep.subr.bf16.mxu0 0
      %1471 = vmatpush1.bf16.msra.mxu0 0
      %1472 = vmatprep.subr.bf16.mxu0 0
      %1473 = vmatpush1.bf16.msra.mxu0 0
      %1474 = vmatprep.subr.bf16.mxu0 0
      %1475 = vmatpush1.bf16.msra.mxu0 0
      %1476 = vmatprep.subr.bf16.mxu0 0
      %1477 = vmatpush1.bf16.msra.mxu0 0
      %1478 = vmatprep.mubr.bf16.mxu0 0
      %1479 = vmatmul.mubr.bf16.gmra.mrb[0].mxu0 %v1420
      %v1480 = vpop.f32.mrb[0].mxu0
      %v1481 = vadd.f32 0.0, %v1480
      %v1482 = vpop.f32.mrb[0].mxu0
      %v1483 = vpop.f32.mrb[0].mxu0
      %v1484 = vadd.f32 0.0, %v1483
      %v1485 = vpop.f32.mrb[0].mxu0
      %1486 = vmatprep.mubr.bf16.mxu0 0
      %1487 = vmatmul.mubr.bf16.gmra.mrb[0].mxu0 %v1423
      %v1488 = vpop.f32.mrb[0].mxu0
      %v1489 = vadd.f32 0.0, %v1488
      %v1490 = vpop.f32.mrb[0].mxu0
      %v1491 = vpop.f32.mrb[0].mxu0
      %v1492 = vadd.f32 0.0, %v1491
      %v1493 = vpop.f32.mrb[0].mxu0
      %1494 = vmatprep.mubr.bf16.mxu0 0
      %1495 = vmatmul.mubr.bf16.gmra.mrb[0].mxu0 %v1426
      %v1496 = vpop.f32.mrb[0].mxu0
      %v1497 = vadd.f32 0.0, %v1496
      %v1498 = vpop.f32.mrb[0].mxu0
      %v1499 = vpop.f32.mrb[0].mxu0
      %v1500 = vadd.f32 0.0, %v1499
      %v1501 = vpop.f32.mrb[0].mxu0
      %1502 = vmatprep.mubr.bf16.mxu0 0
      %1503 = vmatmul.mubr.bf16.gmra.mrb[0].mxu0 %v1429
      %v1504 = vpop.f32.mrb[0].mxu0
      %v1505 = vadd.f32 0.0, %v1504
      %v1506 = vpop.f32.mrb[0].mxu0
      %v1507 = vpop.f32.mrb[0].mxu0
      %v1508 = vadd.f32 0.0, %v1507
      %v1509 = vpop.f32.mrb[0].mxu0
      %1510 = vmatprep.mubr.bf16.mxu0 0
      %1511 = vmatmul.mubr.bf16.gmra.mrb[0].mxu0 %v1432
      %v1512 = vpop.f32.mrb[0].mxu0
      %v1513 = vadd.f32 0.0, %v1512
      %v1514 = vpop.f32.mrb[0].mxu0
      %v1515 = vpop.f32.mrb[0].mxu0
      %v1516 = vadd.f32 0.0, %v1515
      %v1517 = vpop.f32.mrb[0].mxu0
      %1518 = vmatprep.mubr.bf16.mxu0 0
      %1519 = vmatmul.mubr.bf16.gmra.mrb[0].mxu0 %v1435
      %v1520 = vpop.f32.mrb[0].mxu0
      %v1521 = vadd.f32 0.0, %v1520
      %v1522 = vpop.f32.mrb[0].mxu0
      %v1523 = vpop.f32.mrb[0].mxu0
      %v1524 = vadd.f32 0.0, %v1523
      %v1525 = vpop.f32.mrb[0].mxu0
      %1526 = vmatprep.mubr.bf16.mxu0 0
      %1527 = vmatmul.mubr.bf16.gmra.mrb[0].mxu0 %v1438
      %v1528 = vpop.f32.mrb[0].mxu0
      %v1529 = vadd.f32 0.0, %v1528
      %v1530 = vpop.f32.mrb[0].mxu0
      %v1531 = vpop.f32.mrb[0].mxu0
      %v1532 = vadd.f32 0.0, %v1531
      %v1533 = vpop.f32.mrb[0].mxu0
      %1534 = vmatprep.mubr.bf16.mxu0 0
      %1535 = vmatmul.mubr.bf16.gmra.mrb[0].mxu0 %v1441
      %v1536 = vpop.f32.mrb[0].mxu0
      %v1537 = vadd.f32 0.0, %v1536
      %v1538 = vpop.f32.mrb[0].mxu0
      %v1539 = vpop.f32.mrb[0].mxu0
      %v1540 = vadd.f32 0.0, %v1539
      %v1541 = vpop.f32.mrb[0].mxu0
      %1542 = vdwg.mxu0
      %v1543 = vadd.f32 %v1283, %v1481
      %v1544 = vadd.f32 %v1286, %v1484
      %v1545 = vadd.f32 %v1291, %v1489
      %v1546 = vadd.f32 %v1294, %v1492
      %v1547 = vadd.f32 %v1299, %v1497
      %v1548 = vadd.f32 %v1302, %v1500
      %v1549 = vadd.f32 %v1307, %v1505
      %v1550 = vadd.f32 %v1310, %v1508
      %v1551 = vadd.f32 %v1315, %v1513
      %v1552 = vadd.f32 %v1318, %v1516
      %v1553 = vadd.f32 %v1323, %v1521
      %v1554 = vadd.f32 %v1326, %v1524
      %v1555 = vadd.f32 %v1331, %v1529
      %v1556 = vadd.f32 %v1334, %v1532
      %v1557 = vadd.f32 %v1339, %v1537
      %v1558 = vadd.f32 %v1342, %v1540
      %v1559 = vld [vmem:[#allocation2 + $0x17] sm:$0xff]
      %v1560 = vld [vmem:[#allocation2 + $0x1f] sm:$0xff]
      %v1561 = vld [vmem:[#allocation2 + $0x27] sm:$0xff]
      %v1562 = vld [vmem:[#allocation2 + $0x2f] sm:$0xff]
      %v1563 = vld [vmem:[#allocation2 + $0x37] sm:$0xff]
      %v1564 = vld [vmem:[#allocation2 + $0x3f] sm:$0xff]
      %v1565 = vld [vmem:[#allocation2 + $0x47] sm:$0xff]
      %v1566 = vld [vmem:[#allocation2 + $0x4f] sm:$0xff]
      %v1567 = vld [vmem:[#allocation2 + $0x57] sm:$0xff]
      %v1568 = vld [vmem:[#allocation2 + $0x5f] sm:$0xff]
      %v1569 = vld [vmem:[#allocation2 + $0x67] sm:$0xff]
      %v1570 = vld [vmem:[#allocation2 + $0x6f] sm:$0xff]
      %v1571 = vld [vmem:[#allocation2 + $0x77] sm:$0xff]
      %v1572 = vld [vmem:[#allocation2 + $0x7f] sm:$0xff]
      %v1573 = vld [vmem:[#allocation2 + $0x87] sm:$0xff]
      %v1574 = vld [vmem:[#allocation2 + $0x8f] sm:$0xff]
      %v1575 = vsel %vm1029, %v1559, 0.0
      %v1576 = vsel %vm1030, %v1560, 0.0
      %v1577 = vsel %vm1031, %v1561, 0.0
      %v1578 = vsel %vm1032, %v1562, 0.0
      %v1579 = vsel %vm1033, %v1563, 0.0
      %v1580 = vsel %vm1034, %v1564, 0.0
      %v1581 = vsel %vm1035, %v1565, 0.0
      %v1582 = vsel %vm1036, %v1566, 0.0
      %v1583 = vsel %vm1037, %v1567, 0.0
      %v1584 = vsel %vm1038, %v1568, 0.0
      %v1585 = vsel %vm1039, %v1569, 0.0
      %v1586 = vsel %vm1040, %v1570, 0.0
      %v1587 = vsel %vm1041, %v1571, 0.0
      %v1588 = vsel %vm1042, %v1572, 0.0
      %v1589 = vsel %vm1043, %v1573, 0.0
      %v1590 = vsel %vm1044, %v1574, 0.0
      %v1591 = vpack.c.bf16 %v1576, %v1575
      %v1592 = vpack.c.bf16 %v1578, %v1577
      %v1593 = vpack.c.bf16 %v1580, %v1579
      %v1594 = vpack.c.bf16 %v1582, %v1581
      %v1595 = vpack.c.bf16 %v1584, %v1583
      %v1596 = vpack.c.bf16 %v1586, %v1585
      %v1597 = vpack.c.bf16 %v1588, %v1587
      %v1598 = vpack.c.bf16 %v1590, %v1589
      %s1599 = scalar_lea.vmem %s3, 12
      %v1600 = vld [vmem:[%s1599] sm:$0xf]
      %v1602 = vsel %vm266, %v1591, 0
      %v1605 = vsel %vm266, %v1592, 0
      %v1608 = vsel %vm266, %v1593, 0
      %v1611 = vsel %vm266, %v1594, 0
      %v1614 = vsel %vm266, %v1595, 0
      %v1617 = vsel %vm266, %v1596, 0
      %v1620 = vsel %vm266, %v1597, 0
      %v1623 = vsel %vm266, %v1598, 0
      %v1626 = vsel %vm1120, %v1600, 0
      %1628 = vmatprep.subr.bf16.mxu0 0
      %1629 = vmatpush1.bf16.msra.mxu0 %v1626
      %1630 = vmatprep.subr.bf16.mxu0 0
      %1631 = vmatpush1.bf16.msra.mxu0 0
      %1632 = vmatprep.subr.bf16.mxu0 0
      %1633 = vmatpush1.bf16.msra.mxu0 0
      %1634 = vmatprep.subr.bf16.mxu0 0
      %1635 = vmatpush1.bf16.msra.mxu0 0
      %1636 = vmatprep.subr.bf16.mxu0 0
      %1637 = vmatpush1.bf16.msra.mxu0 0
      %1638 = vmatprep.subr.bf16.mxu0 0
      %1639 = vmatpush1.bf16.msra.mxu0 0
      %1640 = vmatprep.subr.bf16.mxu0 0
      %1641 = vmatpush1.bf16.msra.mxu0 0
      %1642 = vmatprep.subr.bf16.mxu0 0
      %1643 = vmatpush1.bf16.msra.mxu0 0
      %1644 = vmatprep.subr.bf16.mxu0 0
      %1645 = vmatpush1.bf16.msra.mxu0 0
      %1646 = vmatprep.subr.bf16.mxu0 0
      %1647 = vmatpush1.bf16.msra.mxu0 0
      %1648 = vmatprep.subr.bf16.mxu0 0
      %1649 = vmatpush1.bf16.msra.mxu0 0
      %1650 = vmatprep.subr.bf16.mxu0 0
      %1651 = vmatpush1.bf16.msra.mxu0 0
      %1652 = vmatprep.subr.bf16.mxu0 0
      %1653 = vmatpush1.bf16.msra.mxu0 0
      %1654 = vmatprep.subr.bf16.mxu0 0
      %1655 = vmatpush1.bf16.msra.mxu0 0
      %1656 = vmatprep.subr.bf16.mxu0 0
      %1657 = vmatpush1.bf16.msra.mxu0 0
      %1658 = vmatprep.subr.bf16.mxu0 0
      %1659 = vmatpush1.bf16.msra.mxu0 0
      %1660 = vmatprep.mubr.bf16.mxu0 0
      %1661 = vmatmul.mubr.bf16.gmra.mrb[0].mxu0 %v1602
      %v1662 = vpop.f32.mrb[0].mxu0
      %v1663 = vadd.f32 0.0, %v1662
      %v1664 = vpop.f32.mrb[0].mxu0
      %v1665 = vpop.f32.mrb[0].mxu0
      %v1666 = vadd.f32 0.0, %v1665
      %v1667 = vpop.f32.mrb[0].mxu0
      %1668 = vmatprep.mubr.bf16.mxu0 0
      %1669 = vmatmul.mubr.bf16.gmra.mrb[0].mxu0 %v1605
      %v1670 = vpop.f32.mrb[0].mxu0
      %v1671 = vadd.f32 0.0, %v1670
      %v1672 = vpop.f32.mrb[0].mxu0
      %v1673 = vpop.f32.mrb[0].mxu0
      %v1674 = vadd.f32 0.0, %v1673
      %v1675 = vpop.f32.mrb[0].mxu0
      %1676 = vmatprep.mubr.bf16.mxu0 0
      %1677 = vmatmul.mubr.bf16.gmra.mrb[0].mxu0 %v1608
      %v1678 = vpop.f32.mrb[0].mxu0
      %v1679 = vadd.f32 0.0, %v1678
      %v1680 = vpop.f32.mrb[0].mxu0
      %v1681 = vpop.f32.mrb[0].mxu0
      %v1682 = vadd.f32 0.0, %v1681
      %v1683 = vpop.f32.mrb[0].mxu0
      %1684 = vmatprep.mubr.bf16.mxu0 0
      %1685 = vmatmul.mubr.bf16.gmra.mrb[0].mxu0 %v1611
      %v1686 = vpop.f32.mrb[0].mxu0
      %v1687 = vadd.f32 0.0, %v1686
      %v1688 = vpop.f32.mrb[0].mxu0
      %v1689 = vpop.f32.mrb[0].mxu0
      %v1690 = vadd.f32 0.0, %v1689
      %v1691 = vpop.f32.mrb[0].mxu0
      %1692 = vmatprep.mubr.bf16.mxu0 0
      %1693 = vmatmul.mubr.bf16.gmra.mrb[0].mxu0 %v1614
      %v1694 = vpop.f32.mrb[0].mxu0
      %v1695 = vadd.f32 0.0, %v1694
      %v1696 = vpop.f32.mrb[0].mxu0
      %v1697 = vpop.f32.mrb[0].mxu0
      %v1698 = vadd.f32 0.0, %v1697
      %v1699 = vpop.f32.mrb[0].mxu0
      %1700 = vmatprep.mubr.bf16.mxu0 0
      %1701 = vmatmul.mubr.bf16.gmra.mrb[0].mxu0 %v1617
      %v1702 = vpop.f32.mrb[0].mxu0
      %v1703 = vadd.f32 0.0, %v1702
      %v1704 = vpop.f32.mrb[0].mxu0
      %v1705 = vpop.f32.mrb[0].mxu0
      %v1706 = vadd.f32 0.0, %v1705
      %v1707 = vpop.f32.mrb[0].mxu0
      %1708 = vmatprep.mubr.bf16.mxu0 0
      %1709 = vmatmul.mubr.bf16.gmra.mrb[0].mxu0 %v1620
      %v1710 = vpop.f32.mrb[0].mxu0
      %v1711 = vadd.f32 0.0, %v1710
      %v1712 = vpop.f32.mrb[0].mxu0
      %v1713 = vpop.f32.mrb[0].mxu0
      %v1714 = vadd.f32 0.0, %v1713
      %v1715 = vpop.f32.mrb[0].mxu0
      %1716 = vmatprep.mubr.bf16.mxu0 0
      %1717 = vmatmul.mubr.bf16.gmra.mrb[0].mxu0 %v1623
      %v1718 = vpop.f32.mrb[0].mxu0
      %v1719 = vadd.f32 0.0, %v1718
      %v1720 = vpop.f32.mrb[0].mxu0
      %v1721 = vpop.f32.mrb[0].mxu0
      %v1722 = vadd.f32 0.0, %v1721
      %v1723 = vpop.f32.mrb[0].mxu0
      %1724 = vdwg.mxu0
      %v1725 = vadd.f32 %v1543, %v1663
      %v1726 = vadd.f32 %v1544, %v1666
      %v1727 = vadd.f32 %v1545, %v1671
      %v1728 = vadd.f32 %v1546, %v1674
      %v1729 = vadd.f32 %v1547, %v1679
      %v1730 = vadd.f32 %v1548, %v1682
      %v1731 = vadd.f32 %v1549, %v1687
      %v1732 = vadd.f32 %v1550, %v1690
      %v1733 = vadd.f32 %v1551, %v1695
      %v1734 = vadd.f32 %v1552, %v1698
      %v1735 = vadd.f32 %v1553, %v1703
      %v1736 = vadd.f32 %v1554, %v1706
      %v1737 = vadd.f32 %v1555, %v1711
      %v1738 = vadd.f32 %v1556, %v1714
      %v1739 = vadd.f32 %v1557, %v1719
      %v1740 = vadd.f32 %v1558, %v1722
      %v1741 = vld [vmem:[#allocation2 + $0x18] sm:$0xff]
      %v1742 = vld [vmem:[#allocation2 + $0x20] sm:$0xff]
      %v1743 = vld [vmem:[#allocation2 + $0x28] sm:$0xff]
      %v1744 = vld [vmem:[#allocation2 + $0x30] sm:$0xff]
      %v1745 = vld [vmem:[#allocation2 + $0x38] sm:$0xff]
      %v1746 = vld [vmem:[#allocation2 + $0x40] sm:$0xff]
      %v1747 = vld [vmem:[#allocation2 + $0x48] sm:$0xff]
      %v1748 = vld [vmem:[#allocation2 + $0x50] sm:$0xff]
      %v1749 = vld [vmem:[#allocation2 + $0x58] sm:$0xff]
      %v1750 = vld [vmem:[#allocation2 + $0x60] sm:$0xff]
      %v1751 = vld [vmem:[#allocation2 + $0x68] sm:$0xff]
      %v1752 = vld [vmem:[#allocation2 + $0x70] sm:$0xff]
      %v1753 = vld [vmem:[#allocation2 + $0x78] sm:$0xff]
      %v1754 = vld [vmem:[#allocation2 + $0x80] sm:$0xff]
      %v1755 = vld [vmem:[#allocation2 + $0x88] sm:$0xff]
      %v1756 = vld [vmem:[#allocation2 + $0x90] sm:$0xff]
      %v1757 = vpack.c.bf16 %v1742, %v1741
      %v1758 = vpack.c.bf16 %v1744, %v1743
      %v1759 = vpack.c.bf16 %v1746, %v1745
      %v1760 = vpack.c.bf16 %v1748, %v1747
      %v1761 = vpack.c.bf16 %v1750, %v1749
      %v1762 = vpack.c.bf16 %v1752, %v1751
      %v1763 = vpack.c.bf16 %v1754, %v1753
      %v1764 = vpack.c.bf16 %v1756, %v1755
      %s1765 = scalar_lea.vmem %s3, 16
      %v1766 = vld [vmem:[%s1765] sm:$0xf]
      %v1768 = vsel %vm266, %v1757, 0
      %v1771 = vsel %vm266, %v1758, 0
      %v1774 = vsel %vm266, %v1759, 0
      %v1777 = vsel %vm266, %v1760, 0
      %v1780 = vsel %vm266, %v1761, 0
      %v1783 = vsel %vm266, %v1762, 0
      %v1786 = vsel %vm266, %v1763, 0
      %v1789 = vsel %vm266, %v1764, 0
      %v1792 = vsel %vm1120, %v1766, 0
      %1794 = vmatprep.subr.bf16.mxu0 0
      %1795 = vmatpush1.bf16.msra.mxu0 %v1792
      %1796 = vmatprep.subr.bf16.mxu0 0
      %1797 = vmatpush1.bf16.msra.mxu0 0
      %1798 = vmatprep.subr.bf16.mxu0 0
      %1799 = vmatpush1.bf16.msra.mxu0 0
      %1800 = vmatprep.subr.bf16.mxu0 0
      %1801 = vmatpush1.bf16.msra.mxu0 0
      %1802 = vmatprep.subr.bf16.mxu0 0
      %1803 = vmatpush1.bf16.msra.mxu0 0
      %1804 = vmatprep.subr.bf16.mxu0 0
      %1805 = vmatpush1.bf16.msra.mxu0 0
      %1806 = vmatprep.subr.bf16.mxu0 0
      %1807 = vmatpush1.bf16.msra.mxu0 0
      %1808 = vmatprep.subr.bf16.mxu0 0
      %1809 = vmatpush1.bf16.msra.mxu0 0
      %1810 = vmatprep.subr.bf16.mxu0 0
      %1811 = vmatpush1.bf16.msra.mxu0 0
      %1812 = vmatprep.subr.bf16.mxu0 0
      %1813 = vmatpush1.bf16.msra.mxu0 0
      %1814 = vmatprep.subr.bf16.mxu0 0
      %1815 = vmatpush1.bf16.msra.mxu0 0
      %1816 = vmatprep.subr.bf16.mxu0 0
      %1817 = vmatpush1.bf16.msra.mxu0 0
      %1818 = vmatprep.subr.bf16.mxu0 0
      %1819 = vmatpush1.bf16.msra.mxu0 0
      %1820 = vmatprep.subr.bf16.mxu0 0
      %1821 = vmatpush1.bf16.msra.mxu0 0
      %1822 = vmatprep.subr.bf16.mxu0 0
      %1823 = vmatpush1.bf16.msra.mxu0 0
      %1824 = vmatprep.subr.bf16.mxu0 0
      %1825 = vmatpush1.bf16.msra.mxu0 0
      %1826 = vmatprep.mubr.bf16.mxu0 0
      %1827 = vmatmul.mubr.bf16.gmra.mrb[0].mxu0 %v1768
      %v1828 = vpop.f32.mrb[0].mxu0
      %v1829 = vadd.f32 0.0, %v1828
      %v1830 = vpop.f32.mrb[0].mxu0
      %v1831 = vpop.f32.mrb[0].mxu0
      %v1832 = vadd.f32 0.0, %v1831
      %v1833 = vpop.f32.mrb[0].mxu0
      %1834 = vmatprep.mubr.bf16.mxu0 0
      %1835 = vmatmul.mubr.bf16.gmra.mrb[0].mxu0 %v1771
      %v1836 = vpop.f32.mrb[0].mxu0
      %v1837 = vadd.f32 0.0, %v1836
      %v1838 = vpop.f32.mrb[0].mxu0
      %v1839 = vpop.f32.mrb[0].mxu0
      %v1840 = vadd.f32 0.0, %v1839
      %v1841 = vpop.f32.mrb[0].mxu0
      %1842 = vmatprep.mubr.bf16.mxu0 0
      %1843 = vmatmul.mubr.bf16.gmra.mrb[0].mxu0 %v1774
      %v1844 = vpop.f32.mrb[0].mxu0
      %v1845 = vadd.f32 0.0, %v1844
      %v1846 = vpop.f32.mrb[0].mxu0
      %v1847 = vpop.f32.mrb[0].mxu0
      %v1848 = vadd.f32 0.0, %v1847
      %v1849 = vpop.f32.mrb[0].mxu0
      %1850 = vmatprep.mubr.bf16.mxu0 0
      %1851 = vmatmul.mubr.bf16.gmra.mrb[0].mxu0 %v1777
      %v1852 = vpop.f32.mrb[0].mxu0
      %v1853 = vadd.f32 0.0, %v1852
      %v1854 = vpop.f32.mrb[0].mxu0
      %v1855 = vpop.f32.mrb[0].mxu0
      %v1856 = vadd.f32 0.0, %v1855
      %v1857 = vpop.f32.mrb[0].mxu0
      %1858 = vmatprep.mubr.bf16.mxu0 0
      %1859 = vmatmul.mubr.bf16.gmra.mrb[0].mxu0 %v1780
      %v1860 = vpop.f32.mrb[0].mxu0
      %v1861 = vadd.f32 0.0, %v1860
      %v1862 = vpop.f32.mrb[0].mxu0
      %v1863 = vpop.f32.mrb[0].mxu0
      %v1864 = vadd.f32 0.0, %v1863
      %v1865 = vpop.f32.mrb[0].mxu0
      %1866 = vmatprep.mubr.bf16.mxu0 0
      %1867 = vmatmul.mubr.bf16.gmra.mrb[0].mxu0 %v1783
      %v1868 = vpop.f32.mrb[0].mxu0
      %v1869 = vadd.f32 0.0, %v1868
      %v1870 = vpop.f32.mrb[0].mxu0
      %v1871 = vpop.f32.mrb[0].mxu0
      %v1872 = vadd.f32 0.0, %v1871
      %v1873 = vpop.f32.mrb[0].mxu0
      %1874 = vmatprep.mubr.bf16.mxu0 0
      %1875 = vmatmul.mubr.bf16.gmra.mrb[0].mxu0 %v1786
      %v1876 = vpop.f32.mrb[0].mxu0
      %v1877 = vadd.f32 0.0, %v1876
      %v1878 = vpop.f32.mrb[0].mxu0
      %v1879 = vpop.f32.mrb[0].mxu0
      %v1880 = vadd.f32 0.0, %v1879
      %v1881 = vpop.f32.mrb[0].mxu0
      %1882 = vmatprep.mubr.bf16.mxu0 0
      %1883 = vmatmul.mubr.bf16.gmra.mrb[0].mxu0 %v1789
      %v1884 = vpop.f32.mrb[0].mxu0
      %v1885 = vadd.f32 0.0, %v1884
      %v1886 = vpop.f32.mrb[0].mxu0
      %v1887 = vpop.f32.mrb[0].mxu0
      %v1888 = vadd.f32 0.0, %v1887
      %v1889 = vpop.f32.mrb[0].mxu0
      %1890 = vdwg.mxu0
      %v1891 = vadd.f32 %v1725, %v1829
      %v1892 = vadd.f32 %v1726, %v1832
      %v1893 = vadd.f32 %v1727, %v1837
      %v1894 = vadd.f32 %v1728, %v1840
      %v1895 = vadd.f32 %v1729, %v1845
      %v1896 = vadd.f32 %v1730, %v1848
      %v1897 = vadd.f32 %v1731, %v1853
      %v1898 = vadd.f32 %v1732, %v1856
      %v1899 = vadd.f32 %v1733, %v1861
      %v1900 = vadd.f32 %v1734, %v1864
      %v1901 = vadd.f32 %v1735, %v1869
      %v1902 = vadd.f32 %v1736, %v1872
      %v1903 = vadd.f32 %v1737, %v1877
      %v1904 = vadd.f32 %v1738, %v1880
      %v1905 = vadd.f32 %v1739, %v1885
      %v1906 = vadd.f32 %v1740, %v1888
      %v1907 = vld [vmem:[#allocation2 + $0x19] sm:$0xff]
      %v1908 = vld [vmem:[#allocation2 + $0x21] sm:$0xff]
      %v1909 = vld [vmem:[#allocation2 + $0x29] sm:$0xff]
      %v1910 = vld [vmem:[#allocation2 + $0x31] sm:$0xff]
      %v1911 = vld [vmem:[#allocation2 + $0x39] sm:$0xff]
      %v1912 = vld [vmem:[#allocation2 + $0x41] sm:$0xff]
      %v1913 = vld [vmem:[#allocation2 + $0x49] sm:$0xff]
      %v1914 = vld [vmem:[#allocation2 + $0x51] sm:$0xff]
      %v1915 = vld [vmem:[#allocation2 + $0x59] sm:$0xff]
      %v1916 = vld [vmem:[#allocation2 + $0x61] sm:$0xff]
      %v1917 = vld [vmem:[#allocation2 + $0x69] sm:$0xff]
      %v1918 = vld [vmem:[#allocation2 + $0x71] sm:$0xff]
      %v1919 = vld [vmem:[#allocation2 + $0x79] sm:$0xff]
      %v1920 = vld [vmem:[#allocation2 + $0x81] sm:$0xff]
      %v1921 = vld [vmem:[#allocation2 + $0x89] sm:$0xff]
      %v1922 = vld [vmem:[#allocation2 + $0x91] sm:$0xff]
      %v1923 = vsel %vm1377, %v1907, 0.0
      %v1924 = vsel %vm1378, %v1908, 0.0
      %v1925 = vsel %vm1379, %v1909, 0.0
      %v1926 = vsel %vm1380, %v1910, 0.0
      %v1927 = vsel %vm1381, %v1911, 0.0
      %v1928 = vsel %vm1382, %v1912, 0.0
      %v1929 = vsel %vm1383, %v1913, 0.0
      %v1930 = vsel %vm1384, %v1914, 0.0
      %v1931 = vsel %vm1385, %v1915, 0.0
      %v1932 = vsel %vm1386, %v1916, 0.0
      %v1933 = vsel %vm1387, %v1917, 0.0
      %v1934 = vsel %vm1388, %v1918, 0.0
      %v1935 = vsel %vm1389, %v1919, 0.0
      %v1936 = vsel %vm1390, %v1920, 0.0
      %v1937 = vsel %vm1391, %v1921, 0.0
      %v1938 = vsel %vm1392, %v1922, 0.0
      %v1939 = vpack.c.bf16 %v1924, %v1923
      %v1940 = vpack.c.bf16 %v1926, %v1925
      %v1941 = vpack.c.bf16 %v1928, %v1927
      %v1942 = vpack.c.bf16 %v1930, %v1929
      %v1943 = vpack.c.bf16 %v1932, %v1931
      %v1944 = vpack.c.bf16 %v1934, %v1933
      %v1945 = vpack.c.bf16 %v1936, %v1935
      %v1946 = vpack.c.bf16 %v1938, %v1937
      %s1947 = scalar_lea.vmem %s3, 20
      %v1948 = vld [vmem:[%s1947] sm:$0xf]
      %v1950 = vsel %vm266, %v1939, 0
      %v1953 = vsel %vm266, %v1940, 0
      %v1956 = vsel %vm266, %v1941, 0
      %v1959 = vsel %vm266, %v1942, 0
      %v1962 = vsel %vm266, %v1943, 0
      %v1965 = vsel %vm266, %v1944, 0
      %v1968 = vsel %vm266, %v1945, 0
      %v1971 = vsel %vm266, %v1946, 0
      %v1974 = vsel %vm1120, %v1948, 0
      %1976 = vmatprep.subr.bf16.mxu0 0
      %1977 = vmatpush1.bf16.msra.mxu0 %v1974
      %1978 = vmatprep.subr.bf16.mxu0 0
      %1979 = vmatpush1.bf16.msra.mxu0 0
      %1980 = vmatprep.subr.bf16.mxu0 0
      %1981 = vmatpush1.bf16.msra.mxu0 0
      %1982 = vmatprep.subr.bf16.mxu0 0
      %1983 = vmatpush1.bf16.msra.mxu0 0
      %1984 = vmatprep.subr.bf16.mxu0 0
      %1985 = vmatpush1.bf16.msra.mxu0 0
      %1986 = vmatprep.subr.bf16.mxu0 0
      %1987 = vmatpush1.bf16.msra.mxu0 0
      %1988 = vmatprep.subr.bf16.mxu0 0
      %1989 = vmatpush1.bf16.msra.mxu0 0
      %1990 = vmatprep.subr.bf16.mxu0 0
      %1991 = vmatpush1.bf16.msra.mxu0 0
      %1992 = vmatprep.subr.bf16.mxu0 0
      %1993 = vmatpush1.bf16.msra.mxu0 0
      %1994 = vmatprep.subr.bf16.mxu0 0
      %1995 = vmatpush1.bf16.msra.mxu0 0
      %1996 = vmatprep.subr.bf16.mxu0 0
      %1997 = vmatpush1.bf16.msra.mxu0 0
      %1998 = vmatprep.subr.bf16.mxu0 0
      %1999 = vmatpush1.bf16.msra.mxu0 0
      %2000 = vmatprep.subr.bf16.mxu0 0
      %2001 = vmatpush1.bf16.msra.mxu0 0
      %2002 = vmatprep.subr.bf16.mxu0 0
      %2003 = vmatpush1.bf16.msra.mxu0 0
      %2004 = vmatprep.subr.bf16.mxu0 0
      %2005 = vmatpush1.bf16.msra.mxu0 0
      %2006 = vmatprep.subr.bf16.mxu0 0
      %2007 = vmatpush1.bf16.msra.mxu0 0
      %2008 = vmatprep.mubr.bf16.mxu0 0
      %2009 = vmatmul.mubr.bf16.gmra.mrb[0].mxu0 %v1950
      %v2010 = vpop.f32.mrb[0].mxu0
      %v2011 = vadd.f32 0.0, %v2010
      %v2012 = vpop.f32.mrb[0].mxu0
      %v2013 = vpop.f32.mrb[0].mxu0
      %v2014 = vadd.f32 0.0, %v2013
      %v2015 = vpop.f32.mrb[0].mxu0
      %2016 = vmatprep.mubr.bf16.mxu0 0
      %2017 = vmatmul.mubr.bf16.gmra.mrb[0].mxu0 %v1953
      %v2018 = vpop.f32.mrb[0].mxu0
      %v2019 = vadd.f32 0.0, %v2018
      %v2020 = vpop.f32.mrb[0].mxu0
      %v2021 = vpop.f32.mrb[0].mxu0
      %v2022 = vadd.f32 0.0, %v2021
      %v2023 = vpop.f32.mrb[0].mxu0
      %2024 = vmatprep.mubr.bf16.mxu0 0
      %2025 = vmatmul.mubr.bf16.gmra.mrb[0].mxu0 %v1956
      %v2026 = vpop.f32.mrb[0].mxu0
      %v2027 = vadd.f32 0.0, %v2026
      %v2028 = vpop.f32.mrb[0].mxu0
      %v2029 = vpop.f32.mrb[0].mxu0
      %v2030 = vadd.f32 0.0, %v2029
      %v2031 = vpop.f32.mrb[0].mxu0
      %2032 = vmatprep.mubr.bf16.mxu0 0
      %2033 = vmatmul.mubr.bf16.gmra.mrb[0].mxu0 %v1959
      %v2034 = vpop.f32.mrb[0].mxu0
      %v2035 = vadd.f32 0.0, %v2034
      %v2036 = vpop.f32.mrb[0].mxu0
      %v2037 = vpop.f32.mrb[0].mxu0
      %v2038 = vadd.f32 0.0, %v2037
      %v2039 = vpop.f32.mrb[0].mxu0
      %2040 = vmatprep.mubr.bf16.mxu0 0
      %2041 = vmatmul.mubr.bf16.gmra.mrb[0].mxu0 %v1962
      %v2042 = vpop.f32.mrb[0].mxu0
      %v2043 = vadd.f32 0.0, %v2042
      %v2044 = vpop.f32.mrb[0].mxu0
      %v2045 = vpop.f32.mrb[0].mxu0
      %v2046 = vadd.f32 0.0, %v2045
      %v2047 = vpop.f32.mrb[0].mxu0
      %2048 = vmatprep.mubr.bf16.mxu0 0
      %2049 = vmatmul.mubr.bf16.gmra.mrb[0].mxu0 %v1965
      %v2050 = vpop.f32.mrb[0].mxu0
      %v2051 = vadd.f32 0.0, %v2050
      %v2052 = vpop.f32.mrb[0].mxu0
      %v2053 = vpop.f32.mrb[0].mxu0
      %v2054 = vadd.f32 0.0, %v2053
      %v2055 = vpop.f32.mrb[0].mxu0
      %2056 = vmatprep.mubr.bf16.mxu0 0
      %2057 = vmatmul.mubr.bf16.gmra.mrb[0].mxu0 %v1968
      %v2058 = vpop.f32.mrb[0].mxu0
      %v2059 = vadd.f32 0.0, %v2058
      %v2060 = vpop.f32.mrb[0].mxu0
      %v2061 = vpop.f32.mrb[0].mxu0
      %v2062 = vadd.f32 0.0, %v2061
      %v2063 = vpop.f32.mrb[0].mxu0
      %2064 = vmatprep.mubr.bf16.mxu0 0
      %2065 = vmatmul.mubr.bf16.gmra.mrb[0].mxu0 %v1971
      %v2066 = vpop.f32.mrb[0].mxu0
      %v2067 = vadd.f32 0.0, %v2066
      %v2068 = vpop.f32.mrb[0].mxu0
      %v2069 = vpop.f32.mrb[0].mxu0
      %v2070 = vadd.f32 0.0, %v2069
      %v2071 = vpop.f32.mrb[0].mxu0
      %2072 = vdwg.mxu0
      %v2073 = vadd.f32 %v1891, %v2011
      %v2074 = vadd.f32 %v1892, %v2014
      %v2075 = vadd.f32 %v1893, %v2019
      %v2076 = vadd.f32 %v1894, %v2022
      %v2077 = vadd.f32 %v1895, %v2027
      %v2078 = vadd.f32 %v1896, %v2030
      %v2079 = vadd.f32 %v1897, %v2035
      %v2080 = vadd.f32 %v1898, %v2038
      %v2081 = vadd.f32 %v1899, %v2043
      %v2082 = vadd.f32 %v1900, %v2046
      %v2083 = vadd.f32 %v1901, %v2051
      %v2084 = vadd.f32 %v1902, %v2054
      %v2085 = vadd.f32 %v1903, %v2059
      %v2086 = vadd.f32 %v1904, %v2062
      %v2087 = vadd.f32 %v1905, %v2067
      %v2088 = vadd.f32 %v1906, %v2070
      %v2089 = vld [vmem:[#allocation2 + $0x27] sm:$0xff]
      %v2090 = vld [vmem:[#allocation2 + $0x2f] sm:$0xff]
      %v2091 = vld [vmem:[#allocation2 + $0x37] sm:$0xff]
      %v2092 = vld [vmem:[#allocation2 + $0x3f] sm:$0xff]
      %v2093 = vld [vmem:[#allocation2 + $0x47] sm:$0xff]
      %v2094 = vld [vmem:[#allocation2 + $0x4f] sm:$0xff]
      %v2095 = vld [vmem:[#allocation2 + $0x57] sm:$0xff]
      %v2096 = vld [vmem:[#allocation2 + $0x5f] sm:$0xff]
      %v2097 = vld [vmem:[#allocation2 + $0x67] sm:$0xff]
      %v2098 = vld [vmem:[#allocation2 + $0x6f] sm:$0xff]
      %v2099 = vld [vmem:[#allocation2 + $0x77] sm:$0xff]
      %v2100 = vld [vmem:[#allocation2 + $0x7f] sm:$0xff]
      %v2101 = vld [vmem:[#allocation2 + $0x87] sm:$0xff]
      %v2102 = vld [vmem:[#allocation2 + $0x8f] sm:$0xff]
      %v2103 = vld [vmem:[#allocation2 + $0x97] sm:$0xff]
      %v2104 = vld [vmem:[#allocation2 + $0x9f] sm:$0xff]
      %v2105 = vsel %vm1029, %v2089, 0.0
      %v2106 = vsel %vm1030, %v2090, 0.0
      %v2107 = vsel %vm1031, %v2091, 0.0
      %v2108 = vsel %vm1032, %v2092, 0.0
      %v2109 = vsel %vm1033, %v2093, 0.0
      %v2110 = vsel %vm1034, %v2094, 0.0
      %v2111 = vsel %vm1035, %v2095, 0.0
      %v2112 = vsel %vm1036, %v2096, 0.0
      %v2113 = vsel %vm1037, %v2097, 0.0
      %v2114 = vsel %vm1038, %v2098, 0.0
      %v2115 = vsel %vm1039, %v2099, 0.0
      %v2116 = vsel %vm1040, %v2100, 0.0
      %v2117 = vsel %vm1041, %v2101, 0.0
      %v2118 = vsel %vm1042, %v2102, 0.0
      %v2119 = vsel %vm1043, %v2103, 0.0
      %v2120 = vsel %vm1044, %v2104, 0.0
      %v2121 = vpack.c.bf16 %v2106, %v2105
      %v2122 = vpack.c.bf16 %v2108, %v2107
      %v2123 = vpack.c.bf16 %v2110, %v2109
      %v2124 = vpack.c.bf16 %v2112, %v2111
      %v2125 = vpack.c.bf16 %v2114, %v2113
      %v2126 = vpack.c.bf16 %v2116, %v2115
      %v2127 = vpack.c.bf16 %v2118, %v2117
      %v2128 = vpack.c.bf16 %v2120, %v2119
      %s2129 = scalar_lea.vmem %s3, 24
      %v2130 = vld [vmem:[%s2129] sm:$0xf]
      %v2132 = vsel %vm266, %v2121, 0
      %v2135 = vsel %vm266, %v2122, 0
      %v2138 = vsel %vm266, %v2123, 0
      %v2141 = vsel %vm266, %v2124, 0
      %v2144 = vsel %vm266, %v2125, 0
      %v2147 = vsel %vm266, %v2126, 0
      %v2150 = vsel %vm266, %v2127, 0
      %v2153 = vsel %vm266, %v2128, 0
      %v2156 = vsel %vm1120, %v2130, 0
      %2158 = vmatprep.subr.bf16.mxu0 0
      %2159 = vmatpush1.bf16.msra.mxu0 %v2156
      %2160 = vmatprep.subr.bf16.mxu0 0
      %2161 = vmatpush1.bf16.msra.mxu0 0
      %2162 = vmatprep.subr.bf16.mxu0 0
      %2163 = vmatpush1.bf16.msra.mxu0 0
      %2164 = vmatprep.subr.bf16.mxu0 0
      %2165 = vmatpush1.bf16.msra.mxu0 0
      %2166 = vmatprep.subr.bf16.mxu0 0
      %2167 = vmatpush1.bf16.msra.mxu0 0
      %2168 = vmatprep.subr.bf16.mxu0 0
      %2169 = vmatpush1.bf16.msra.mxu0 0
      %2170 = vmatprep.subr.bf16.mxu0 0
      %2171 = vmatpush1.bf16.msra.mxu0 0
      %2172 = vmatprep.subr.bf16.mxu0 0
      %2173 = vmatpush1.bf16.msra.mxu0 0
      %2174 = vmatprep.subr.bf16.mxu0 0
      %2175 = vmatpush1.bf16.msra.mxu0 0
      %2176 = vmatprep.subr.bf16.mxu0 0
      %2177 = vmatpush1.bf16.msra.mxu0 0
      %2178 = vmatprep.subr.bf16.mxu0 0
      %2179 = vmatpush1.bf16.msra.mxu0 0
      %2180 = vmatprep.subr.bf16.mxu0 0
      %2181 = vmatpush1.bf16.msra.mxu0 0
      %2182 = vmatprep.subr.bf16.mxu0 0
      %2183 = vmatpush1.bf16.msra.mxu0 0
      %2184 = vmatprep.subr.bf16.mxu0 0
      %2185 = vmatpush1.bf16.msra.mxu0 0
      %2186 = vmatprep.subr.bf16.mxu0 0
      %2187 = vmatpush1.bf16.msra.mxu0 0
      %2188 = vmatprep.subr.bf16.mxu0 0
      %2189 = vmatpush1.bf16.msra.mxu0 0
      %2190 = vmatprep.mubr.bf16.mxu0 0
      %2191 = vmatmul.mubr.bf16.gmra.mrb[0].mxu0 %v2132
      %v2192 = vpop.f32.mrb[0].mxu0
      %v2193 = vadd.f32 0.0, %v2192
      %v2194 = vpop.f32.mrb[0].mxu0
      %v2195 = vpop.f32.mrb[0].mxu0
      %v2196 = vadd.f32 0.0, %v2195
      %v2197 = vpop.f32.mrb[0].mxu0
      %2198 = vmatprep.mubr.bf16.mxu0 0
      %2199 = vmatmul.mubr.bf16.gmra.mrb[0].mxu0 %v2135
      %v2200 = vpop.f32.mrb[0].mxu0
      %v2201 = vadd.f32 0.0, %v2200
      %v2202 = vpop.f32.mrb[0].mxu0
      %v2203 = vpop.f32.mrb[0].mxu0
      %v2204 = vadd.f32 0.0, %v2203
      %v2205 = vpop.f32.mrb[0].mxu0
      %2206 = vmatprep.mubr.bf16.mxu0 0
      %2207 = vmatmul.mubr.bf16.gmra.mrb[0].mxu0 %v2138
      %v2208 = vpop.f32.mrb[0].mxu0
      %v2209 = vadd.f32 0.0, %v2208
      %v2210 = vpop.f32.mrb[0].mxu0
      %v2211 = vpop.f32.mrb[0].mxu0
      %v2212 = vadd.f32 0.0, %v2211
      %v2213 = vpop.f32.mrb[0].mxu0
      %2214 = vmatprep.mubr.bf16.mxu0 0
      %2215 = vmatmul.mubr.bf16.gmra.mrb[0].mxu0 %v2141
      %v2216 = vpop.f32.mrb[0].mxu0
      %v2217 = vadd.f32 0.0, %v2216
      %v2218 = vpop.f32.mrb[0].mxu0
      %v2219 = vpop.f32.mrb[0].mxu0
      %v2220 = vadd.f32 0.0, %v2219
      %v2221 = vpop.f32.mrb[0].mxu0
      %2222 = vmatprep.mubr.bf16.mxu0 0
      %2223 = vmatmul.mubr.bf16.gmra.mrb[0].mxu0 %v2144
      %v2224 = vpop.f32.mrb[0].mxu0
      %v2225 = vadd.f32 0.0, %v2224
      %v2226 = vpop.f32.mrb[0].mxu0
      %v2227 = vpop.f32.mrb[0].mxu0
      %v2228 = vadd.f32 0.0, %v2227
      %v2229 = vpop.f32.mrb[0].mxu0
      %2230 = vmatprep.mubr.bf16.mxu0 0
      %2231 = vmatmul.mubr.bf16.gmra.mrb[0].mxu0 %v2147
      %v2232 = vpop.f32.mrb[0].mxu0
      %v2233 = vadd.f32 0.0, %v2232
      %v2234 = vpop.f32.mrb[0].mxu0
      %v2235 = vpop.f32.mrb[0].mxu0
      %v2236 = vadd.f32 0.0, %v2235
      %v2237 = vpop.f32.mrb[0].mxu0
      %2238 = vmatprep.mubr.bf16.mxu0 0
      %2239 = vmatmul.mubr.bf16.gmra.mrb[0].mxu0 %v2150
      %v2240 = vpop.f32.mrb[0].mxu0
      %v2241 = vadd.f32 0.0, %v2240
      %v2242 = vpop.f32.mrb[0].mxu0
      %v2243 = vpop.f32.mrb[0].mxu0
      %v2244 = vadd.f32 0.0, %v2243
      %v2245 = vpop.f32.mrb[0].mxu0
      %2246 = vmatprep.mubr.bf16.mxu0 0
      %2247 = vmatmul.mubr.bf16.gmra.mrb[0].mxu0 %v2153
      %v2248 = vpop.f32.mrb[0].mxu0
      %v2249 = vadd.f32 0.0, %v2248
      %v2250 = vpop.f32.mrb[0].mxu0
      %v2251 = vpop.f32.mrb[0].mxu0
      %v2252 = vadd.f32 0.0, %v2251
      %v2253 = vpop.f32.mrb[0].mxu0
      %2254 = vdwg.mxu0
      %v2255 = vadd.f32 %v2073, %v2193
      %v2256 = vadd.f32 %v2074, %v2196
      %v2257 = vadd.f32 %v2075, %v2201
      %v2258 = vadd.f32 %v2076, %v2204
      %v2259 = vadd.f32 %v2077, %v2209
      %v2260 = vadd.f32 %v2078, %v2212
      %v2261 = vadd.f32 %v2079, %v2217
      %v2262 = vadd.f32 %v2080, %v2220
      %v2263 = vadd.f32 %v2081, %v2225
      %v2264 = vadd.f32 %v2082, %v2228
      %v2265 = vadd.f32 %v2083, %v2233
      %v2266 = vadd.f32 %v2084, %v2236
      %v2267 = vadd.f32 %v2085, %v2241
      %v2268 = vadd.f32 %v2086, %v2244
      %v2269 = vadd.f32 %v2087, %v2249
      %v2270 = vadd.f32 %v2088, %v2252
      %v2271 = vld [vmem:[#allocation2 + $0x28] sm:$0xff]
      %v2272 = vld [vmem:[#allocation2 + $0x30] sm:$0xff]
      %v2273 = vld [vmem:[#allocation2 + $0x38] sm:$0xff]
      %v2274 = vld [vmem:[#allocation2 + $0x40] sm:$0xff]
      %v2275 = vld [vmem:[#allocation2 + $0x48] sm:$0xff]
      %v2276 = vld [vmem:[#allocation2 + $0x50] sm:$0xff]
      %v2277 = vld [vmem:[#allocation2 + $0x58] sm:$0xff]
      %v2278 = vld [vmem:[#allocation2 + $0x60] sm:$0xff]
      %v2279 = vld [vmem:[#allocation2 + $0x68] sm:$0xff]
      %v2280 = vld [vmem:[#allocation2 + $0x70] sm:$0xff]
      %v2281 = vld [vmem:[#allocation2 + $0x78] sm:$0xff]
      %v2282 = vld [vmem:[#allocation2 + $0x80] sm:$0xff]
      %v2283 = vld [vmem:[#allocation2 + $0x88] sm:$0xff]
      %v2284 = vld [vmem:[#allocation2 + $0x90] sm:$0xff]
      %v2285 = vld [vmem:[#allocation2 + $0x98] sm:$0xff]
      %v2286 = vld [vmem:[#allocation2 + $0xa0] sm:$0xff]
      %v2287 = vpack.c.bf16 %v2272, %v2271
      %v2288 = vpack.c.bf16 %v2274, %v2273
      %v2289 = vpack.c.bf16 %v2276, %v2275
      %v2290 = vpack.c.bf16 %v2278, %v2277
      %v2291 = vpack.c.bf16 %v2280, %v2279
      %v2292 = vpack.c.bf16 %v2282, %v2281
      %v2293 = vpack.c.bf16 %v2284, %v2283
      %v2294 = vpack.c.bf16 %v2286, %v2285
      %s2295 = scalar_lea.vmem %s3, 28
      %v2296 = vld [vmem:[%s2295] sm:$0xf]
      %v2298 = vsel %vm266, %v2287, 0
      %v2301 = vsel %vm266, %v2288, 0
      %v2304 = vsel %vm266, %v2289, 0
      %v2307 = vsel %vm266, %v2290, 0
      %v2310 = vsel %vm266, %v2291, 0
      %v2313 = vsel %vm266, %v2292, 0
      %v2316 = vsel %vm266, %v2293, 0
      %v2319 = vsel %vm266, %v2294, 0
      %v2322 = vsel %vm1120, %v2296, 0
      %2324 = vmatprep.subr.bf16.mxu0 0
      %2325 = vmatpush1.bf16.msra.mxu0 %v2322
      %2326 = vmatprep.subr.bf16.mxu0 0
      %2327 = vmatpush1.bf16.msra.mxu0 0
      %2328 = vmatprep.subr.bf16.mxu0 0
      %2329 = vmatpush1.bf16.msra.mxu0 0
      %2330 = vmatprep.subr.bf16.mxu0 0
      %2331 = vmatpush1.bf16.msra.mxu0 0
      %2332 = vmatprep.subr.bf16.mxu0 0
      %2333 = vmatpush1.bf16.msra.mxu0 0
      %2334 = vmatprep.subr.bf16.mxu0 0
      %2335 = vmatpush1.bf16.msra.mxu0 0
      %2336 = vmatprep.subr.bf16.mxu0 0
      %2337 = vmatpush1.bf16.msra.mxu0 0
      %2338 = vmatprep.subr.bf16.mxu0 0
      %2339 = vmatpush1.bf16.msra.mxu0 0
      %2340 = vmatprep.subr.bf16.mxu0 0
      %2341 = vmatpush1.bf16.msra.mxu0 0
      %2342 = vmatprep.subr.bf16.mxu0 0
      %2343 = vmatpush1.bf16.msra.mxu0 0
      %2344 = vmatprep.subr.bf16.mxu0 0
      %2345 = vmatpush1.bf16.msra.mxu0 0
      %2346 = vmatprep.subr.bf16.mxu0 0
      %2347 = vmatpush1.bf16.msra.mxu0 0
      %2348 = vmatprep.subr.bf16.mxu0 0
      %2349 = vmatpush1.bf16.msra.mxu0 0
      %2350 = vmatprep.subr.bf16.mxu0 0
      %2351 = vmatpush1.bf16.msra.mxu0 0
      %2352 = vmatprep.subr.bf16.mxu0 0
      %2353 = vmatpush1.bf16.msra.mxu0 0
      %2354 = vmatprep.subr.bf16.mxu0 0
      %2355 = vmatpush1.bf16.msra.mxu0 0
      %2356 = vmatprep.mubr.bf16.mxu0 0
      %2357 = vmatmul.mubr.bf16.gmra.mrb[0].mxu0 %v2298
      %v2358 = vpop.f32.mrb[0].mxu0
      %v2359 = vadd.f32 0.0, %v2358
      %v2360 = vpop.f32.mrb[0].mxu0
      %v2361 = vpop.f32.mrb[0].mxu0
      %v2362 = vadd.f32 0.0, %v2361
      %v2363 = vpop.f32.mrb[0].mxu0
      %2364 = vmatprep.mubr.bf16.mxu0 0
      %2365 = vmatmul.mubr.bf16.gmra.mrb[0].mxu0 %v2301
      %v2366 = vpop.f32.mrb[0].mxu0
      %v2367 = vadd.f32 0.0, %v2366
      %v2368 = vpop.f32.mrb[0].mxu0
      %v2369 = vpop.f32.mrb[0].mxu0
      %v2370 = vadd.f32 0.0, %v2369
      %v2371 = vpop.f32.mrb[0].mxu0
      %2372 = vmatprep.mubr.bf16.mxu0 0
      %2373 = vmatmul.mubr.bf16.gmra.mrb[0].mxu0 %v2304
      %v2374 = vpop.f32.mrb[0].mxu0
      %v2375 = vadd.f32 0.0, %v2374
      %v2376 = vpop.f32.mrb[0].mxu0
      %v2377 = vpop.f32.mrb[0].mxu0
      %v2378 = vadd.f32 0.0, %v2377
      %v2379 = vpop.f32.mrb[0].mxu0
      %2380 = vmatprep.mubr.bf16.mxu0 0
      %2381 = vmatmul.mubr.bf16.gmra.mrb[0].mxu0 %v2307
      %v2382 = vpop.f32.mrb[0].mxu0
      %v2383 = vadd.f32 0.0, %v2382
      %v2384 = vpop.f32.mrb[0].mxu0
      %v2385 = vpop.f32.mrb[0].mxu0
      %v2386 = vadd.f32 0.0, %v2385
      %v2387 = vpop.f32.mrb[0].mxu0
      %2388 = vmatprep.mubr.bf16.mxu0 0
      %2389 = vmatmul.mubr.bf16.gmra.mrb[0].mxu0 %v2310
      %v2390 = vpop.f32.mrb[0].mxu0
      %v2391 = vadd.f32 0.0, %v2390
      %v2392 = vpop.f32.mrb[0].mxu0
      %v2393 = vpop.f32.mrb[0].mxu0
      %v2394 = vadd.f32 0.0, %v2393
      %v2395 = vpop.f32.mrb[0].mxu0
      %2396 = vmatprep.mubr.bf16.mxu0 0
      %2397 = vmatmul.mubr.bf16.gmra.mrb[0].mxu0 %v2313
      %v2398 = vpop.f32.mrb[0].mxu0
      %v2399 = vadd.f32 0.0, %v2398
      %v2400 = vpop.f32.mrb[0].mxu0
      %v2401 = vpop.f32.mrb[0].mxu0
      %v2402 = vadd.f32 0.0, %v2401
      %v2403 = vpop.f32.mrb[0].mxu0
      %2404 = vmatprep.mubr.bf16.mxu0 0
      %2405 = vmatmul.mubr.bf16.gmra.mrb[0].mxu0 %v2316
      %v2406 = vpop.f32.mrb[0].mxu0
      %v2407 = vadd.f32 0.0, %v2406
      %v2408 = vpop.f32.mrb[0].mxu0
      %v2409 = vpop.f32.mrb[0].mxu0
      %v2410 = vadd.f32 0.0, %v2409
      %v2411 = vpop.f32.mrb[0].mxu0
      %2412 = vmatprep.mubr.bf16.mxu0 0
      %2413 = vmatmul.mubr.bf16.gmra.mrb[0].mxu0 %v2319
      %v2414 = vpop.f32.mrb[0].mxu0
      %v2415 = vadd.f32 0.0, %v2414
      %v2416 = vpop.f32.mrb[0].mxu0
      %v2417 = vpop.f32.mrb[0].mxu0
      %v2418 = vadd.f32 0.0, %v2417
      %v2419 = vpop.f32.mrb[0].mxu0
      %2420 = vdwg.mxu0
      %v2421 = vadd.f32 %v2255, %v2359
      %v2422 = vadd.f32 %v2256, %v2362
      %v2423 = vadd.f32 %v2257, %v2367
      %v2424 = vadd.f32 %v2258, %v2370
      %v2425 = vadd.f32 %v2259, %v2375
      %v2426 = vadd.f32 %v2260, %v2378
      %v2427 = vadd.f32 %v2261, %v2383
      %v2428 = vadd.f32 %v2262, %v2386
      %v2429 = vadd.f32 %v2263, %v2391
      %v2430 = vadd.f32 %v2264, %v2394
      %v2431 = vadd.f32 %v2265, %v2399
      %v2432 = vadd.f32 %v2266, %v2402
      %v2433 = vadd.f32 %v2267, %v2407
      %v2434 = vadd.f32 %v2268, %v2410
      %v2435 = vadd.f32 %v2269, %v2415
      %v2436 = vadd.f32 %v2270, %v2418
      %v2437 = vld [vmem:[#allocation2 + $0x29] sm:$0xff]
      %v2438 = vld [vmem:[#allocation2 + $0x31] sm:$0xff]
      %v2439 = vld [vmem:[#allocation2 + $0x39] sm:$0xff]
      %v2440 = vld [vmem:[#allocation2 + $0x41] sm:$0xff]
      %v2441 = vld [vmem:[#allocation2 + $0x49] sm:$0xff]
      %v2442 = vld [vmem:[#allocation2 + $0x51] sm:$0xff]
      %v2443 = vld [vmem:[#allocation2 + $0x59] sm:$0xff]
      %v2444 = vld [vmem:[#allocation2 + $0x61] sm:$0xff]
      %v2445 = vld [vmem:[#allocation2 + $0x69] sm:$0xff]
      %v2446 = vld [vmem:[#allocation2 + $0x71] sm:$0xff]
      %v2447 = vld [vmem:[#allocation2 + $0x79] sm:$0xff]
      %v2448 = vld [vmem:[#allocation2 + $0x81] sm:$0xff]
      %v2449 = vld [vmem:[#allocation2 + $0x89] sm:$0xff]
      %v2450 = vld [vmem:[#allocation2 + $0x91] sm:$0xff]
      %v2451 = vld [vmem:[#allocation2 + $0x99] sm:$0xff]
      %v2452 = vld [vmem:[#allocation2 + $0xa1] sm:$0xff]
      %v2453 = vsel %vm1377, %v2437, 0.0
      %v2454 = vsel %vm1378, %v2438, 0.0
      %v2455 = vsel %vm1379, %v2439, 0.0
      %v2456 = vsel %vm1380, %v2440, 0.0
      %v2457 = vsel %vm1381, %v2441, 0.0
      %v2458 = vsel %vm1382, %v2442, 0.0
      %v2459 = vsel %vm1383, %v2443, 0.0
      %v2460 = vsel %vm1384, %v2444, 0.0
      %v2461 = vsel %vm1385, %v2445, 0.0
      %v2462 = vsel %vm1386, %v2446, 0.0
      %v2463 = vsel %vm1387, %v2447, 0.0
      %v2464 = vsel %vm1388, %v2448, 0.0
      %v2465 = vsel %vm1389, %v2449, 0.0
      %v2466 = vsel %vm1390, %v2450, 0.0
      %v2467 = vsel %vm1391, %v2451, 0.0
      %v2468 = vsel %vm1392, %v2452, 0.0
      %v2469 = vpack.c.bf16 %v2454, %v2453
      %v2470 = vpack.c.bf16 %v2456, %v2455
      %v2471 = vpack.c.bf16 %v2458, %v2457
      %v2472 = vpack.c.bf16 %v2460, %v2459
      %v2473 = vpack.c.bf16 %v2462, %v2461
      %v2474 = vpack.c.bf16 %v2464, %v2463
      %v2475 = vpack.c.bf16 %v2466, %v2465
      %v2476 = vpack.c.bf16 %v2468, %v2467
      %s2477 = scalar_lea.vmem %s3, 32
      %v2478 = vld [vmem:[%s2477] sm:$0xf]
      %v2480 = vsel %vm266, %v2469, 0
      %v2483 = vsel %vm266, %v2470, 0
      %v2486 = vsel %vm266, %v2471, 0
      %v2489 = vsel %vm266, %v2472, 0
      %v2492 = vsel %vm266, %v2473, 0
      %v2495 = vsel %vm266, %v2474, 0
      %v2498 = vsel %vm266, %v2475, 0
      %v2501 = vsel %vm266, %v2476, 0
      %v2504 = vsel %vm1120, %v2478, 0
      %2506 = vmatprep.subr.bf16.mxu0 0
      %2507 = vmatpush1.bf16.msra.mxu0 %v2504
      %2508 = vmatprep.subr.bf16.mxu0 0
      %2509 = vmatpush1.bf16.msra.mxu0 0
      %2510 = vmatprep.subr.bf16.mxu0 0
      %2511 = vmatpush1.bf16.msra.mxu0 0
      %2512 = vmatprep.subr.bf16.mxu0 0
      %2513 = vmatpush1.bf16.msra.mxu0 0
      %2514 = vmatprep.subr.bf16.mxu0 0
      %2515 = vmatpush1.bf16.msra.mxu0 0
      %2516 = vmatprep.subr.bf16.mxu0 0
      %2517 = vmatpush1.bf16.msra.mxu0 0
      %2518 = vmatprep.subr.bf16.mxu0 0
      %2519 = vmatpush1.bf16.msra.mxu0 0
      %2520 = vmatprep.subr.bf16.mxu0 0
      %2521 = vmatpush1.bf16.msra.mxu0 0
      %2522 = vmatprep.subr.bf16.mxu0 0
      %2523 = vmatpush1.bf16.msra.mxu0 0
      %2524 = vmatprep.subr.bf16.mxu0 0
      %2525 = vmatpush1.bf16.msra.mxu0 0
      %2526 = vmatprep.subr.bf16.mxu0 0
      %2527 = vmatpush1.bf16.msra.mxu0 0
      %2528 = vmatprep.subr.bf16.mxu0 0
      %2529 = vmatpush1.bf16.msra.mxu0 0
      %2530 = vmatprep.subr.bf16.mxu0 0
      %2531 = vmatpush1.bf16.msra.mxu0 0
      %2532 = vmatprep.subr.bf16.mxu0 0
      %2533 = vmatpush1.bf16.msra.mxu0 0
      %2534 = vmatprep.subr.bf16.mxu0 0
      %2535 = vmatpush1.bf16.msra.mxu0 0
      %2536 = vmatprep.subr.bf16.mxu0 0
      %2537 = vmatpush1.bf16.msra.mxu0 0
      %2538 = vmatprep.mubr.bf16.mxu0 0
      %2539 = vmatmul.mubr.bf16.gmra.mrb[0].mxu0 %v2480
      %v2540 = vpop.f32.mrb[0].mxu0
      %v2541 = vadd.f32 0.0, %v2540
      %v2542 = vpop.f32.mrb[0].mxu0
      %v2543 = vpop.f32.mrb[0].mxu0
      %v2544 = vadd.f32 0.0, %v2543
      %v2545 = vpop.f32.mrb[0].mxu0
      %2546 = vmatprep.mubr.bf16.mxu0 0
      %2547 = vmatmul.mubr.bf16.gmra.mrb[0].mxu0 %v2483
      %v2548 = vpop.f32.mrb[0].mxu0
      %v2549 = vadd.f32 0.0, %v2548
      %v2550 = vpop.f32.mrb[0].mxu0
      %v2551 = vpop.f32.mrb[0].mxu0
      %v2552 = vadd.f32 0.0, %v2551
      %v2553 = vpop.f32.mrb[0].mxu0
      %2554 = vmatprep.mubr.bf16.mxu0 0
      %2555 = vmatmul.mubr.bf16.gmra.mrb[0].mxu0 %v2486
      %v2556 = vpop.f32.mrb[0].mxu0
      %v2557 = vadd.f32 0.0, %v2556
      %v2558 = vpop.f32.mrb[0].mxu0
      %v2559 = vpop.f32.mrb[0].mxu0
      %v2560 = vadd.f32 0.0, %v2559
      %v2561 = vpop.f32.mrb[0].mxu0
      %2562 = vmatprep.mubr.bf16.mxu0 0
      %2563 = vmatmul.mubr.bf16.gmra.mrb[0].mxu0 %v2489
      %v2564 = vpop.f32.mrb[0].mxu0
      %v2565 = vadd.f32 0.0, %v2564
      %v2566 = vpop.f32.mrb[0].mxu0
      %v2567 = vpop.f32.mrb[0].mxu0
      %v2568 = vadd.f32 0.0, %v2567
      %v2569 = vpop.f32.mrb[0].mxu0
      %2570 = vmatprep.mubr.bf16.mxu0 0
      %2571 = vmatmul.mubr.bf16.gmra.mrb[0].mxu0 %v2492
      %v2572 = vpop.f32.mrb[0].mxu0
      %v2573 = vadd.f32 0.0, %v2572
      %v2574 = vpop.f32.mrb[0].mxu0
      %v2575 = vpop.f32.mrb[0].mxu0
      %v2576 = vadd.f32 0.0, %v2575
      %v2577 = vpop.f32.mrb[0].mxu0
      %2578 = vmatprep.mubr.bf16.mxu0 0
      %2579 = vmatmul.mubr.bf16.gmra.mrb[0].mxu0 %v2495
      %v2580 = vpop.f32.mrb[0].mxu0
      %v2581 = vadd.f32 0.0, %v2580
      %v2582 = vpop.f32.mrb[0].mxu0
      %v2583 = vpop.f32.mrb[0].mxu0
      %v2584 = vadd.f32 0.0, %v2583
      %v2585 = vpop.f32.mrb[0].mxu0
      %2586 = vmatprep.mubr.bf16.mxu0 0
      %2587 = vmatmul.mubr.bf16.gmra.mrb[0].mxu0 %v2498
      %v2588 = vpop.f32.mrb[0].mxu0
      %v2589 = vadd.f32 0.0, %v2588
      %v2590 = vpop.f32.mrb[0].mxu0
      %v2591 = vpop.f32.mrb[0].mxu0
      %v2592 = vadd.f32 0.0, %v2591
      %v2593 = vpop.f32.mrb[0].mxu0
      %2594 = vmatprep.mubr.bf16.mxu0 0
      %2595 = vmatmul.mubr.bf16.gmra.mrb[0].mxu0 %v2501
      %v2596 = vpop.f32.mrb[0].mxu0
      %v2597 = vadd.f32 0.0, %v2596
      %v2598 = vpop.f32.mrb[0].mxu0
      %v2599 = vpop.f32.mrb[0].mxu0
      %v2600 = vadd.f32 0.0, %v2599
      %v2601 = vpop.f32.mrb[0].mxu0
      %2602 = vdwg.mxu0
      %v2603 = vadd.f32 %v2421, %v2541
      %v2604 = vadd.f32 %v2422, %v2544
      %v2605 = vadd.f32 %v2423, %v2549
      %v2606 = vadd.f32 %v2424, %v2552
      %v2607 = vadd.f32 %v2425, %v2557
      %v2608 = vadd.f32 %v2426, %v2560
      %v2609 = vadd.f32 %v2427, %v2565
      %v2610 = vadd.f32 %v2428, %v2568
      %v2611 = vadd.f32 %v2429, %v2573
      %v2612 = vadd.f32 %v2430, %v2576
      %v2613 = vadd.f32 %v2431, %v2581
      %v2614 = vadd.f32 %v2432, %v2584
      %v2615 = vadd.f32 %v2433, %v2589
      %v2616 = vadd.f32 %v2434, %v2592
      %v2617 = vadd.f32 %v2435, %v2597
      %v2618 = vadd.f32 %v2436, %v2600
      %v2620 = vlaneseq
      %v2621 = vshrl.u32 %v2620, 7
      %v2622 = vsub.s32 0, %v2621
      %v2623 = vrot.slane %v279, %v2622
      %v2625 = vadd.f32 %v2603, %v2623
      %v2626 = vadd.f32 %v2604, %v2623
      %v2627 = vadd.f32 %v2605, %v2623
      %v2628 = vadd.f32 %v2606, %v2623
      %v2629 = vadd.f32 %v2607, %v2623
      %v2630 = vadd.f32 %v2608, %v2623
      %v2631 = vadd.f32 %v2609, %v2623
      %v2632 = vadd.f32 %v2610, %v2623
      %v2633 = vadd.f32 %v2611, %v2623
      %v2634 = vadd.f32 %v2612, %v2623
      %v2635 = vadd.f32 %v2613, %v2623
      %v2636 = vadd.f32 %v2614, %v2623
      %v2637 = vadd.f32 %v2615, %v2623
      %v2638 = vadd.f32 %v2616, %v2623
      %v2639 = vadd.f32 %v2617, %v2623
      %v2640 = vadd.f32 %v2618, %v2623
      %2641 = vst [vmem:[%s264] sm:$0xff] %v2625
      %2642 = vst [vmem:[%s264 + $0x8] sm:$0xff] %v2626
      %2643 = vst [vmem:[%s264 + $0x10] sm:$0xff] %v2627
      %2644 = vst [vmem:[%s264 + $0x18] sm:$0xff] %v2628
      %2645 = vst [vmem:[%s264 + $0x20] sm:$0xff] %v2629
      %2646 = vst [vmem:[%s264 + $0x28] sm:$0xff] %v2630
      %2647 = vst [vmem:[%s264 + $0x30] sm:$0xff] %v2631
      %2648 = vst [vmem:[%s264 + $0x38] sm:$0xff] %v2632
      %2649 = vst [vmem:[%s264 + $0x40] sm:$0xff] %v2633
      %2650 = vst [vmem:[%s264 + $0x48] sm:$0xff] %v2634
      %2651 = vst [vmem:[%s264 + $0x50] sm:$0xff] %v2635
      %2652 = vst [vmem:[%s264 + $0x58] sm:$0xff] %v2636
      %2653 = vst [vmem:[%s264 + $0x60] sm:$0xff] %v2637
      %2654 = vst [vmem:[%s264 + $0x68] sm:$0xff] %v2638
      %2655 = vst [vmem:[%s264 + $0x70] sm:$0xff] %v2639
      %2656 = vst [vmem:[%s264 + $0x78] sm:$0xff] %v2640
      %v2657 = vld [vmem:[#allocation2 + $0x87] sm:$0xff]
      %v2658 = vld [vmem:[#allocation2 + $0x8f] sm:$0xff]
      %v2659 = vld [vmem:[#allocation2 + $0x97] sm:$0xff]
      %v2660 = vld [vmem:[#allocation2 + $0x9f] sm:$0xff]
      %v2661 = vld [vmem:[#allocation2 + $0xa7] sm:$0xff]
      %v2662 = vld [vmem:[#allocation2 + $0xaf] sm:$0xff]
      %v2663 = vld [vmem:[#allocation2 + $0xb7] sm:$0xff]
      %v2664 = vld [vmem:[#allocation2 + $0xbf] sm:$0xff]
      %v2665 = vld [vmem:[#allocation2 + $0xc7] sm:$0xff]
      %v2666 = vld [vmem:[#allocation2 + $0xcf] sm:$0xff]
      %v2667 = vld [vmem:[#allocation2 + $0xd7] sm:$0xff]
      %v2668 = vld [vmem:[#allocation2 + $0xdf] sm:$0xff]
      %v2669 = vld [vmem:[#allocation2 + $0xe7] sm:$0xff]
      %v2670 = vld [vmem:[#allocation2 + $0xef] sm:$0xff]
      %v2671 = vld [vmem:[#allocation2 + $0xf7] sm:$0xff]
      %v2672 = vld [vmem:[#allocation2 + $0xff] sm:$0xff]
      %v2673 = vsel %vm1029, %v2657, 0.0
      %v2674 = vsel %vm1030, %v2658, 0.0
      %v2675 = vsel %vm1031, %v2659, 0.0
      %v2676 = vsel %vm1032, %v2660, 0.0
      %v2677 = vsel %vm1033, %v2661, 0.0
      %v2678 = vsel %vm1034, %v2662, 0.0
      %v2679 = vsel %vm1035, %v2663, 0.0
      %v2680 = vsel %vm1036, %v2664, 0.0
      %v2681 = vsel %vm1037, %v2665, 0.0
      %v2682 = vsel %vm1038, %v2666, 0.0
      %v2683 = vsel %vm1039, %v2667, 0.0
      %v2684 = vsel %vm1040, %v2668, 0.0
      %v2685 = vsel %vm1041, %v2669, 0.0
      %v2686 = vsel %vm1042, %v2670, 0.0
      %v2687 = vsel %vm1043, %v2671, 0.0
      %v2688 = vsel %vm1044, %v2672, 0.0
      %v2689 = vpack.c.bf16 %v2674, %v2673
      %v2690 = vpack.c.bf16 %v2676, %v2675
      %v2691 = vpack.c.bf16 %v2678, %v2677
      %v2692 = vpack.c.bf16 %v2680, %v2679
      %v2693 = vpack.c.bf16 %v2682, %v2681
      %v2694 = vpack.c.bf16 %v2684, %v2683
      %v2695 = vpack.c.bf16 %v2686, %v2685
      %v2696 = vpack.c.bf16 %v2688, %v2687
      %v2697 = vld [vmem:[%s3] sm:$0xf]
      %v2698 = vld [vmem:[#allocation2 + $0x88] sm:$0xff]
      %v2699 = vld [vmem:[#allocation2 + $0x90] sm:$0xff]
      %v2700 = vld [vmem:[#allocation2 + $0x98] sm:$0xff]
      %v2701 = vld [vmem:[#allocation2 + $0xa0] sm:$0xff]
      %v2702 = vld [vmem:[#allocation2 + $0xa8] sm:$0xff]
      %v2703 = vld [vmem:[#allocation2 + $0xb0] sm:$0xff]
      %v2704 = vld [vmem:[#allocation2 + $0xb8] sm:$0xff]
      %v2705 = vld [vmem:[#allocation2 + $0xc0] sm:$0xff]
      %v2706 = vld [vmem:[#allocation2 + $0xc8] sm:$0xff]
      %v2707 = vld [vmem:[#allocation2 + $0xd0] sm:$0xff]
      %v2708 = vld [vmem:[#allocation2 + $0xd8] sm:$0xff]
      %v2709 = vld [vmem:[#allocation2 + $0xe0] sm:$0xff]
      %v2710 = vld [vmem:[#allocation2 + $0xe8] sm:$0xff]
      %v2711 = vld [vmem:[#allocation2 + $0xf0] sm:$0xff]
      %v2712 = vld [vmem:[#allocation2 + $0xf8] sm:$0xff]
      %v2713 = vld [vmem:[#allocation2 + $0x100] sm:$0xff]
      %v2714 = vpack.c.bf16 %v2699, %v2698
      %v2715 = vpack.c.bf16 %v2701, %v2700
      %v2716 = vpack.c.bf16 %v2703, %v2702
      %v2717 = vpack.c.bf16 %v2705, %v2704
      %v2718 = vpack.c.bf16 %v2707, %v2706
      %v2719 = vpack.c.bf16 %v2709, %v2708
      %v2720 = vpack.c.bf16 %v2711, %v2710
      %v2721 = vpack.c.bf16 %v2713, %v2712
      %v2722 = vld [vmem:[%s1094] sm:$0xf]
      %v2724 = vsel %vm266, %v2714, 0
      %v2727 = vsel %vm266, %v2715, 0
      %v2730 = vsel %vm266, %v2716, 0
      %v2733 = vsel %vm266, %v2717, 0
      %v2736 = vsel %vm266, %v2718, 0
      %v2739 = vsel %vm266, %v2719, 0
      %v2742 = vsel %vm266, %v2720, 0
      %v2745 = vsel %vm266, %v2721, 0
      %v2748 = vsel %vm1120, %v2722, 0
      %2750 = vmatprep.subr.bf16.mxu0 0
      %2751 = vmatpush1.bf16.msra.mxu0 %v2748
      %2752 = vmatprep.subr.bf16.mxu0 0
      %2753 = vmatpush1.bf16.msra.mxu0 0
      %2754 = vmatprep.subr.bf16.mxu0 0
      %2755 = vmatpush1.bf16.msra.mxu0 0
      %2756 = vmatprep.subr.bf16.mxu0 0
      %2757 = vmatpush1.bf16.msra.mxu0 0
      %2758 = vmatprep.subr.bf16.mxu0 0
      %2759 = vmatpush1.bf16.msra.mxu0 0
      %2760 = vmatprep.subr.bf16.mxu0 0
      %2761 = vmatpush1.bf16.msra.mxu0 0
      %2762 = vmatprep.subr.bf16.mxu0 0
      %2763 = vmatpush1.bf16.msra.mxu0 0
      %2764 = vmatprep.subr.bf16.mxu0 0
      %2765 = vmatpush1.bf16.msra.mxu0 0
      %2766 = vmatprep.subr.bf16.mxu0 0
      %2767 = vmatpush1.bf16.msra.mxu0 0
      %2768 = vmatprep.subr.bf16.mxu0 0
      %2769 = vmatpush1.bf16.msra.mxu0 0
      %2770 = vmatprep.subr.bf16.mxu0 0
      %2771 = vmatpush1.bf16.msra.mxu0 0
      %2772 = vmatprep.subr.bf16.mxu0 0
      %2773 = vmatpush1.bf16.msra.mxu0 0
      %2774 = vmatprep.subr.bf16.mxu0 0
      %2775 = vmatpush1.bf16.msra.mxu0 0
      %2776 = vmatprep.subr.bf16.mxu0 0
      %2777 = vmatpush1.bf16.msra.mxu0 0
      %2778 = vmatprep.subr.bf16.mxu0 0
      %2779 = vmatpush1.bf16.msra.mxu0 0
      %2780 = vmatprep.subr.bf16.mxu0 0
      %2781 = vmatpush1.bf16.msra.mxu0 0
      %2782 = vmatprep.mubr.bf16.mxu0 0
      %2783 = vmatmul.mubr.bf16.gmra.mrb[0].mxu0 %v2724
      %v2784 = vpop.f32.mrb[0].mxu0
      %v2785 = vadd.f32 0.0, %v2784
      %v2786 = vpop.f32.mrb[0].mxu0
      %v2787 = vpop.f32.mrb[0].mxu0
      %v2788 = vadd.f32 0.0, %v2787
      %v2789 = vpop.f32.mrb[0].mxu0
      %2790 = vmatprep.mubr.bf16.mxu0 0
      %2791 = vmatmul.mubr.bf16.gmra.mrb[0].mxu0 %v2727
      %v2792 = vpop.f32.mrb[0].mxu0
      %v2793 = vadd.f32 0.0, %v2792
      %v2794 = vpop.f32.mrb[0].mxu0
      %v2795 = vpop.f32.mrb[0].mxu0
      %v2796 = vadd.f32 0.0, %v2795
      %v2797 = vpop.f32.mrb[0].mxu0
      %2798 = vmatprep.mubr.bf16.mxu0 0
      %2799 = vmatmul.mubr.bf16.gmra.mrb[0].mxu0 %v2730
      %v2800 = vpop.f32.mrb[0].mxu0
      %v2801 = vadd.f32 0.0, %v2800
      %v2802 = vpop.f32.mrb[0].mxu0
      %v2803 = vpop.f32.mrb[0].mxu0
      %v2804 = vadd.f32 0.0, %v2803
      %v2805 = vpop.f32.mrb[0].mxu0
      %2806 = vmatprep.mubr.bf16.mxu0 0
      %2807 = vmatmul.mubr.bf16.gmra.mrb[0].mxu0 %v2733
      %v2808 = vpop.f32.mrb[0].mxu0
      %v2809 = vadd.f32 0.0, %v2808
      %v2810 = vpop.f32.mrb[0].mxu0
      %v2811 = vpop.f32.mrb[0].mxu0
      %v2812 = vadd.f32 0.0, %v2811
      %v2813 = vpop.f32.mrb[0].mxu0
      %2814 = vmatprep.mubr.bf16.mxu0 0
      %2815 = vmatmul.mubr.bf16.gmra.mrb[0].mxu0 %v2736
      %v2816 = vpop.f32.mrb[0].mxu0
      %v2817 = vadd.f32 0.0, %v2816
      %v2818 = vpop.f32.mrb[0].mxu0
      %v2819 = vpop.f32.mrb[0].mxu0
      %v2820 = vadd.f32 0.0, %v2819
      %v2821 = vpop.f32.mrb[0].mxu0
      %2822 = vmatprep.mubr.bf16.mxu0 0
      %2823 = vmatmul.mubr.bf16.gmra.mrb[0].mxu0 %v2739
      %v2824 = vpop.f32.mrb[0].mxu0
      %v2825 = vadd.f32 0.0, %v2824
      %v2826 = vpop.f32.mrb[0].mxu0
      %v2827 = vpop.f32.mrb[0].mxu0
      %v2828 = vadd.f32 0.0, %v2827
      %v2829 = vpop.f32.mrb[0].mxu0
      %2830 = vmatprep.mubr.bf16.mxu0 0
      %2831 = vmatmul.mubr.bf16.gmra.mrb[0].mxu0 %v2742
      %v2832 = vpop.f32.mrb[0].mxu0
      %v2833 = vadd.f32 0.0, %v2832
      %v2834 = vpop.f32.mrb[0].mxu0
      %v2835 = vpop.f32.mrb[0].mxu0
      %v2836 = vadd.f32 0.0, %v2835
      %v2837 = vpop.f32.mrb[0].mxu0
      %2838 = vmatprep.mubr.bf16.mxu0 0
      %2839 = vmatmul.mubr.bf16.gmra.mrb[0].mxu0 %v2745
      %v2840 = vpop.f32.mrb[0].mxu0
      %v2841 = vadd.f32 0.0, %v2840
      %v2842 = vpop.f32.mrb[0].mxu0
      %v2843 = vpop.f32.mrb[0].mxu0
      %v2844 = vadd.f32 0.0, %v2843
      %v2845 = vpop.f32.mrb[0].mxu0
      %2846 = vdwg.mxu0
      %v2848 = vsel %vm266, %v2689, 0
      %v2851 = vsel %vm266, %v2690, 0
      %v2854 = vsel %vm266, %v2691, 0
      %v2857 = vsel %vm266, %v2692, 0
      %v2860 = vsel %vm266, %v2693, 0
      %v2863 = vsel %vm266, %v2694, 0
      %v2866 = vsel %vm266, %v2695, 0
      %v2869 = vsel %vm266, %v2696, 0
      %v2872 = vsel %vm1120, %v2697, 0
      %2874 = vmatprep.subr.bf16.mxu0 0
      %2875 = vmatpush1.bf16.msra.mxu0 %v2872
      %2876 = vmatprep.subr.bf16.mxu0 0
      %2877 = vmatpush1.bf16.msra.mxu0 0
      %2878 = vmatprep.subr.bf16.mxu0 0
      %2879 = vmatpush1.bf16.msra.mxu0 0
      %2880 = vmatprep.subr.bf16.mxu0 0
      %2881 = vmatpush1.bf16.msra.mxu0 0
      %2882 = vmatprep.subr.bf16.mxu0 0
      %2883 = vmatpush1.bf16.msra.mxu0 0
      %2884 = vmatprep.subr.bf16.mxu0 0
      %2885 = vmatpush1.bf16.msra.mxu0 0
      %2886 = vmatprep.subr.bf16.mxu0 0
      %2887 = vmatpush1.bf16.msra.mxu0 0
      %2888 = vmatprep.subr.bf16.mxu0 0
      %2889 = vmatpush1.bf16.msra.mxu0 0
      %2890 = vmatprep.subr.bf16.mxu0 0
      %2891 = vmatpush1.bf16.msra.mxu0 0
      %2892 = vmatprep.subr.bf16.mxu0 0
      %2893 = vmatpush1.bf16.msra.mxu0 0
      %2894 = vmatprep.subr.bf16.mxu0 0
      %2895 = vmatpush1.bf16.msra.mxu0 0
      %2896 = vmatprep.subr.bf16.mxu0 0
      %2897 = vmatpush1.bf16.msra.mxu0 0
      %2898 = vmatprep.subr.bf16.mxu0 0
      %2899 = vmatpush1.bf16.msra.mxu0 0
      %2900 = vmatprep.subr.bf16.mxu0 0
      %2901 = vmatpush1.bf16.msra.mxu0 0
      %2902 = vmatprep.subr.bf16.mxu0 0
      %2903 = vmatpush1.bf16.msra.mxu0 0
      %2904 = vmatprep.subr.bf16.mxu0 0
      %2905 = vmatpush1.bf16.msra.mxu0 0
      %2906 = vmatprep.mubr.bf16.mxu0 0
      %2907 = vmatmul.mubr.bf16.gmra.mrb[0].mxu0 %v2848
      %v2908 = vpop.f32.mrb[0].mxu0
      %v2909 = vadd.f32 %v2785, %v2908
      %v2910 = vpop.f32.mrb[0].mxu0
      %v2911 = vpop.f32.mrb[0].mxu0
      %v2912 = vadd.f32 %v2788, %v2911
      %v2913 = vpop.f32.mrb[0].mxu0
      %2914 = vmatprep.mubr.bf16.mxu0 0
      %2915 = vmatmul.mubr.bf16.gmra.mrb[0].mxu0 %v2851
      %v2916 = vpop.f32.mrb[0].mxu0
      %v2917 = vadd.f32 %v2793, %v2916
      %v2918 = vpop.f32.mrb[0].mxu0
      %v2919 = vpop.f32.mrb[0].mxu0
      %v2920 = vadd.f32 %v2796, %v2919
      %v2921 = vpop.f32.mrb[0].mxu0
      %2922 = vmatprep.mubr.bf16.mxu0 0
      %2923 = vmatmul.mubr.bf16.gmra.mrb[0].mxu0 %v2854
      %v2924 = vpop.f32.mrb[0].mxu0
      %v2925 = vadd.f32 %v2801, %v2924
      %v2926 = vpop.f32.mrb[0].mxu0
      %v2927 = vpop.f32.mrb[0].mxu0
      %v2928 = vadd.f32 %v2804, %v2927
      %v2929 = vpop.f32.mrb[0].mxu0
      %2930 = vmatprep.mubr.bf16.mxu0 0
      %2931 = vmatmul.mubr.bf16.gmra.mrb[0].mxu0 %v2857
      %v2932 = vpop.f32.mrb[0].mxu0
      %v2933 = vadd.f32 %v2809, %v2932
      %v2934 = vpop.f32.mrb[0].mxu0
      %v2935 = vpop.f32.mrb[0].mxu0
      %v2936 = vadd.f32 %v2812, %v2935
      %v2937 = vpop.f32.mrb[0].mxu0
      %2938 = vmatprep.mubr.bf16.mxu0 0
      %2939 = vmatmul.mubr.bf16.gmra.mrb[0].mxu0 %v2860
      %v2940 = vpop.f32.mrb[0].mxu0
      %v2941 = vadd.f32 %v2817, %v2940
      %v2942 = vpop.f32.mrb[0].mxu0
      %v2943 = vpop.f32.mrb[0].mxu0
      %v2944 = vadd.f32 %v2820, %v2943
      %v2945 = vpop.f32.mrb[0].mxu0
      %2946 = vmatprep.mubr.bf16.mxu0 0
      %2947 = vmatmul.mubr.bf16.gmra.mrb[0].mxu0 %v2863
      %v2948 = vpop.f32.mrb[0].mxu0
      %v2949 = vadd.f32 %v2825, %v2948
      %v2950 = vpop.f32.mrb[0].mxu0
      %v2951 = vpop.f32.mrb[0].mxu0
      %v2952 = vadd.f32 %v2828, %v2951
      %v2953 = vpop.f32.mrb[0].mxu0
      %2954 = vmatprep.mubr.bf16.mxu0 0
      %2955 = vmatmul.mubr.bf16.gmra.mrb[0].mxu0 %v2866
      %v2956 = vpop.f32.mrb[0].mxu0
      %v2957 = vadd.f32 %v2833, %v2956
      %v2958 = vpop.f32.mrb[0].mxu0
      %v2959 = vpop.f32.mrb[0].mxu0
      %v2960 = vadd.f32 %v2836, %v2959
      %v2961 = vpop.f32.mrb[0].mxu0
      %2962 = vmatprep.mubr.bf16.mxu0 0
      %2963 = vmatmul.mubr.bf16.gmra.mrb[0].mxu0 %v2869
      %v2964 = vpop.f32.mrb[0].mxu0
      %v2965 = vadd.f32 %v2841, %v2964
      %v2966 = vpop.f32.mrb[0].mxu0
      %v2967 = vpop.f32.mrb[0].mxu0
      %v2968 = vadd.f32 %v2844, %v2967
      %v2969 = vpop.f32.mrb[0].mxu0
      %2970 = vdwg.mxu0
      %v2971 = vld [vmem:[#allocation2 + $0x89] sm:$0xff]
      %v2972 = vld [vmem:[#allocation2 + $0x91] sm:$0xff]
      %v2973 = vld [vmem:[#allocation2 + $0x99] sm:$0xff]
      %v2974 = vld [vmem:[#allocation2 + $0xa1] sm:$0xff]
      %v2975 = vld [vmem:[#allocation2 + $0xa9] sm:$0xff]
      %v2976 = vld [vmem:[#allocation2 + $0xb1] sm:$0xff]
      %v2977 = vld [vmem:[#allocation2 + $0xb9] sm:$0xff]
      %v2978 = vld [vmem:[#allocation2 + $0xc1] sm:$0xff]
      %v2979 = vld [vmem:[#allocation2 + $0xc9] sm:$0xff]
      %v2980 = vld [vmem:[#allocation2 + $0xd1] sm:$0xff]
      %v2981 = vld [vmem:[#allocation2 + $0xd9] sm:$0xff]
      %v2982 = vld [vmem:[#allocation2 + $0xe1] sm:$0xff]
      %v2983 = vld [vmem:[#allocation2 + $0xe9] sm:$0xff]
      %v2984 = vld [vmem:[#allocation2 + $0xf1] sm:$0xff]
      %v2985 = vld [vmem:[#allocation2 + $0xf9] sm:$0xff]
      %v2986 = vld [vmem:[#allocation2 + $0x101] sm:$0xff]
      %v2987 = vsel %vm1377, %v2971, 0.0
      %v2988 = vsel %vm1378, %v2972, 0.0
      %v2989 = vsel %vm1379, %v2973, 0.0
      %v2990 = vsel %vm1380, %v2974, 0.0
      %v2991 = vsel %vm1381, %v2975, 0.0
      %v2992 = vsel %vm1382, %v2976, 0.0
      %v2993 = vsel %vm1383, %v2977, 0.0
      %v2994 = vsel %vm1384, %v2978, 0.0
      %v2995 = vsel %vm1385, %v2979, 0.0
      %v2996 = vsel %vm1386, %v2980, 0.0
      %v2997 = vsel %vm1387, %v2981, 0.0
      %v2998 = vsel %vm1388, %v2982, 0.0
      %v2999 = vsel %vm1389, %v2983, 0.0
      %v3000 = vsel %vm1390, %v2984, 0.0
      %v3001 = vsel %vm1391, %v2985, 0.0
      %v3002 = vsel %vm1392, %v2986, 0.0
      %v3003 = vpack.c.bf16 %v2988, %v2987
      %v3004 = vpack.c.bf16 %v2990, %v2989
      %v3005 = vpack.c.bf16 %v2992, %v2991
      %v3006 = vpack.c.bf16 %v2994, %v2993
      %v3007 = vpack.c.bf16 %v2996, %v2995
      %v3008 = vpack.c.bf16 %v2998, %v2997
      %v3009 = vpack.c.bf16 %v3000, %v2999
      %v3010 = vpack.c.bf16 %v3002, %v3001
      %v3011 = vld [vmem:[%s1417] sm:$0xf]
      %v3013 = vsel %vm266, %v3003, 0
      %v3016 = vsel %vm266, %v3004, 0
      %v3019 = vsel %vm266, %v3005, 0
      %v3022 = vsel %vm266, %v3006, 0
      %v3025 = vsel %vm266, %v3007, 0
      %v3028 = vsel %vm266, %v3008, 0
      %v3031 = vsel %vm266, %v3009, 0
      %v3034 = vsel %vm266, %v3010, 0
      %v3037 = vsel %vm1120, %v3011, 0
      %3039 = vmatprep.subr.bf16.mxu0 0
      %3040 = vmatpush1.bf16.msra.mxu0 %v3037
      %3041 = vmatprep.subr.bf16.mxu0 0
      %3042 = vmatpush1.bf16.msra.mxu0 0
      %3043 = vmatprep.subr.bf16.mxu0 0
      %3044 = vmatpush1.bf16.msra.mxu0 0
      %3045 = vmatprep.subr.bf16.mxu0 0
      %3046 = vmatpush1.bf16.msra.mxu0 0
      %3047 = vmatprep.subr.bf16.mxu0 0
      %3048 = vmatpush1.bf16.msra.mxu0 0
      %3049 = vmatprep.subr.bf16.mxu0 0
      %3050 = vmatpush1.bf16.msra.mxu0 0
      %3051 = vmatprep.subr.bf16.mxu0 0
      %3052 = vmatpush1.bf16.msra.mxu0 0
      %3053 = vmatprep.subr.bf16.mxu0 0
      %3054 = vmatpush1.bf16.msra.mxu0 0
      %3055 = vmatprep.subr.bf16.mxu0 0
      %3056 = vmatpush1.bf16.msra.mxu0 0
      %3057 = vmatprep.subr.bf16.mxu0 0
      %3058 = vmatpush1.bf16.msra.mxu0 0
      %3059 = vmatprep.subr.bf16.mxu0 0
      %3060 = vmatpush1.bf16.msra.mxu0 0
      %3061 = vmatprep.subr.bf16.mxu0 0
      %3062 = vmatpush1.bf16.msra.mxu0 0
      %3063 = vmatprep.subr.bf16.mxu0 0
      %3064 = vmatpush1.bf16.msra.mxu0 0
      %3065 = vmatprep.subr.bf16.mxu0 0
      %3066 = vmatpush1.bf16.msra.mxu0 0
      %3067 = vmatprep.subr.bf16.mxu0 0
      %3068 = vmatpush1.bf16.msra.mxu0 0
      %3069 = vmatprep.subr.bf16.mxu0 0
      %3070 = vmatpush1.bf16.msra.mxu0 0
      %3071 = vmatprep.mubr.bf16.mxu0 0
      %3072 = vmatmul.mubr.bf16.gmra.mrb[0].mxu0 %v3013
      %v3073 = vpop.f32.mrb[0].mxu0
      %v3074 = vadd.f32 0.0, %v3073
      %v3075 = vpop.f32.mrb[0].mxu0
      %v3076 = vpop.f32.mrb[0].mxu0
      %v3077 = vadd.f32 0.0, %v3076
      %v3078 = vpop.f32.mrb[0].mxu0
      %3079 = vmatprep.mubr.bf16.mxu0 0
      %3080 = vmatmul.mubr.bf16.gmra.mrb[0].mxu0 %v3016
      %v3081 = vpop.f32.mrb[0].mxu0
      %v3082 = vadd.f32 0.0, %v3081
      %v3083 = vpop.f32.mrb[0].mxu0
      %v3084 = vpop.f32.mrb[0].mxu0
      %v3085 = vadd.f32 0.0, %v3084
      %v3086 = vpop.f32.mrb[0].mxu0
      %3087 = vmatprep.mubr.bf16.mxu0 0
      %3088 = vmatmul.mubr.bf16.gmra.mrb[0].mxu0 %v3019
      %v3089 = vpop.f32.mrb[0].mxu0
      %v3090 = vadd.f32 0.0, %v3089
      %v3091 = vpop.f32.mrb[0].mxu0
      %v3092 = vpop.f32.mrb[0].mxu0
      %v3093 = vadd.f32 0.0, %v3092
      %v3094 = vpop.f32.mrb[0].mxu0
      %3095 = vmatprep.mubr.bf16.mxu0 0
      %3096 = vmatmul.mubr.bf16.gmra.mrb[0].mxu0 %v3022
      %v3097 = vpop.f32.mrb[0].mxu0
      %v3098 = vadd.f32 0.0, %v3097
      %v3099 = vpop.f32.mrb[0].mxu0
      %v3100 = vpop.f32.mrb[0].mxu0
      %v3101 = vadd.f32 0.0, %v3100
      %v3102 = vpop.f32.mrb[0].mxu0
      %3103 = vmatprep.mubr.bf16.mxu0 0
      %3104 = vmatmul.mubr.bf16.gmra.mrb[0].mxu0 %v3025
      %v3105 = vpop.f32.mrb[0].mxu0
      %v3106 = vadd.f32 0.0, %v3105
      %v3107 = vpop.f32.mrb[0].mxu0
      %v3108 = vpop.f32.mrb[0].mxu0
      %v3109 = vadd.f32 0.0, %v3108
      %v3110 = vpop.f32.mrb[0].mxu0
      %3111 = vmatprep.mubr.bf16.mxu0 0
      %3112 = vmatmul.mubr.bf16.gmra.mrb[0].mxu0 %v3028
      %v3113 = vpop.f32.mrb[0].mxu0
      %v3114 = vadd.f32 0.0, %v3113
      %v3115 = vpop.f32.mrb[0].mxu0
      %v3116 = vpop.f32.mrb[0].mxu0
      %v3117 = vadd.f32 0.0, %v3116
      %v3118 = vpop.f32.mrb[0].mxu0
      %3119 = vmatprep.mubr.bf16.mxu0 0
      %3120 = vmatmul.mubr.bf16.gmra.mrb[0].mxu0 %v3031
      %v3121 = vpop.f32.mrb[0].mxu0
      %v3122 = vadd.f32 0.0, %v3121
      %v3123 = vpop.f32.mrb[0].mxu0
      %v3124 = vpop.f32.mrb[0].mxu0
      %v3125 = vadd.f32 0.0, %v3124
      %v3126 = vpop.f32.mrb[0].mxu0
      %3127 = vmatprep.mubr.bf16.mxu0 0
      %3128 = vmatmul.mubr.bf16.gmra.mrb[0].mxu0 %v3034
      %v3129 = vpop.f32.mrb[0].mxu0
      %v3130 = vadd.f32 0.0, %v3129
      %v3131 = vpop.f32.mrb[0].mxu0
      %v3132 = vpop.f32.mrb[0].mxu0
      %v3133 = vadd.f32 0.0, %v3132
      %v3134 = vpop.f32.mrb[0].mxu0
      %3135 = vdwg.mxu0
      %v3136 = vadd.f32 %v2909, %v3074
      %v3137 = vadd.f32 %v2912, %v3077
      %v3138 = vadd.f32 %v2917, %v3082
      %v3139 = vadd.f32 %v2920, %v3085
      %v3140 = vadd.f32 %v2925, %v3090
      %v3141 = vadd.f32 %v2928, %v3093
      %v3142 = vadd.f32 %v2933, %v3098
      %v3143 = vadd.f32 %v2936, %v3101
      %v3144 = vadd.f32 %v2941, %v3106
      %v3145 = vadd.f32 %v2944, %v3109
      %v3146 = vadd.f32 %v2949, %v3114
      %v3147 = vadd.f32 %v2952, %v3117
      %v3148 = vadd.f32 %v2957, %v3122
      %v3149 = vadd.f32 %v2960, %v3125
      %v3150 = vadd.f32 %v2965, %v3130
      %v3151 = vadd.f32 %v2968, %v3133
      %v3152 = vld [vmem:[#allocation2 + $0x97] sm:$0xff]
      %v3153 = vld [vmem:[#allocation2 + $0x9f] sm:$0xff]
      %v3154 = vld [vmem:[#allocation2 + $0xa7] sm:$0xff]
      %v3155 = vld [vmem:[#allocation2 + $0xaf] sm:$0xff]
      %v3156 = vld [vmem:[#allocation2 + $0xb7] sm:$0xff]
      %v3157 = vld [vmem:[#allocation2 + $0xbf] sm:$0xff]
      %v3158 = vld [vmem:[#allocation2 + $0xc7] sm:$0xff]
      %v3159 = vld [vmem:[#allocation2 + $0xcf] sm:$0xff]
      %v3160 = vld [vmem:[#allocation2 + $0xd7] sm:$0xff]
      %v3161 = vld [vmem:[#allocation2 + $0xdf] sm:$0xff]
      %v3162 = vld [vmem:[#allocation2 + $0xe7] sm:$0xff]
      %v3163 = vld [vmem:[#allocation2 + $0xef] sm:$0xff]
      %v3164 = vld [vmem:[#allocation2 + $0xf7] sm:$0xff]
      %v3165 = vld [vmem:[#allocation2 + $0xff] sm:$0xff]
      %v3166 = vld [vmem:[#allocation2 + $0x107] sm:$0xff]
      %v3167 = vld [vmem:[#allocation2 + $0x10f] sm:$0xff]
      %v3168 = vsel %vm1029, %v3152, 0.0
      %v3169 = vsel %vm1030, %v3153, 0.0
      %v3170 = vsel %vm1031, %v3154, 0.0
      %v3171 = vsel %vm1032, %v3155, 0.0
      %v3172 = vsel %vm1033, %v3156, 0.0
      %v3173 = vsel %vm1034, %v3157, 0.0
      %v3174 = vsel %vm1035, %v3158, 0.0
      %v3175 = vsel %vm1036, %v3159, 0.0
      %v3176 = vsel %vm1037, %v3160, 0.0
      %v3177 = vsel %vm1038, %v3161, 0.0
      %v3178 = vsel %vm1039, %v3162, 0.0
      %v3179 = vsel %vm1040, %v3163, 0.0
      %v3180 = vsel %vm1041, %v3164, 0.0
      %v3181 = vsel %vm1042, %v3165, 0.0
      %v3182 = vsel %vm1043, %v3166, 0.0
      %v3183 = vsel %vm1044, %v3167, 0.0
      %v3184 = vpack.c.bf16 %v3169, %v3168
      %v3185 = vpack.c.bf16 %v3171, %v3170
      %v3186 = vpack.c.bf16 %v3173, %v3172
      %v3187 = vpack.c.bf16 %v3175, %v3174
      %v3188 = vpack.c.bf16 %v3177, %v3176
      %v3189 = vpack.c.bf16 %v3179, %v3178
      %v3190 = vpack.c.bf16 %v3181, %v3180
      %v3191 = vpack.c.bf16 %v3183, %v3182
      %v3192 = vld [vmem:[%s1599] sm:$0xf]
      %v3194 = vsel %vm266, %v3184, 0
      %v3197 = vsel %vm266, %v3185, 0
      %v3200 = vsel %vm266, %v3186, 0
      %v3203 = vsel %vm266, %v3187, 0
      %v3206 = vsel %vm266, %v3188, 0
      %v3209 = vsel %vm266, %v3189, 0
      %v3212 = vsel %vm266, %v3190, 0
      %v3215 = vsel %vm266, %v3191, 0
      %v3218 = vsel %vm1120, %v3192, 0
      %3220 = vmatprep.subr.bf16.mxu0 0
      %3221 = vmatpush1.bf16.msra.mxu0 %v3218
      %3222 = vmatprep.subr.bf16.mxu0 0
      %3223 = vmatpush1.bf16.msra.mxu0 0
      %3224 = vmatprep.subr.bf16.mxu0 0
      %3225 = vmatpush1.bf16.msra.mxu0 0
      %3226 = vmatprep.subr.bf16.mxu0 0
      %3227 = vmatpush1.bf16.msra.mxu0 0
      %3228 = vmatprep.subr.bf16.mxu0 0
      %3229 = vmatpush1.bf16.msra.mxu0 0
      %3230 = vmatprep.subr.bf16.mxu0 0
      %3231 = vmatpush1.bf16.msra.mxu0 0
      %3232 = vmatprep.subr.bf16.mxu0 0
      %3233 = vmatpush1.bf16.msra.mxu0 0
      %3234 = vmatprep.subr.bf16.mxu0 0
      %3235 = vmatpush1.bf16.msra.mxu0 0
      %3236 = vmatprep.subr.bf16.mxu0 0
      %3237 = vmatpush1.bf16.msra.mxu0 0
      %3238 = vmatprep.subr.bf16.mxu0 0
      %3239 = vmatpush1.bf16.msra.mxu0 0
      %3240 = vmatprep.subr.bf16.mxu0 0
      %3241 = vmatpush1.bf16.msra.mxu0 0
      %3242 = vmatprep.subr.bf16.mxu0 0
      %3243 = vmatpush1.bf16.msra.mxu0 0
      %3244 = vmatprep.subr.bf16.mxu0 0
      %3245 = vmatpush1.bf16.msra.mxu0 0
      %3246 = vmatprep.subr.bf16.mxu0 0
      %3247 = vmatpush1.bf16.msra.mxu0 0
      %3248 = vmatprep.subr.bf16.mxu0 0
      %3249 = vmatpush1.bf16.msra.mxu0 0
      %3250 = vmatprep.subr.bf16.mxu0 0
      %3251 = vmatpush1.bf16.msra.mxu0 0
      %3252 = vmatprep.mubr.bf16.mxu0 0
      %3253 = vmatmul.mubr.bf16.gmra.mrb[0].mxu0 %v3194
      %v3254 = vpop.f32.mrb[0].mxu0
      %v3255 = vadd.f32 0.0, %v3254
      %v3256 = vpop.f32.mrb[0].mxu0
      %v3257 = vpop.f32.mrb[0].mxu0
      %v3258 = vadd.f32 0.0, %v3257
      %v3259 = vpop.f32.mrb[0].mxu0
      %3260 = vmatprep.mubr.bf16.mxu0 0
      %3261 = vmatmul.mubr.bf16.gmra.mrb[0].mxu0 %v3197
      %v3262 = vpop.f32.mrb[0].mxu0
      %v3263 = vadd.f32 0.0, %v3262
      %v3264 = vpop.f32.mrb[0].mxu0
      %v3265 = vpop.f32.mrb[0].mxu0
      %v3266 = vadd.f32 0.0, %v3265
      %v3267 = vpop.f32.mrb[0].mxu0
      %3268 = vmatprep.mubr.bf16.mxu0 0
      %3269 = vmatmul.mubr.bf16.gmra.mrb[0].mxu0 %v3200
      %v3270 = vpop.f32.mrb[0].mxu0
      %v3271 = vadd.f32 0.0, %v3270
      %v3272 = vpop.f32.mrb[0].mxu0
      %v3273 = vpop.f32.mrb[0].mxu0
      %v3274 = vadd.f32 0.0, %v3273
      %v3275 = vpop.f32.mrb[0].mxu0
      %3276 = vmatprep.mubr.bf16.mxu0 0
      %3277 = vmatmul.mubr.bf16.gmra.mrb[0].mxu0 %v3203
      %v3278 = vpop.f32.mrb[0].mxu0
      %v3279 = vadd.f32 0.0, %v3278
      %v3280 = vpop.f32.mrb[0].mxu0
      %v3281 = vpop.f32.mrb[0].mxu0
      %v3282 = vadd.f32 0.0, %v3281
      %v3283 = vpop.f32.mrb[0].mxu0
      %3284 = vmatprep.mubr.bf16.mxu0 0
      %3285 = vmatmul.mubr.bf16.gmra.mrb[0].mxu0 %v3206
      %v3286 = vpop.f32.mrb[0].mxu0
      %v3287 = vadd.f32 0.0, %v3286
      %v3288 = vpop.f32.mrb[0].mxu0
      %v3289 = vpop.f32.mrb[0].mxu0
      %v3290 = vadd.f32 0.0, %v3289
      %v3291 = vpop.f32.mrb[0].mxu0
      %3292 = vmatprep.mubr.bf16.mxu0 0
      %3293 = vmatmul.mubr.bf16.gmra.mrb[0].mxu0 %v3209
      %v3294 = vpop.f32.mrb[0].mxu0
      %v3295 = vadd.f32 0.0, %v3294
      %v3296 = vpop.f32.mrb[0].mxu0
      %v3297 = vpop.f32.mrb[0].mxu0
      %v3298 = vadd.f32 0.0, %v3297
      %v3299 = vpop.f32.mrb[0].mxu0
      %3300 = vmatprep.mubr.bf16.mxu0 0
      %3301 = vmatmul.mubr.bf16.gmra.mrb[0].mxu0 %v3212
      %v3302 = vpop.f32.mrb[0].mxu0
      %v3303 = vadd.f32 0.0, %v3302
      %v3304 = vpop.f32.mrb[0].mxu0
      %v3305 = vpop.f32.mrb[0].mxu0
      %v3306 = vadd.f32 0.0, %v3305
      %v3307 = vpop.f32.mrb[0].mxu0
      %3308 = vmatprep.mubr.bf16.mxu0 0
      %3309 = vmatmul.mubr.bf16.gmra.mrb[0].mxu0 %v3215
      %v3310 = vpop.f32.mrb[0].mxu0
      %v3311 = vadd.f32 0.0, %v3310
      %v3312 = vpop.f32.mrb[0].mxu0
      %v3313 = vpop.f32.mrb[0].mxu0
      %v3314 = vadd.f32 0.0, %v3313
      %v3315 = vpop.f32.mrb[0].mxu0
      %3316 = vdwg.mxu0
      %v3317 = vadd.f32 %v3136, %v3255
      %v3318 = vadd.f32 %v3137, %v3258
      %v3319 = vadd.f32 %v3138, %v3263
      %v3320 = vadd.f32 %v3139, %v3266
      %v3321 = vadd.f32 %v3140, %v3271
      %v3322 = vadd.f32 %v3141, %v3274
      %v3323 = vadd.f32 %v3142, %v3279
      %v3324 = vadd.f32 %v3143, %v3282
      %v3325 = vadd.f32 %v3144, %v3287
      %v3326 = vadd.f32 %v3145, %v3290
      %v3327 = vadd.f32 %v3146, %v3295
      %v3328 = vadd.f32 %v3147, %v3298
      %v3329 = vadd.f32 %v3148, %v3303
      %v3330 = vadd.f32 %v3149, %v3306
      %v3331 = vadd.f32 %v3150, %v3311
      %v3332 = vadd.f32 %v3151, %v3314
      %v3333 = vld [vmem:[#allocation2 + $0x98] sm:$0xff]
      %v3334 = vld [vmem:[#allocation2 + $0xa0] sm:$0xff]
      %v3335 = vld [vmem:[#allocation2 + $0xa8] sm:$0xff]
      %v3336 = vld [vmem:[#allocation2 + $0xb0] sm:$0xff]
      %v3337 = vld [vmem:[#allocation2 + $0xb8] sm:$0xff]
      %v3338 = vld [vmem:[#allocation2 + $0xc0] sm:$0xff]
      %v3339 = vld [vmem:[#allocation2 + $0xc8] sm:$0xff]
      %v3340 = vld [vmem:[#allocation2 + $0xd0] sm:$0xff]
      %v3341 = vld [vmem:[#allocation2 + $0xd8] sm:$0xff]
      %v3342 = vld [vmem:[#allocation2 + $0xe0] sm:$0xff]
      %v3343 = vld [vmem:[#allocation2 + $0xe8] sm:$0xff]
      %v3344 = vld [vmem:[#allocation2 + $0xf0] sm:$0xff]
      %v3345 = vld [vmem:[#allocation2 + $0xf8] sm:$0xff]
      %v3346 = vld [vmem:[#allocation2 + $0x100] sm:$0xff]
      %v3347 = vld [vmem:[#allocation2 + $0x108] sm:$0xff]
      %v3348 = vld [vmem:[#allocation2 + $0x110] sm:$0xff]
      %v3349 = vpack.c.bf16 %v3334, %v3333
      %v3350 = vpack.c.bf16 %v3336, %v3335
      %v3351 = vpack.c.bf16 %v3338, %v3337
      %v3352 = vpack.c.bf16 %v3340, %v3339
      %v3353 = vpack.c.bf16 %v3342, %v3341
      %v3354 = vpack.c.bf16 %v3344, %v3343
      %v3355 = vpack.c.bf16 %v3346, %v3345
      %v3356 = vpack.c.bf16 %v3348, %v3347
      %v3357 = vld [vmem:[%s1765] sm:$0xf]
      %v3359 = vsel %vm266, %v3349, 0
      %v3362 = vsel %vm266, %v3350, 0
      %v3365 = vsel %vm266, %v3351, 0
      %v3368 = vsel %vm266, %v3352, 0
      %v3371 = vsel %vm266, %v3353, 0
      %v3374 = vsel %vm266, %v3354, 0
      %v3377 = vsel %vm266, %v3355, 0
      %v3380 = vsel %vm266, %v3356, 0
      %v3383 = vsel %vm1120, %v3357, 0
      %3385 = vmatprep.subr.bf16.mxu0 0
      %3386 = vmatpush1.bf16.msra.mxu0 %v3383
      %3387 = vmatprep.subr.bf16.mxu0 0
      %3388 = vmatpush1.bf16.msra.mxu0 0
      %3389 = vmatprep.subr.bf16.mxu0 0
      %3390 = vmatpush1.bf16.msra.mxu0 0
      %3391 = vmatprep.subr.bf16.mxu0 0
      %3392 = vmatpush1.bf16.msra.mxu0 0
      %3393 = vmatprep.subr.bf16.mxu0 0
      %3394 = vmatpush1.bf16.msra.mxu0 0
      %3395 = vmatprep.subr.bf16.mxu0 0
      %3396 = vmatpush1.bf16.msra.mxu0 0
      %3397 = vmatprep.subr.bf16.mxu0 0
      %3398 = vmatpush1.bf16.msra.mxu0 0
      %3399 = vmatprep.subr.bf16.mxu0 0
      %3400 = vmatpush1.bf16.msra.mxu0 0
      %3401 = vmatprep.subr.bf16.mxu0 0
      %3402 = vmatpush1.bf16.msra.mxu0 0
      %3403 = vmatprep.subr.bf16.mxu0 0
      %3404 = vmatpush1.bf16.msra.mxu0 0
      %3405 = vmatprep.subr.bf16.mxu0 0
      %3406 = vmatpush1.bf16.msra.mxu0 0
      %3407 = vmatprep.subr.bf16.mxu0 0
      %3408 = vmatpush1.bf16.msra.mxu0 0
      %3409 = vmatprep.subr.bf16.mxu0 0
      %3410 = vmatpush1.bf16.msra.mxu0 0
      %3411 = vmatprep.subr.bf16.mxu0 0
      %3412 = vmatpush1.bf16.msra.mxu0 0
      %3413 = vmatprep.subr.bf16.mxu0 0
      %3414 = vmatpush1.bf16.msra.mxu0 0
      %3415 = vmatprep.subr.bf16.mxu0 0
      %3416 = vmatpush1.bf16.msra.mxu0 0
      %3417 = vmatprep.mubr.bf16.mxu0 0
      %3418 = vmatmul.mubr.bf16.gmra.mrb[0].mxu0 %v3359
      %v3419 = vpop.f32.mrb[0].mxu0
      %v3420 = vadd.f32 0.0, %v3419
      %v3421 = vpop.f32.mrb[0].mxu0
      %v3422 = vpop.f32.mrb[0].mxu0
      %v3423 = vadd.f32 0.0, %v3422
      %v3424 = vpop.f32.mrb[0].mxu0
      %3425 = vmatprep.mubr.bf16.mxu0 0
      %3426 = vmatmul.mubr.bf16.gmra.mrb[0].mxu0 %v3362
      %v3427 = vpop.f32.mrb[0].mxu0
      %v3428 = vadd.f32 0.0, %v3427
      %v3429 = vpop.f32.mrb[0].mxu0
      %v3430 = vpop.f32.mrb[0].mxu0
      %v3431 = vadd.f32 0.0, %v3430
      %v3432 = vpop.f32.mrb[0].mxu0
      %3433 = vmatprep.mubr.bf16.mxu0 0
      %3434 = vmatmul.mubr.bf16.gmra.mrb[0].mxu0 %v3365
      %v3435 = vpop.f32.mrb[0].mxu0
      %v3436 = vadd.f32 0.0, %v3435
      %v3437 = vpop.f32.mrb[0].mxu0
      %v3438 = vpop.f32.mrb[0].mxu0
      %v3439 = vadd.f32 0.0, %v3438
      %v3440 = vpop.f32.mrb[0].mxu0
      %3441 = vmatprep.mubr.bf16.mxu0 0
      %3442 = vmatmul.mubr.bf16.gmra.mrb[0].mxu0 %v3368
      %v3443 = vpop.f32.mrb[0].mxu0
      %v3444 = vadd.f32 0.0, %v3443
      %v3445 = vpop.f32.mrb[0].mxu0
      %v3446 = vpop.f32.mrb[0].mxu0
      %v3447 = vadd.f32 0.0, %v3446
      %v3448 = vpop.f32.mrb[0].mxu0
      %3449 = vmatprep.mubr.bf16.mxu0 0
      %3450 = vmatmul.mubr.bf16.gmra.mrb[0].mxu0 %v3371
      %v3451 = vpop.f32.mrb[0].mxu0
      %v3452 = vadd.f32 0.0, %v3451
      %v3453 = vpop.f32.mrb[0].mxu0
      %v3454 = vpop.f32.mrb[0].mxu0
      %v3455 = vadd.f32 0.0, %v3454
      %v3456 = vpop.f32.mrb[0].mxu0
      %3457 = vmatprep.mubr.bf16.mxu0 0
      %3458 = vmatmul.mubr.bf16.gmra.mrb[0].mxu0 %v3374
      %v3459 = vpop.f32.mrb[0].mxu0
      %v3460 = vadd.f32 0.0, %v3459
      %v3461 = vpop.f32.mrb[0].mxu0
      %v3462 = vpop.f32.mrb[0].mxu0
      %v3463 = vadd.f32 0.0, %v3462
      %v3464 = vpop.f32.mrb[0].mxu0
      %3465 = vmatprep.mubr.bf16.mxu0 0
      %3466 = vmatmul.mubr.bf16.gmra.mrb[0].mxu0 %v3377
      %v3467 = vpop.f32.mrb[0].mxu0
      %v3468 = vadd.f32 0.0, %v3467
      %v3469 = vpop.f32.mrb[0].mxu0
      %v3470 = vpop.f32.mrb[0].mxu0
      %v3471 = vadd.f32 0.0, %v3470
      %v3472 = vpop.f32.mrb[0].mxu0
      %3473 = vmatprep.mubr.bf16.mxu0 0
      %3474 = vmatmul.mubr.bf16.gmra.mrb[0].mxu0 %v3380
      %v3475 = vpop.f32.mrb[0].mxu0
      %v3476 = vadd.f32 0.0, %v3475
      %v3477 = vpop.f32.mrb[0].mxu0
      %v3478 = vpop.f32.mrb[0].mxu0
      %v3479 = vadd.f32 0.0, %v3478
      %v3480 = vpop.f32.mrb[0].mxu0
      %3481 = vdwg.mxu0
      %v3482 = vadd.f32 %v3317, %v3420
      %v3483 = vadd.f32 %v3318, %v3423
      %v3484 = vadd.f32 %v3319, %v3428
      %v3485 = vadd.f32 %v3320, %v3431
      %v3486 = vadd.f32 %v3321, %v3436
      %v3487 = vadd.f32 %v3322, %v3439
      %v3488 = vadd.f32 %v3323, %v3444
      %v3489 = vadd.f32 %v3324, %v3447
      %v3490 = vadd.f32 %v3325, %v3452
      %v3491 = vadd.f32 %v3326, %v3455
      %v3492 = vadd.f32 %v3327, %v3460
      %v3493 = vadd.f32 %v3328, %v3463
      %v3494 = vadd.f32 %v3329, %v3468
      %v3495 = vadd.f32 %v3330, %v3471
      %v3496 = vadd.f32 %v3331, %v3476
      %v3497 = vadd.f32 %v3332, %v3479
      %v3498 = vld [vmem:[#allocation2 + $0x99] sm:$0xff]
      %v3499 = vld [vmem:[#allocation2 + $0xa1] sm:$0xff]
      %v3500 = vld [vmem:[#allocation2 + $0xa9] sm:$0xff]
      %v3501 = vld [vmem:[#allocation2 + $0xb1] sm:$0xff]
      %v3502 = vld [vmem:[#allocation2 + $0xb9] sm:$0xff]
      %v3503 = vld [vmem:[#allocation2 + $0xc1] sm:$0xff]
      %v3504 = vld [vmem:[#allocation2 + $0xc9] sm:$0xff]
      %v3505 = vld [vmem:[#allocation2 + $0xd1] sm:$0xff]
      %v3506 = vld [vmem:[#allocation2 + $0xd9] sm:$0xff]
      %v3507 = vld [vmem:[#allocation2 + $0xe1] sm:$0xff]
      %v3508 = vld [vmem:[#allocation2 + $0xe9] sm:$0xff]
      %v3509 = vld [vmem:[#allocation2 + $0xf1] sm:$0xff]
      %v3510 = vld [vmem:[#allocation2 + $0xf9] sm:$0xff]
      %v3511 = vld [vmem:[#allocation2 + $0x101] sm:$0xff]
      %v3512 = vld [vmem:[#allocation2 + $0x109] sm:$0xff]
      %v3513 = vld [vmem:[#allocation2 + $0x111] sm:$0xff]
      %v3514 = vsel %vm1377, %v3498, 0.0
      %v3515 = vsel %vm1378, %v3499, 0.0
      %v3516 = vsel %vm1379, %v3500, 0.0
      %v3517 = vsel %vm1380, %v3501, 0.0
      %v3518 = vsel %vm1381, %v3502, 0.0
      %v3519 = vsel %vm1382, %v3503, 0.0
      %v3520 = vsel %vm1383, %v3504, 0.0
      %v3521 = vsel %vm1384, %v3505, 0.0
      %v3522 = vsel %vm1385, %v3506, 0.0
      %v3523 = vsel %vm1386, %v3507, 0.0
      %v3524 = vsel %vm1387, %v3508, 0.0
      %v3525 = vsel %vm1388, %v3509, 0.0
      %v3526 = vsel %vm1389, %v3510, 0.0
      %v3527 = vsel %vm1390, %v3511, 0.0
      %v3528 = vsel %vm1391, %v3512, 0.0
      %v3529 = vsel %vm1392, %v3513, 0.0
      %v3530 = vpack.c.bf16 %v3515, %v3514
      %v3531 = vpack.c.bf16 %v3517, %v3516
      %v3532 = vpack.c.bf16 %v3519, %v3518
      %v3533 = vpack.c.bf16 %v3521, %v3520
      %v3534 = vpack.c.bf16 %v3523, %v3522
      %v3535 = vpack.c.bf16 %v3525, %v3524
      %v3536 = vpack.c.bf16 %v3527, %v3526
      %v3537 = vpack.c.bf16 %v3529, %v3528
      %v3538 = vld [vmem:[%s1947] sm:$0xf]
      %v3540 = vsel %vm266, %v3530, 0
      %v3543 = vsel %vm266, %v3531, 0
      %v3546 = vsel %vm266, %v3532, 0
      %v3549 = vsel %vm266, %v3533, 0
      %v3552 = vsel %vm266, %v3534, 0
      %v3555 = vsel %vm266, %v3535, 0
      %v3558 = vsel %vm266, %v3536, 0
      %v3561 = vsel %vm266, %v3537, 0
      %v3564 = vsel %vm1120, %v3538, 0
      %3566 = vmatprep.subr.bf16.mxu0 0
      %3567 = vmatpush1.bf16.msra.mxu0 %v3564
      %3568 = vmatprep.subr.bf16.mxu0 0
      %3569 = vmatpush1.bf16.msra.mxu0 0
      %3570 = vmatprep.subr.bf16.mxu0 0
      %3571 = vmatpush1.bf16.msra.mxu0 0
      %3572 = vmatprep.subr.bf16.mxu0 0
      %3573 = vmatpush1.bf16.msra.mxu0 0
      %3574 = vmatprep.subr.bf16.mxu0 0
      %3575 = vmatpush1.bf16.msra.mxu0 0
      %3576 = vmatprep.subr.bf16.mxu0 0
      %3577 = vmatpush1.bf16.msra.mxu0 0
      %3578 = vmatprep.subr.bf16.mxu0 0
      %3579 = vmatpush1.bf16.msra.mxu0 0
      %3580 = vmatprep.subr.bf16.mxu0 0
      %3581 = vmatpush1.bf16.msra.mxu0 0
      %3582 = vmatprep.subr.bf16.mxu0 0
      %3583 = vmatpush1.bf16.msra.mxu0 0
      %3584 = vmatprep.subr.bf16.mxu0 0
      %3585 = vmatpush1.bf16.msra.mxu0 0
      %3586 = vmatprep.subr.bf16.mxu0 0
      %3587 = vmatpush1.bf16.msra.mxu0 0
      %3588 = vmatprep.subr.bf16.mxu0 0
      %3589 = vmatpush1.bf16.msra.mxu0 0
      %3590 = vmatprep.subr.bf16.mxu0 0
      %3591 = vmatpush1.bf16.msra.mxu0 0
      %3592 = vmatprep.subr.bf16.mxu0 0
      %3593 = vmatpush1.bf16.msra.mxu0 0
      %3594 = vmatprep.subr.bf16.mxu0 0
      %3595 = vmatpush1.bf16.msra.mxu0 0
      %3596 = vmatprep.subr.bf16.mxu0 0
      %3597 = vmatpush1.bf16.msra.mxu0 0
      %3598 = vmatprep.mubr.bf16.mxu0 0
      %3599 = vmatmul.mubr.bf16.gmra.mrb[0].mxu0 %v3540
      %v3600 = vpop.f32.mrb[0].mxu0
      %v3601 = vadd.f32 0.0, %v3600
      %v3602 = vpop.f32.mrb[0].mxu0
      %v3603 = vpop.f32.mrb[0].mxu0
      %v3604 = vadd.f32 0.0, %v3603
      %v3605 = vpop.f32.mrb[0].mxu0
      %3606 = vmatprep.mubr.bf16.mxu0 0
      %3607 = vmatmul.mubr.bf16.gmra.mrb[0].mxu0 %v3543
      %v3608 = vpop.f32.mrb[0].mxu0
      %v3609 = vadd.f32 0.0, %v3608
      %v3610 = vpop.f32.mrb[0].mxu0
      %v3611 = vpop.f32.mrb[0].mxu0
      %v3612 = vadd.f32 0.0, %v3611
      %v3613 = vpop.f32.mrb[0].mxu0
      %3614 = vmatprep.mubr.bf16.mxu0 0
      %3615 = vmatmul.mubr.bf16.gmra.mrb[0].mxu0 %v3546
      %v3616 = vpop.f32.mrb[0].mxu0
      %v3617 = vadd.f32 0.0, %v3616
      %v3618 = vpop.f32.mrb[0].mxu0
      %v3619 = vpop.f32.mrb[0].mxu0
      %v3620 = vadd.f32 0.0, %v3619
      %v3621 = vpop.f32.mrb[0].mxu0
      %3622 = vmatprep.mubr.bf16.mxu0 0
      %3623 = vmatmul.mubr.bf16.gmra.mrb[0].mxu0 %v3549
      %v3624 = vpop.f32.mrb[0].mxu0
      %v3625 = vadd.f32 0.0, %v3624
      %v3626 = vpop.f32.mrb[0].mxu0
      %v3627 = vpop.f32.mrb[0].mxu0
      %v3628 = vadd.f32 0.0, %v3627
      %v3629 = vpop.f32.mrb[0].mxu0
      %3630 = vmatprep.mubr.bf16.mxu0 0
      %3631 = vmatmul.mubr.bf16.gmra.mrb[0].mxu0 %v3552
      %v3632 = vpop.f32.mrb[0].mxu0
      %v3633 = vadd.f32 0.0, %v3632
      %v3634 = vpop.f32.mrb[0].mxu0
      %v3635 = vpop.f32.mrb[0].mxu0
      %v3636 = vadd.f32 0.0, %v3635
      %v3637 = vpop.f32.mrb[0].mxu0
      %3638 = vmatprep.mubr.bf16.mxu0 0
      %3639 = vmatmul.mubr.bf16.gmra.mrb[0].mxu0 %v3555
      %v3640 = vpop.f32.mrb[0].mxu0
      %v3641 = vadd.f32 0.0, %v3640
      %v3642 = vpop.f32.mrb[0].mxu0
      %v3643 = vpop.f32.mrb[0].mxu0
      %v3644 = vadd.f32 0.0, %v3643
      %v3645 = vpop.f32.mrb[0].mxu0
      %3646 = vmatprep.mubr.bf16.mxu0 0
      %3647 = vmatmul.mubr.bf16.gmra.mrb[0].mxu0 %v3558
      %v3648 = vpop.f32.mrb[0].mxu0
      %v3649 = vadd.f32 0.0, %v3648
      %v3650 = vpop.f32.mrb[0].mxu0
      %v3651 = vpop.f32.mrb[0].mxu0
      %v3652 = vadd.f32 0.0, %v3651
      %v3653 = vpop.f32.mrb[0].mxu0
      %3654 = vmatprep.mubr.bf16.mxu0 0
      %3655 = vmatmul.mubr.bf16.gmra.mrb[0].mxu0 %v3561
      %v3656 = vpop.f32.mrb[0].mxu0
      %v3657 = vadd.f32 0.0, %v3656
      %v3658 = vpop.f32.mrb[0].mxu0
      %v3659 = vpop.f32.mrb[0].mxu0
      %v3660 = vadd.f32 0.0, %v3659
      %v3661 = vpop.f32.mrb[0].mxu0
      %3662 = vdwg.mxu0
      %v3663 = vadd.f32 %v3482, %v3601
      %v3664 = vadd.f32 %v3483, %v3604
      %v3665 = vadd.f32 %v3484, %v3609
      %v3666 = vadd.f32 %v3485, %v3612
      %v3667 = vadd.f32 %v3486, %v3617
      %v3668 = vadd.f32 %v3487, %v3620
      %v3669 = vadd.f32 %v3488, %v3625
      %v3670 = vadd.f32 %v3489, %v3628
      %v3671 = vadd.f32 %v3490, %v3633
      %v3672 = vadd.f32 %v3491, %v3636
      %v3673 = vadd.f32 %v3492, %v3641
      %v3674 = vadd.f32 %v3493, %v3644
      %v3675 = vadd.f32 %v3494, %v3649
      %v3676 = vadd.f32 %v3495, %v3652
      %v3677 = vadd.f32 %v3496, %v3657
      %v3678 = vadd.f32 %v3497, %v3660
      %v3679 = vld [vmem:[#allocation2 + $0xa7] sm:$0xff]
      %v3680 = vld [vmem:[#allocation2 + $0xaf] sm:$0xff]
      %v3681 = vld [vmem:[#allocation2 + $0xb7] sm:$0xff]
      %v3682 = vld [vmem:[#allocation2 + $0xbf] sm:$0xff]
      %v3683 = vld [vmem:[#allocation2 + $0xc7] sm:$0xff]
      %v3684 = vld [vmem:[#allocation2 + $0xcf] sm:$0xff]
      %v3685 = vld [vmem:[#allocation2 + $0xd7] sm:$0xff]
      %v3686 = vld [vmem:[#allocation2 + $0xdf] sm:$0xff]
      %v3687 = vld [vmem:[#allocation2 + $0xe7] sm:$0xff]
      %v3688 = vld [vmem:[#allocation2 + $0xef] sm:$0xff]
      %v3689 = vld [vmem:[#allocation2 + $0xf7] sm:$0xff]
      %v3690 = vld [vmem:[#allocation2 + $0xff] sm:$0xff]
      %v3691 = vld [vmem:[#allocation2 + $0x107] sm:$0xff]
      %v3692 = vld [vmem:[#allocation2 + $0x10f] sm:$0xff]
      %v3693 = vld [vmem:[#allocation2 + $0x117] sm:$0xff]
      %v3694 = vld [vmem:[#allocation2 + $0x11f] sm:$0xff]
      %v3695 = vsel %vm1029, %v3679, 0.0
      %v3696 = vsel %vm1030, %v3680, 0.0
      %v3697 = vsel %vm1031, %v3681, 0.0
      %v3698 = vsel %vm1032, %v3682, 0.0
      %v3699 = vsel %vm1033, %v3683, 0.0
      %v3700 = vsel %vm1034, %v3684, 0.0
      %v3701 = vsel %vm1035, %v3685, 0.0
      %v3702 = vsel %vm1036, %v3686, 0.0
      %v3703 = vsel %vm1037, %v3687, 0.0
      %v3704 = vsel %vm1038, %v3688, 0.0
      %v3705 = vsel %vm1039, %v3689, 0.0
      %v3706 = vsel %vm1040, %v3690, 0.0
      %v3707 = vsel %vm1041, %v3691, 0.0
      %v3708 = vsel %vm1042, %v3692, 0.0
      %v3709 = vsel %vm1043, %v3693, 0.0
      %v3710 = vsel %vm1044, %v3694, 0.0
      %v3711 = vpack.c.bf16 %v3696, %v3695
      %v3712 = vpack.c.bf16 %v3698, %v3697
      %v3713 = vpack.c.bf16 %v3700, %v3699
      %v3714 = vpack.c.bf16 %v3702, %v3701
      %v3715 = vpack.c.bf16 %v3704, %v3703
      %v3716 = vpack.c.bf16 %v3706, %v3705
      %v3717 = vpack.c.bf16 %v3708, %v3707
      %v3718 = vpack.c.bf16 %v3710, %v3709
      %v3719 = vld [vmem:[%s2129] sm:$0xf]
      %v3721 = vsel %vm266, %v3711, 0
      %v3724 = vsel %vm266, %v3712, 0
      %v3727 = vsel %vm266, %v3713, 0
      %v3730 = vsel %vm266, %v3714, 0
      %v3733 = vsel %vm266, %v3715, 0
      %v3736 = vsel %vm266, %v3716, 0
      %v3739 = vsel %vm266, %v3717, 0
      %v3742 = vsel %vm266, %v3718, 0
      %v3745 = vsel %vm1120, %v3719, 0
      %3747 = vmatprep.subr.bf16.mxu0 0
      %3748 = vmatpush1.bf16.msra.mxu0 %v3745
      %3749 = vmatprep.subr.bf16.mxu0 0
      %3750 = vmatpush1.bf16.msra.mxu0 0
      %3751 = vmatprep.subr.bf16.mxu0 0
      %3752 = vmatpush1.bf16.msra.mxu0 0
      %3753 = vmatprep.subr.bf16.mxu0 0
      %3754 = vmatpush1.bf16.msra.mxu0 0
      %3755 = vmatprep.subr.bf16.mxu0 0
      %3756 = vmatpush1.bf16.msra.mxu0 0
      %3757 = vmatprep.subr.bf16.mxu0 0
      %3758 = vmatpush1.bf16.msra.mxu0 0
      %3759 = vmatprep.subr.bf16.mxu0 0
      %3760 = vmatpush1.bf16.msra.mxu0 0
      %3761 = vmatprep.subr.bf16.mxu0 0
      %3762 = vmatpush1.bf16.msra.mxu0 0
      %3763 = vmatprep.subr.bf16.mxu0 0
      %3764 = vmatpush1.bf16.msra.mxu0 0
      %3765 = vmatprep.subr.bf16.mxu0 0
      %3766 = vmatpush1.bf16.msra.mxu0 0
      %3767 = vmatprep.subr.bf16.mxu0 0
      %3768 = vmatpush1.bf16.msra.mxu0 0
      %3769 = vmatprep.subr.bf16.mxu0 0
      %3770 = vmatpush1.bf16.msra.mxu0 0
      %3771 = vmatprep.subr.bf16.mxu0 0
      %3772 = vmatpush1.bf16.msra.mxu0 0
      %3773 = vmatprep.subr.bf16.mxu0 0
      %3774 = vmatpush1.bf16.msra.mxu0 0
      %3775 = vmatprep.subr.bf16.mxu0 0
      %3776 = vmatpush1.bf16.msra.mxu0 0
      %3777 = vmatprep.subr.bf16.mxu0 0
      %3778 = vmatpush1.bf16.msra.mxu0 0
      %3779 = vmatprep.mubr.bf16.mxu0 0
      %3780 = vmatmul.mubr.bf16.gmra.mrb[0].mxu0 %v3721
      %v3781 = vpop.f32.mrb[0].mxu0
      %v3782 = vadd.f32 0.0, %v3781
      %v3783 = vpop.f32.mrb[0].mxu0
      %v3784 = vpop.f32.mrb[0].mxu0
      %v3785 = vadd.f32 0.0, %v3784
      %v3786 = vpop.f32.mrb[0].mxu0
      %3787 = vmatprep.mubr.bf16.mxu0 0
      %3788 = vmatmul.mubr.bf16.gmra.mrb[0].mxu0 %v3724
      %v3789 = vpop.f32.mrb[0].mxu0
      %v3790 = vadd.f32 0.0, %v3789
      %v3791 = vpop.f32.mrb[0].mxu0
      %v3792 = vpop.f32.mrb[0].mxu0
      %v3793 = vadd.f32 0.0, %v3792
      %v3794 = vpop.f32.mrb[0].mxu0
      %3795 = vmatprep.mubr.bf16.mxu0 0
      %3796 = vmatmul.mubr.bf16.gmra.mrb[0].mxu0 %v3727
      %v3797 = vpop.f32.mrb[0].mxu0
      %v3798 = vadd.f32 0.0, %v3797
      %v3799 = vpop.f32.mrb[0].mxu0
      %v3800 = vpop.f32.mrb[0].mxu0
      %v3801 = vadd.f32 0.0, %v3800
      %v3802 = vpop.f32.mrb[0].mxu0
      %3803 = vmatprep.mubr.bf16.mxu0 0
      %3804 = vmatmul.mubr.bf16.gmra.mrb[0].mxu0 %v3730
      %v3805 = vpop.f32.mrb[0].mxu0
      %v3806 = vadd.f32 0.0, %v3805
      %v3807 = vpop.f32.mrb[0].mxu0
      %v3808 = vpop.f32.mrb[0].mxu0
      %v3809 = vadd.f32 0.0, %v3808
      %v3810 = vpop.f32.mrb[0].mxu0
      %3811 = vmatprep.mubr.bf16.mxu0 0
      %3812 = vmatmul.mubr.bf16.gmra.mrb[0].mxu0 %v3733
      %v3813 = vpop.f32.mrb[0].mxu0
      %v3814 = vadd.f32 0.0, %v3813
      %v3815 = vpop.f32.mrb[0].mxu0
      %v3816 = vpop.f32.mrb[0].mxu0
      %v3817 = vadd.f32 0.0, %v3816
      %v3818 = vpop.f32.mrb[0].mxu0
      %3819 = vmatprep.mubr.bf16.mxu0 0
      %3820 = vmatmul.mubr.bf16.gmra.mrb[0].mxu0 %v3736
      %v3821 = vpop.f32.mrb[0].mxu0
      %v3822 = vadd.f32 0.0, %v3821
      %v3823 = vpop.f32.mrb[0].mxu0
      %v3824 = vpop.f32.mrb[0].mxu0
      %v3825 = vadd.f32 0.0, %v3824
      %v3826 = vpop.f32.mrb[0].mxu0
      %3827 = vmatprep.mubr.bf16.mxu0 0
      %3828 = vmatmul.mubr.bf16.gmra.mrb[0].mxu0 %v3739
      %v3829 = vpop.f32.mrb[0].mxu0
      %v3830 = vadd.f32 0.0, %v3829
      %v3831 = vpop.f32.mrb[0].mxu0
      %v3832 = vpop.f32.mrb[0].mxu0
      %v3833 = vadd.f32 0.0, %v3832
      %v3834 = vpop.f32.mrb[0].mxu0
      %3835 = vmatprep.mubr.bf16.mxu0 0
      %3836 = vmatmul.mubr.bf16.gmra.mrb[0].mxu0 %v3742
      %v3837 = vpop.f32.mrb[0].mxu0
      %v3838 = vadd.f32 0.0, %v3837
      %v3839 = vpop.f32.mrb[0].mxu0
      %v3840 = vpop.f32.mrb[0].mxu0
      %v3841 = vadd.f32 0.0, %v3840
      %v3842 = vpop.f32.mrb[0].mxu0
      %3843 = vdwg.mxu0
      %v3844 = vadd.f32 %v3663, %v3782
      %v3845 = vadd.f32 %v3664, %v3785
      %v3846 = vadd.f32 %v3665, %v3790
      %v3847 = vadd.f32 %v3666, %v3793
      %v3848 = vadd.f32 %v3667, %v3798
      %v3849 = vadd.f32 %v3668, %v3801
      %v3850 = vadd.f32 %v3669, %v3806
      %v3851 = vadd.f32 %v3670, %v3809
      %v3852 = vadd.f32 %v3671, %v3814
      %v3853 = vadd.f32 %v3672, %v3817
      %v3854 = vadd.f32 %v3673, %v3822
      %v3855 = vadd.f32 %v3674, %v3825
      %v3856 = vadd.f32 %v3675, %v3830
      %v3857 = vadd.f32 %v3676, %v3833
      %v3858 = vadd.f32 %v3677, %v3838
      %v3859 = vadd.f32 %v3678, %v3841
      %v3860 = vld [vmem:[#allocation2 + $0xa8] sm:$0xff]
      %v3861 = vld [vmem:[#allocation2 + $0xb0] sm:$0xff]
      %v3862 = vld [vmem:[#allocation2 + $0xb8] sm:$0xff]
      %v3863 = vld [vmem:[#allocation2 + $0xc0] sm:$0xff]
      %v3864 = vld [vmem:[#allocation2 + $0xc8] sm:$0xff]
      %v3865 = vld [vmem:[#allocation2 + $0xd0] sm:$0xff]
      %v3866 = vld [vmem:[#allocation2 + $0xd8] sm:$0xff]
      %v3867 = vld [vmem:[#allocation2 + $0xe0] sm:$0xff]
      %v3868 = vld [vmem:[#allocation2 + $0xe8] sm:$0xff]
      %v3869 = vld [vmem:[#allocation2 + $0xf0] sm:$0xff]
      %v3870 = vld [vmem:[#allocation2 + $0xf8] sm:$0xff]
      %v3871 = vld [vmem:[#allocation2 + $0x100] sm:$0xff]
      %v3872 = vld [vmem:[#allocation2 + $0x108] sm:$0xff]
      %v3873 = vld [vmem:[#allocation2 + $0x110] sm:$0xff]
      %v3874 = vld [vmem:[#allocation2 + $0x118] sm:$0xff]
      %v3875 = vld [vmem:[#allocation2 + $0x120] sm:$0xff]
      %v3876 = vpack.c.bf16 %v3861, %v3860
      %v3877 = vpack.c.bf16 %v3863, %v3862
      %v3878 = vpack.c.bf16 %v3865, %v3864
      %v3879 = vpack.c.bf16 %v3867, %v3866
      %v3880 = vpack.c.bf16 %v3869, %v3868
      %v3881 = vpack.c.bf16 %v3871, %v3870
      %v3882 = vpack.c.bf16 %v3873, %v3872
      %v3883 = vpack.c.bf16 %v3875, %v3874
      %v3884 = vld [vmem:[%s2295] sm:$0xf]
      %v3886 = vsel %vm266, %v3876, 0
      %v3889 = vsel %vm266, %v3877, 0
      %v3892 = vsel %vm266, %v3878, 0
      %v3895 = vsel %vm266, %v3879, 0
      %v3898 = vsel %vm266, %v3880, 0
      %v3901 = vsel %vm266, %v3881, 0
      %v3904 = vsel %vm266, %v3882, 0
      %v3907 = vsel %vm266, %v3883, 0
      %v3910 = vsel %vm1120, %v3884, 0
      %3912 = vmatprep.subr.bf16.mxu0 0
      %3913 = vmatpush1.bf16.msra.mxu0 %v3910
      %3914 = vmatprep.subr.bf16.mxu0 0
      %3915 = vmatpush1.bf16.msra.mxu0 0
      %3916 = vmatprep.subr.bf16.mxu0 0
      %3917 = vmatpush1.bf16.msra.mxu0 0
      %3918 = vmatprep.subr.bf16.mxu0 0
      %3919 = vmatpush1.bf16.msra.mxu0 0
      %3920 = vmatprep.subr.bf16.mxu0 0
      %3921 = vmatpush1.bf16.msra.mxu0 0
      %3922 = vmatprep.subr.bf16.mxu0 0
      %3923 = vmatpush1.bf16.msra.mxu0 0
      %3924 = vmatprep.subr.bf16.mxu0 0
      %3925 = vmatpush1.bf16.msra.mxu0 0
      %3926 = vmatprep.subr.bf16.mxu0 0
      %3927 = vmatpush1.bf16.msra.mxu0 0
      %3928 = vmatprep.subr.bf16.mxu0 0
      %3929 = vmatpush1.bf16.msra.mxu0 0
      %3930 = vmatprep.subr.bf16.mxu0 0
      %3931 = vmatpush1.bf16.msra.mxu0 0
      %3932 = vmatprep.subr.bf16.mxu0 0
      %3933 = vmatpush1.bf16.msra.mxu0 0
      %3934 = vmatprep.subr.bf16.mxu0 0
      %3935 = vmatpush1.bf16.msra.mxu0 0
      %3936 = vmatprep.subr.bf16.mxu0 0
      %3937 = vmatpush1.bf16.msra.mxu0 0
      %3938 = vmatprep.subr.bf16.mxu0 0
      %3939 = vmatpush1.bf16.msra.mxu0 0
      %3940 = vmatprep.subr.bf16.mxu0 0
      %3941 = vmatpush1.bf16.msra.mxu0 0
      %3942 = vmatprep.subr.bf16.mxu0 0
      %3943 = vmatpush1.bf16.msra.mxu0 0
      %3944 = vmatprep.mubr.bf16.mxu0 0
      %3945 = vmatmul.mubr.bf16.gmra.mrb[0].mxu0 %v3886
      %v3946 = vpop.f32.mrb[0].mxu0
      %v3947 = vadd.f32 0.0, %v3946
      %v3948 = vpop.f32.mrb[0].mxu0
      %v3949 = vpop.f32.mrb[0].mxu0
      %v3950 = vadd.f32 0.0, %v3949
      %v3951 = vpop.f32.mrb[0].mxu0
      %3952 = vmatprep.mubr.bf16.mxu0 0
      %3953 = vmatmul.mubr.bf16.gmra.mrb[0].mxu0 %v3889
      %v3954 = vpop.f32.mrb[0].mxu0
      %v3955 = vadd.f32 0.0, %v3954
      %v3956 = vpop.f32.mrb[0].mxu0
      %v3957 = vpop.f32.mrb[0].mxu0
      %v3958 = vadd.f32 0.0, %v3957
      %v3959 = vpop.f32.mrb[0].mxu0
      %3960 = vmatprep.mubr.bf16.mxu0 0
      %3961 = vmatmul.mubr.bf16.gmra.mrb[0].mxu0 %v3892
      %v3962 = vpop.f32.mrb[0].mxu0
      %v3963 = vadd.f32 0.0, %v3962
      %v3964 = vpop.f32.mrb[0].mxu0
      %v3965 = vpop.f32.mrb[0].mxu0
      %v3966 = vadd.f32 0.0, %v3965
      %v3967 = vpop.f32.mrb[0].mxu0
      %3968 = vmatprep.mubr.bf16.mxu0 0
      %3969 = vmatmul.mubr.bf16.gmra.mrb[0].mxu0 %v3895
      %v3970 = vpop.f32.mrb[0].mxu0
      %v3971 = vadd.f32 0.0, %v3970
      %v3972 = vpop.f32.mrb[0].mxu0
      %v3973 = vpop.f32.mrb[0].mxu0
      %v3974 = vadd.f32 0.0, %v3973
      %v3975 = vpop.f32.mrb[0].mxu0
      %3976 = vmatprep.mubr.bf16.mxu0 0
      %3977 = vmatmul.mubr.bf16.gmra.mrb[0].mxu0 %v3898
      %v3978 = vpop.f32.mrb[0].mxu0
      %v3979 = vadd.f32 0.0, %v3978
      %v3980 = vpop.f32.mrb[0].mxu0
      %v3981 = vpop.f32.mrb[0].mxu0
      %v3982 = vadd.f32 0.0, %v3981
      %v3983 = vpop.f32.mrb[0].mxu0
      %3984 = vmatprep.mubr.bf16.mxu0 0
      %3985 = vmatmul.mubr.bf16.gmra.mrb[0].mxu0 %v3901
      %v3986 = vpop.f32.mrb[0].mxu0
      %v3987 = vadd.f32 0.0, %v3986
      %v3988 = vpop.f32.mrb[0].mxu0
      %v3989 = vpop.f32.mrb[0].mxu0
      %v3990 = vadd.f32 0.0, %v3989
      %v3991 = vpop.f32.mrb[0].mxu0
      %3992 = vmatprep.mubr.bf16.mxu0 0
      %3993 = vmatmul.mubr.bf16.gmra.mrb[0].mxu0 %v3904
      %v3994 = vpop.f32.mrb[0].mxu0
      %v3995 = vadd.f32 0.0, %v3994
      %v3996 = vpop.f32.mrb[0].mxu0
      %v3997 = vpop.f32.mrb[0].mxu0
      %v3998 = vadd.f32 0.0, %v3997
      %v3999 = vpop.f32.mrb[0].mxu0
      %4000 = vmatprep.mubr.bf16.mxu0 0
      %4001 = vmatmul.mubr.bf16.gmra.mrb[0].mxu0 %v3907
      %v4002 = vpop.f32.mrb[0].mxu0
      %v4003 = vadd.f32 0.0, %v4002
      %v4004 = vpop.f32.mrb[0].mxu0
      %v4005 = vpop.f32.mrb[0].mxu0
      %v4006 = vadd.f32 0.0, %v4005
      %v4007 = vpop.f32.mrb[0].mxu0
      %4008 = vdwg.mxu0
      %v4009 = vadd.f32 %v3844, %v3947
      %v4010 = vadd.f32 %v3845, %v3950
      %v4011 = vadd.f32 %v3846, %v3955
      %v4012 = vadd.f32 %v3847, %v3958
      %v4013 = vadd.f32 %v3848, %v3963
      %v4014 = vadd.f32 %v3849, %v3966
      %v4015 = vadd.f32 %v3850, %v3971
      %v4016 = vadd.f32 %v3851, %v3974
      %v4017 = vadd.f32 %v3852, %v3979
      %v4018 = vadd.f32 %v3853, %v3982
      %v4019 = vadd.f32 %v3854, %v3987
      %v4020 = vadd.f32 %v3855, %v3990
      %v4021 = vadd.f32 %v3856, %v3995
      %v4022 = vadd.f32 %v3857, %v3998
      %v4023 = vadd.f32 %v3858, %v4003
      %v4024 = vadd.f32 %v3859, %v4006
      %v4025 = vld [vmem:[#allocation2 + $0xa9] sm:$0xff]
      %v4026 = vld [vmem:[#allocation2 + $0xb1] sm:$0xff]
      %v4027 = vld [vmem:[#allocation2 + $0xb9] sm:$0xff]
      %v4028 = vld [vmem:[#allocation2 + $0xc1] sm:$0xff]
      %v4029 = vld [vmem:[#allocation2 + $0xc9] sm:$0xff]
      %v4030 = vld [vmem:[#allocation2 + $0xd1] sm:$0xff]
      %v4031 = vld [vmem:[#allocation2 + $0xd9] sm:$0xff]
      %v4032 = vld [vmem:[#allocation2 + $0xe1] sm:$0xff]
      %v4033 = vld [vmem:[#allocation2 + $0xe9] sm:$0xff]
      %v4034 = vld [vmem:[#allocation2 + $0xf1] sm:$0xff]
      %v4035 = vld [vmem:[#allocation2 + $0xf9] sm:$0xff]
      %v4036 = vld [vmem:[#allocation2 + $0x101] sm:$0xff]
      %v4037 = vld [vmem:[#allocation2 + $0x109] sm:$0xff]
      %v4038 = vld [vmem:[#allocation2 + $0x111] sm:$0xff]
      %v4039 = vld [vmem:[#allocation2 + $0x119] sm:$0xff]
      %v4040 = vld [vmem:[#allocation2 + $0x121] sm:$0xff]
      %v4041 = vsel %vm1377, %v4025, 0.0
      %v4042 = vsel %vm1378, %v4026, 0.0
      %v4043 = vsel %vm1379, %v4027, 0.0
      %v4044 = vsel %vm1380, %v4028, 0.0
      %v4045 = vsel %vm1381, %v4029, 0.0
      %v4046 = vsel %vm1382, %v4030, 0.0
      %v4047 = vsel %vm1383, %v4031, 0.0
      %v4048 = vsel %vm1384, %v4032, 0.0
      %v4049 = vsel %vm1385, %v4033, 0.0
      %v4050 = vsel %vm1386, %v4034, 0.0
      %v4051 = vsel %vm1387, %v4035, 0.0
      %v4052 = vsel %vm1388, %v4036, 0.0
      %v4053 = vsel %vm1389, %v4037, 0.0
      %v4054 = vsel %vm1390, %v4038, 0.0
      %v4055 = vsel %vm1391, %v4039, 0.0
      %v4056 = vsel %vm1392, %v4040, 0.0
      %v4057 = vpack.c.bf16 %v4042, %v4041
      %v4058 = vpack.c.bf16 %v4044, %v4043
      %v4059 = vpack.c.bf16 %v4046, %v4045
      %v4060 = vpack.c.bf16 %v4048, %v4047
      %v4061 = vpack.c.bf16 %v4050, %v4049
      %v4062 = vpack.c.bf16 %v4052, %v4051
      %v4063 = vpack.c.bf16 %v4054, %v4053
      %v4064 = vpack.c.bf16 %v4056, %v4055
      %v4065 = vld [vmem:[%s2477] sm:$0xf]
      %v4067 = vsel %vm266, %v4057, 0
      %v4070 = vsel %vm266, %v4058, 0
      %v4073 = vsel %vm266, %v4059, 0
      %v4076 = vsel %vm266, %v4060, 0
      %v4079 = vsel %vm266, %v4061, 0
      %v4082 = vsel %vm266, %v4062, 0
      %v4085 = vsel %vm266, %v4063, 0
      %v4088 = vsel %vm266, %v4064, 0
      %v4091 = vsel %vm1120, %v4065, 0
      %4093 = vmatprep.subr.bf16.mxu0 0
      %4094 = vmatpush1.bf16.msra.mxu0 %v4091
      %4095 = vmatprep.subr.bf16.mxu0 0
      %4096 = vmatpush1.bf16.msra.mxu0 0
      %4097 = vmatprep.subr.bf16.mxu0 0
      %4098 = vmatpush1.bf16.msra.mxu0 0
      %4099 = vmatprep.subr.bf16.mxu0 0
      %4100 = vmatpush1.bf16.msra.mxu0 0
      %4101 = vmatprep.subr.bf16.mxu0 0
      %4102 = vmatpush1.bf16.msra.mxu0 0
      %4103 = vmatprep.subr.bf16.mxu0 0
      %4104 = vmatpush1.bf16.msra.mxu0 0
      %4105 = vmatprep.subr.bf16.mxu0 0
      %4106 = vmatpush1.bf16.msra.mxu0 0
      %4107 = vmatprep.subr.bf16.mxu0 0
      %4108 = vmatpush1.bf16.msra.mxu0 0
      %4109 = vmatprep.subr.bf16.mxu0 0
      %4110 = vmatpush1.bf16.msra.mxu0 0
      %4111 = vmatprep.subr.bf16.mxu0 0
      %4112 = vmatpush1.bf16.msra.mxu0 0
      %4113 = vmatprep.subr.bf16.mxu0 0
      %4114 = vmatpush1.bf16.msra.mxu0 0
      %4115 = vmatprep.subr.bf16.mxu0 0
      %4116 = vmatpush1.bf16.msra.mxu0 0
      %4117 = vmatprep.subr.bf16.mxu0 0
      %4118 = vmatpush1.bf16.msra.mxu0 0
      %4119 = vmatprep.subr.bf16.mxu0 0
      %4120 = vmatpush1.bf16.msra.mxu0 0
      %4121 = vmatprep.subr.bf16.mxu0 0
      %4122 = vmatpush1.bf16.msra.mxu0 0
      %4123 = vmatprep.subr.bf16.mxu0 0
      %4124 = vmatpush1.bf16.msra.mxu0 0
      %4125 = vmatprep.mubr.bf16.mxu0 0
      %4126 = vmatmul.mubr.bf16.gmra.mrb[0].mxu0 %v4067
      %v4127 = vpop.f32.mrb[0].mxu0
      %v4128 = vadd.f32 0.0, %v4127
      %v4129 = vpop.f32.mrb[0].mxu0
      %v4130 = vpop.f32.mrb[0].mxu0
      %v4131 = vadd.f32 0.0, %v4130
      %v4132 = vpop.f32.mrb[0].mxu0
      %4133 = vmatprep.mubr.bf16.mxu0 0
      %4134 = vmatmul.mubr.bf16.gmra.mrb[0].mxu0 %v4070
      %v4135 = vpop.f32.mrb[0].mxu0
      %v4136 = vadd.f32 0.0, %v4135
      %v4137 = vpop.f32.mrb[0].mxu0
      %v4138 = vpop.f32.mrb[0].mxu0
      %v4139 = vadd.f32 0.0, %v4138
      %v4140 = vpop.f32.mrb[0].mxu0
      %4141 = vmatprep.mubr.bf16.mxu0 0
      %4142 = vmatmul.mubr.bf16.gmra.mrb[0].mxu0 %v4073
      %v4143 = vpop.f32.mrb[0].mxu0
      %v4144 = vadd.f32 0.0, %v4143
      %v4145 = vpop.f32.mrb[0].mxu0
      %v4146 = vpop.f32.mrb[0].mxu0
      %v4147 = vadd.f32 0.0, %v4146
      %v4148 = vpop.f32.mrb[0].mxu0
      %4149 = vmatprep.mubr.bf16.mxu0 0
      %4150 = vmatmul.mubr.bf16.gmra.mrb[0].mxu0 %v4076
      %v4151 = vpop.f32.mrb[0].mxu0
      %v4152 = vadd.f32 0.0, %v4151
      %v4153 = vpop.f32.mrb[0].mxu0
      %v4154 = vpop.f32.mrb[0].mxu0
      %v4155 = vadd.f32 0.0, %v4154
      %v4156 = vpop.f32.mrb[0].mxu0
      %4157 = vmatprep.mubr.bf16.mxu0 0
      %4158 = vmatmul.mubr.bf16.gmra.mrb[0].mxu0 %v4079
      %v4159 = vpop.f32.mrb[0].mxu0
      %v4160 = vadd.f32 0.0, %v4159
      %v4161 = vpop.f32.mrb[0].mxu0
      %v4162 = vpop.f32.mrb[0].mxu0
      %v4163 = vadd.f32 0.0, %v4162
      %v4164 = vpop.f32.mrb[0].mxu0
      %4165 = vmatprep.mubr.bf16.mxu0 0
      %4166 = vmatmul.mubr.bf16.gmra.mrb[0].mxu0 %v4082
      %v4167 = vpop.f32.mrb[0].mxu0
      %v4168 = vadd.f32 0.0, %v4167
      %v4169 = vpop.f32.mrb[0].mxu0
      %v4170 = vpop.f32.mrb[0].mxu0
      %v4171 = vadd.f32 0.0, %v4170
      %v4172 = vpop.f32.mrb[0].mxu0
      %4173 = vmatprep.mubr.bf16.mxu0 0
      %4174 = vmatmul.mubr.bf16.gmra.mrb[0].mxu0 %v4085
      %v4175 = vpop.f32.mrb[0].mxu0
      %v4176 = vadd.f32 0.0, %v4175
      %v4177 = vpop.f32.mrb[0].mxu0
      %v4178 = vpop.f32.mrb[0].mxu0
      %v4179 = vadd.f32 0.0, %v4178
      %v4180 = vpop.f32.mrb[0].mxu0
      %4181 = vmatprep.mubr.bf16.mxu0 0
      %4182 = vmatmul.mubr.bf16.gmra.mrb[0].mxu0 %v4088
      %v4183 = vpop.f32.mrb[0].mxu0
      %v4184 = vadd.f32 0.0, %v4183
      %v4185 = vpop.f32.mrb[0].mxu0
      %v4186 = vpop.f32.mrb[0].mxu0
      %v4187 = vadd.f32 0.0, %v4186
      %v4188 = vpop.f32.mrb[0].mxu0
      %4189 = vdwg.mxu0
      %v4190 = vadd.f32 %v4009, %v4128
      %v4191 = vadd.f32 %v4010, %v4131
      %v4192 = vadd.f32 %v4011, %v4136
      %v4193 = vadd.f32 %v4012, %v4139
      %v4194 = vadd.f32 %v4013, %v4144
      %v4195 = vadd.f32 %v4014, %v4147
      %v4196 = vadd.f32 %v4015, %v4152
      %v4197 = vadd.f32 %v4016, %v4155
      %v4198 = vadd.f32 %v4017, %v4160
      %v4199 = vadd.f32 %v4018, %v4163
      %v4200 = vadd.f32 %v4019, %v4168
      %v4201 = vadd.f32 %v4020, %v4171
      %v4202 = vadd.f32 %v4021, %v4176
      %v4203 = vadd.f32 %v4022, %v4179
      %v4204 = vadd.f32 %v4023, %v4184
      %v4205 = vadd.f32 %v4024, %v4187
      %v4206 = vadd.f32 %v4190, %v2623
      %v4207 = vadd.f32 %v4191, %v2623
      %v4208 = vadd.f32 %v4192, %v2623
      %v4209 = vadd.f32 %v4193, %v2623
      %v4210 = vadd.f32 %v4194, %v2623
      %v4211 = vadd.f32 %v4195, %v2623
      %v4212 = vadd.f32 %v4196, %v2623
      %v4213 = vadd.f32 %v4197, %v2623
      %v4214 = vadd.f32 %v4198, %v2623
      %v4215 = vadd.f32 %v4199, %v2623
      %v4216 = vadd.f32 %v4200, %v2623
      %v4217 = vadd.f32 %v4201, %v2623
      %v4218 = vadd.f32 %v4202, %v2623
      %v4219 = vadd.f32 %v4203, %v2623
      %v4220 = vadd.f32 %v4204, %v2623
      %v4221 = vadd.f32 %v4205, %v2623
      %4222 = vst [vmem:[%s264 + $0x80] sm:$0xff] %v4206
      %4223 = vst [vmem:[%s264 + $0x88] sm:$0xff] %v4207
      %4224 = vst [vmem:[%s264 + $0x90] sm:$0xff] %v4208
      %4225 = vst [vmem:[%s264 + $0x98] sm:$0xff] %v4209
      %4226 = vst [vmem:[%s264 + $0xa0] sm:$0xff] %v4210
      %4227 = vst [vmem:[%s264 + $0xa8] sm:$0xff] %v4211
      %4228 = vst [vmem:[%s264 + $0xb0] sm:$0xff] %v4212
      %4229 = vst [vmem:[%s264 + $0xb8] sm:$0xff] %v4213
      %4230 = vst [vmem:[%s264 + $0xc0] sm:$0xff] %v4214
      %4231 = vst [vmem:[%s264 + $0xc8] sm:$0xff] %v4215
      %4232 = vst [vmem:[%s264 + $0xd0] sm:$0xff] %v4216
      %4233 = vst [vmem:[%s264 + $0xd8] sm:$0xff] %v4217
      %4234 = vst [vmem:[%s264 + $0xe0] sm:$0xff] %v4218
      %4235 = vst [vmem:[%s264 + $0xe8] sm:$0xff] %v4219
      %4236 = vst [vmem:[%s264 + $0xf0] sm:$0xff] %v4220
      %4237 = vst [vmem:[%s264 + $0xf8] sm:$0xff] %v4221
      %p4238 = scmp.lt.s32.totalorder %s18, 1
      %s4239 = scalar_select %p4238, %s18, 1
      %s4240 = smul.addr %s4239, 32
      %s4241 = smul.addr %s4240, 8
      %s4242 = scalar_lea.vmem %s5, %s4241
      %p4243 = scmp.lt.s32.totalorder %s18, 1
      %s4244 = scalar_select %p4243, %s18, 1
      %s4245 = smul.addr %s4244, 32
      %s4246 = smul.addr %s4245, 8
      %s4247 = scalar_lea.vmem %s6, %s4246
      // Predicated region
      $region41: #{_fused_forward.1} parent=39 // pred_check
        %p4248 = pneg %p146
      $region42: #{_fused_forward.1} parent=39 // pred_check_branch
        %4250 = sbr.rel (%p4248) target = $region44
      $region43: #{_fused_forward.1} parent=39 // pred_region
        _
      $region44: #{_fused_forward.1} parent=39 // pred_fallthru
        _
      // Predicated region
      $region45: #{_fused_forward.1} parent=39 // pred_check
        %p4251 = pneg %p172
      $region46: #{_fused_forward.1} parent=39 // pred_check_branch
        %4253 = sbr.rel (%p4251) target = $region48
      $region47: #{_fused_forward.1} parent=39 // pred_region
        _
      $region48: #{_fused_forward.1} parent=39 // pred_fallthru
        _
    $region40: #{_fused_forward.1} parent=5 // pred_fallthru
      _
    %p4254 = scmp.le.s32.totalorder 2, %s13
    // Predicated region
    $region49: #{_fused_forward.1} parent=5 // pred_check
      %p4255 = pneg %p4254
    $region50: #{_fused_forward.1} parent=5 // pred_check_branch
      %4257 = sbr.rel (%p4255) target = $region52
    $region51: #{_fused_forward.1} parent=5 // pred_region
      %s4258 = ssub.s32 %s13, 2
      // Predicated region
      $region53: #{_fused_forward.1} parent=51 // pred_check
        %p4259 = pneg %p152
      $region54: #{_fused_forward.1} parent=51 // pred_check_branch
        %4261 = sbr.rel (%p4259) target = $region56
      $region55: #{_fused_forward.1} parent=51 // pred_region
        %p4262 = scmp.lt.s32.totalorder %s19, 1
        %s4263 = scalar_select %p4262, %s19, 1
        %s4264 = smul.addr %s4263, 32
        %s4265 = smul.addr %s4264, 8
        %s4266 = scalar_lea.vmem %s5, %s4265
      $region56: #{_fused_forward.1} parent=51 // pred_fallthru
        _
      // Predicated region
      $region57: #{_fused_forward.1} parent=51 // pred_check
        %p4267 = pneg %p178
      $region58: #{_fused_forward.1} parent=51 // pred_check_branch
        %4269 = sbr.rel (%p4267) target = $region60
      $region59: #{_fused_forward.1} parent=51 // pred_region
        %p4270 = scmp.lt.s32.totalorder %s19, 1
        %s4271 = scalar_select %p4270, %s19, 1
        %s4272 = smul.addr %s4271, 32
        %s4273 = smul.addr %s4272, 8
        %s4274 = scalar_lea.vmem %s6, %s4273
      $region60: #{_fused_forward.1} parent=51 // pred_fallthru
        _
    $region52: #{_fused_forward.1} parent=5 // pred_fallthru
      _
  $region6: #{_fused_forward.1} parent=0 // loop_footer
    %s17 = sadd.s32 1, %s13
  $region7: #{_fused_forward.1} parent=0 // loop_footer_branch
    %12 = sbr.rel target = $region3
  $region8: #{_fused_forward.1} parent=0 // loop_exit
    _

</llo_original>
